<compile_context>
chip_gen: v7x
topology: tpu7x:2x2x1
jax: 0.10.0
libtpu: 0.0.40
codegen_flags: <defaults>
</compile_context>

<pallas_src>
import functools

import jax
import jax.numpy as jnp
from jax.experimental import pallas as pl
from jax.experimental.pallas import tpu as pltpu


# ---------------------------------------------------------------------------
# Fused kernel: spatial embedding + pairwise distance + MLP classifier
#   emb[r, :]   = relu((X[r, :] @ Wc^T) * sc1 + sh1)            (conv bias folded)
#   dist        = sqrt((emb_i - emb_j)^2 + 1e-9)
#   sim[i, j]   = sigmoid(relu((dist @ W1^T) * sc2 + sh2) @ w2 + b2),  diag := 1
# One grid step handles one (batch, i-row-block) slab and stores it as a flat
# lane-dense (1, TILE_I*n) row.
# ---------------------------------------------------------------------------
def _fused_similarity_kernel(x_i_ref, x_j_ref, eye_ref, wct_ref, sc1_ref, sh1_ref,
                             w1t_ref, sc2_ref, sh2_ref, w2_ref, b2_ref,
                             out_ref, *, n, tile_i, matmul_dtype):
    s_pad = wct_ref.shape[1]

    def embed(x):                                            # (rows, t) -> (rows, s_pad)
        e = jnp.dot(x.astype(matmul_dtype), wct_ref[...],
                    preferred_element_type=jnp.float32)
        return jnp.maximum(e * sc1_ref[...] + sh1_ref[...], 0.0)

    # Re-embedding the j side per i-block costs O(n*t*s) vs the O(n^2*s*hid)
    # MLP below, so recompute is cheaper than caching it across grid steps.
    emb_i = embed(x_i_ref[0])                                # (tile_i, s_pad)
    emb_j = embed(x_j_ref[0])                                # (n, s_pad)

    # pairwise distances for this row block; relu(diff**2) == diff**2 (>= 0)
    diff = emb_i[:, None, :] - emb_j[None, :, :]             # (tile_i, n, s_pad)
    dist = jnp.sqrt(diff * diff + 1e-9)
    dist2 = dist.reshape(tile_i * n, s_pad)                  # flat pair block

    # one batched MLP matmul for the whole (tile_i*n) pair block
    h = jnp.dot(dist2.astype(matmul_dtype), w1t_ref[...],
                preferred_element_type=jnp.float32)          # (tile_i*n, hid_pad)
    h = jnp.maximum(h * sc2_ref[...] + sh2_ref[...], 0.0)    # b1 folded into sh2

    score = jnp.sum(h * w2_ref[...], axis=-1) + b2_ref[0]    # (tile_i*n,)
    sim = jax.nn.sigmoid(score)[None, :]                     # lane-dense (1, tile_i*n)

    # diag := 1 with a single select against the precomputed eye row
    out_ref[0, 0] = jnp.where(eye_ref[0] != 0.0, 1.0, sim)


def _round_up(x, m):
    return ((x + m - 1) // m) * m


def _choose_tile_i(n, s_pad, hid_pad, budget_bytes=8 * 1024 * 1024):
    """Largest row-block that divides n, keeps blocks sublane-aligned
    (multiple of 8, or the full n), and keeps the per-step intermediates
    (diff / dist / h) within the VMEM budget."""
    per_row = n * (3 * s_pad + hid_pad) * 4          # f32 bytes of intermediates per i-row
    cap = max(1, budget_bytes // per_row)
    cands = [d for d in range(1, n + 1) if n % d == 0 and (d % 8 == 0 or d == n)]
    fitting = [d for d in cands if d <= cap]
    return max(fitting) if fitting else min(cands)


def fused_similarity(X, p, eps=1e-5, matmul_dtype=jnp.bfloat16):
    """Similarity matrices (b, n, n) from raw signals X (b, n, t), fused in Pallas."""
    b, n, t = X.shape
    s = p["conv_w"].shape[0]
    hid = p["w1"].shape[0]
    s_pad = _round_up(s, 128)
    hid_pad = _round_up(hid, 128)

    tile_i = _choose_tile_i(n, s_pad, hid_pad)
    nb = n // tile_i
    kf = tile_i * n                                   # flat pairs per grid step

    # --- fold conv/linear biases + eval-mode BatchNorm into scale/shift rows --
    sc1 = p["bn1_gamma"] / jnp.sqrt(p["bn1_var"] + eps)
    sh1 = p["conv_b"] * sc1 + (p["bn1_beta"] - p["bn1_mean"] * sc1)
    sc2 = p["bn2_gamma"] / jnp.sqrt(p["bn2_var"] + eps)
    sh2 = p["b1"] * sc2 + (p["bn2_beta"] - p["bn2_mean"] * sc2)

    # --- zero-pad channel dims to full 128-lane width (exact: pads are zero) --
    wct = jnp.pad(p["conv_w"].T, ((0, 0), (0, s_pad - s))).astype(matmul_dtype)
    w1t = jnp.pad(p["w1"].T, ((0, s_pad - s), (0, hid_pad - hid))).astype(matmul_dtype)
    sc1p = jnp.pad(sc1, (0, s_pad - s))[None, :]
    sh1p = jnp.pad(sh1, (0, s_pad - s))[None, :]
    sc2p = jnp.pad(sc2, (0, hid_pad - hid))[None, :]
    sh2p = jnp.pad(sh2, (0, hid_pad - hid))[None, :]
    w2p = jnp.pad(p["w2"][0], (0, hid_pad - hid))[None, :]

    # lane-dense eye mask, pre-blocked to match the flat output rows
    eye_rows = jnp.eye(n, dtype=jnp.float32).reshape(nb, 1, kf)

    kernel = functools.partial(_fused_similarity_kernel,
                               n=n, tile_i=tile_i, matmul_dtype=matmul_dtype)

    flops = (2 * b * nb * (tile_i + n) * t * s          # embeddings (incl. recompute)
             + 2 * b * n * n * s * hid                  # dist @ W1^T
             + 2 * b * n * n * hid                      # w2 reduction
             + 6 * b * n * n * s)                       # diff / square / scale chain
    cost = pl.CostEstimate(
        flops=int(flops),
        transcendentals=int(b * n * n * (s + 1)),       # sqrt + sigmoid
        bytes_accessed=int(X.dtype.itemsize * b * n * t * (1 + nb)
                           + 4 * b * n * n
                           + 2 * (t * s_pad + s_pad * hid_pad)
                           + 4 * 5 * (s_pad + hid_pad)),
    )

    out = pl.pallas_call(
        kernel,
        out_shape=jax.ShapeDtypeStruct((b, nb, 1, kf), jnp.float32),
        grid=(b, nb),
        in_specs=[
            pl.BlockSpec((1, tile_i, t), lambda bi, ii: (bi, ii, 0)),   # X rows, i side
            pl.BlockSpec((1, n, t), lambda bi, ii: (bi, 0, 0)),         # X all rows, j side
            pl.BlockSpec((1, 1, kf), lambda bi, ii: (ii, 0, 0)),        # eye mask row
            pl.BlockSpec((t, s_pad), lambda bi, ii: (0, 0)),            # conv weight^T
            pl.BlockSpec((1, s_pad), lambda bi, ii: (0, 0)),            # bn1 scale
            pl.BlockSpec((1, s_pad), lambda bi, ii: (0, 0)),            # bn1 shift (+conv bias)
            pl.BlockSpec((s_pad, hid_pad), lambda bi, ii: (0, 0)),      # W1^T
            pl.BlockSpec((1, hid_pad), lambda bi, ii: (0, 0)),          # bn2 scale
            pl.BlockSpec((1, hid_pad), lambda bi, ii: (0, 0)),          # bn2 shift (+b1)
            pl.BlockSpec((1, hid_pad), lambda bi, ii: (0, 0)),          # w2
            pl.BlockSpec(memory_space=pltpu.MemorySpace.SMEM),          # b2 scalar
        ],
        out_specs=pl.BlockSpec((1, 1, 1, kf), lambda bi, ii: (bi, ii, 0, 0)),
        compiler_params=pltpu.CompilerParams(
            dimension_semantics=("parallel", "parallel"),
            vmem_limit_bytes=32 * 1024 * 1024),
        cost_estimate=cost,
    )(X, X, eye_rows, wct, sc1p, sh1p, w1t, sc2p, sh2p, w2p, p["b2"])

    return out.reshape(b, n, n)


# ---------------------------------------------------------------------------
# Full forward pass
# ---------------------------------------------------------------------------
def spatial_attention_forward(X, p, num_selected=15, matmul_dtype=jnp.bfloat16):
    sim = fused_similarity(X, p, matmul_dtype=matmul_dtype)   # (b, n, n)  Pallas

    # TODO(synk): symmetric eigendecomposition has no Pallas TPU primitive; it
    # (and the trivially-fusable final broadcast multiply) stays in plain JAX/XLA.
    _, vecs = jnp.linalg.eigh(sim)                       # ascending eigenvalues
    sel = vecs[:, :, ::-1][:, :, :num_selected]          # top-k columns (descending)
    weights = jnp.abs(jnp.transpose(sel, (0, 2, 1)))     # (b, k, n)
    return weights[:, :, :, None] * X[:, None, :, :]     # (b, k, n, t)


# ---------------------------------------------------------------------------
# Parameters + pure-JAX reference for the Pallas-computed stage
# ---------------------------------------------------------------------------
def init_params(key, time, hidden_dim, spa_hidden_dim):
    ks = jax.random.split(key, 12)
    p = {}
    p["conv_w"] = jax.random.normal(ks[0], (spa_hidden_dim, time), jnp.float32) * 0.2
    p["conv_b"] = jax.random.normal(ks[1], (spa_hidden_dim,), jnp.float32) * 0.1
    p["bn1_gamma"] = 1.0 + 0.1 * jax.random.normal(ks[2], (spa_hidden_dim,), jnp.float32)
    p["bn1_beta"] = 0.1 * jax.random.normal(ks[3], (spa_hidden_dim,), jnp.float32)
    p["bn1_mean"] = 0.1 * jax.random.normal(ks[4], (spa_hidden_dim,), jnp.float32)
    p["bn1_var"] = jax.random.uniform(ks[5], (spa_hidden_dim,), jnp.float32, 0.5, 1.5)
    p["w1"] = jax.random.normal(ks[6], (hidden_dim, spa_hidden_dim), jnp.float32) * 0.2
    p["b1"] = jax.random.normal(ks[7], (hidden_dim,), jnp.float32) * 0.1
    p["bn2_gamma"] = 1.0 + 0.1 * jax.random.normal(ks[8], (hidden_dim,), jnp.float32)
    p["bn2_beta"] = 0.1 * jax.random.normal(ks[9], (hidden_dim,), jnp.float32)
    p["bn2_mean"] = 0.1 * jax.random.normal(ks[10], (hidden_dim,), jnp.float32)
    p["bn2_var"] = jax.random.uniform(ks[11], (hidden_dim,), jnp.float32, 0.5, 1.5)
    p["w2"] = jax.random.normal(jax.random.fold_in(key, 100), (1, hidden_dim), jnp.float32) * 0.2
    p["b2"] = jax.random.normal(jax.random.fold_in(key, 101), (1,), jnp.float32) * 0.1
    return p


def _ref_sim(X, p, eps=1e-5):
    bn1_s = p["bn1_gamma"] / jnp.sqrt(p["bn1_var"] + eps)
    bn1_b = p["bn1_beta"] - p["bn1_mean"] * bn1_s
    bn2_s = p["bn2_gamma"] / jnp.sqrt(p["bn2_var"] + eps)
    bn2_b = p["bn2_beta"] - p["bn2_mean"] * bn2_s
    emb = jnp.maximum(
        (jnp.einsum("bnt,st->bns", X, p["conv_w"]) + p["conv_b"]) * bn1_s + bn1_b, 0.0)
    diff = emb[:, :, None, :] - emb[:, None, :, :]
    dist = jnp.sqrt(jnp.maximum(diff * diff, 0.0) + 1e-9)
    h = jnp.maximum(
        (jnp.einsum("bijs,hs->bijh", dist, p["w1"]) + p["b1"]) * bn2_s + bn2_b, 0.0)
    score = jnp.einsum("bijh,h->bij", h, p["w2"][0]) + p["b2"][0]
    sim = jax.nn.sigmoid(score)
    n = X.shape[1]
    return jnp.where(jnp.eye(n, dtype=bool)[None], 1.0, sim)


if __name__ == "__main__":
    # X = (batch, num_nodes, num_timepoints); num_nodes >= 15 (top-15 eigvecs).
    B, N, T = 2, 16, 8
    HIDDEN, SPA_HIDDEN = 32, 32

    key = jax.random.PRNGKey(0)
    kx, kp = jax.random.split(key)
    X = jax.random.normal(kx, (B, N, T), jnp.float32)
    params = init_params(kp, time=T, hidden_dim=HIDDEN, spa_hidden_dim=SPA_HIDDEN)

    # full forward (bf16 MXU path)
    out = jax.block_until_ready(spatial_attention_forward(X, params))
    assert out.shape == (B, 15, N, T)
    assert bool(jnp.all(jnp.isfinite(out)))

    sim_ref = _ref_sim(X, params)

    # exact f32-matmul path: tight tolerance against the pure-JAX reference
    sim_f32 = jax.block_until_ready(
        fused_similarity(X, params, matmul_dtype=jnp.float32))
    assert jnp.allclose(sim_f32, sim_ref, atol=1e-4, rtol=1e-4)

    # fast bf16-matmul (f32-accumulate) path: looser tolerance (bf16 mantissa)
    sim_bf16 = jax.block_until_ready(fused_similarity(X, params))
    assert jnp.allclose(sim_bf16, sim_ref, atol=5e-2, rtol=5e-2)

    print("KERNEL_OK")
</pallas_src>

<mosaic_0001>
module attributes {stable_mosaic.version = 11 : i64} {
  func.func @_fused_similarity_kernel(%arg0: i32, %arg1: i32, %arg2: memref<1x16x8xf32, #tpu.memory_space<vmem>>, %arg3: memref<1x16x8xf32, #tpu.memory_space<vmem>>, %arg4: memref<1x1x256xf32, #tpu.memory_space<vmem>>, %arg5: memref<8x128xbf16, #tpu.memory_space<vmem>>, %arg6: memref<1x128xf32, #tpu.memory_space<vmem>>, %arg7: memref<1x128xf32, #tpu.memory_space<vmem>>, %arg8: memref<128x128xbf16, #tpu.memory_space<vmem>>, %arg9: memref<1x128xf32, #tpu.memory_space<vmem>>, %arg10: memref<1x128xf32, #tpu.memory_space<vmem>>, %arg11: memref<1x128xf32, #tpu.memory_space<vmem>>, %arg12: memref<1xf32, #tpu.memory_space<smem>>, %arg13: memref<1x1x1x256xf32, #tpu.memory_space<vmem>>) attributes {dimension_semantics = [#tpu.dimension_semantics<parallel>, #tpu.dimension_semantics<parallel>], iteration_bounds = array<i64: 2, 1>, scalar_prefetch = 0 : i64, scratch_operands = 0 : i64, tpu.core_type = #tpu.core_type<tc>, window_params = [{transform_indices = @transform_0, window_bounds = array<i64: 1, 16, 8>}, {transform_indices = @transform_1, window_bounds = array<i64: 1, 16, 8>}, {transform_indices = @transform_2, window_bounds = array<i64: 1, 1, 256>}, {pipeline_mode = #tpu.pipeline_mode<synchronous>, transform_indices = @transform_3, window_bounds = array<i64: 8, 128>}, {pipeline_mode = #tpu.pipeline_mode<synchronous>, transform_indices = @transform_4, window_bounds = array<i64: 1, 128>}, {pipeline_mode = #tpu.pipeline_mode<synchronous>, transform_indices = @transform_5, window_bounds = array<i64: 1, 128>}, {pipeline_mode = #tpu.pipeline_mode<synchronous>, transform_indices = @transform_6, window_bounds = array<i64: 128, 128>}, {pipeline_mode = #tpu.pipeline_mode<synchronous>, transform_indices = @transform_7, window_bounds = array<i64: 1, 128>}, {pipeline_mode = #tpu.pipeline_mode<synchronous>, transform_indices = @transform_8, window_bounds = array<i64: 1, 128>}, {pipeline_mode = #tpu.pipeline_mode<synchronous>, transform_indices = @transform_9, window_bounds = array<i64: 1, 128>}, {transform_indices = @transform_10, window_bounds = array<i64: 1>}, {transform_indices = @transform_11, window_bounds = array<i64: 1, 1, 1, 256>}]} {
    %c0 = arith.constant 0 : index
    %c0_0 = arith.constant 0 : index
    %c0_1 = arith.constant 0 : index
    %0 = vector.load %arg2[%c0, %c0_0, %c0_1] : memref<1x16x8xf32, #tpu.memory_space<vmem>>, vector<1x16x8xf32>
    %1 = vector.shape_cast %0 : vector<1x16x8xf32> to vector<16x8xf32>
    %2 = arith.truncf %1 : vector<16x8xf32> to vector<16x8xbf16>
    %c0_2 = arith.constant 0 : index
    %c0_3 = arith.constant 0 : index
    %3 = vector.load %arg5[%c0_2, %c0_3] : memref<8x128xbf16, #tpu.memory_space<vmem>>, vector<8x128xbf16>
    %cst = arith.constant dense<0.000000e+00> : vector<16x128xf32>
    %4 = tpu.matmul %2, %3, %cst {dimension_numbers = #tpu.dot_dimension_numbers<[1], [0], [0], [1], [0, 0, 1, 1], [], []>} : vector<16x8xbf16>, vector<8x128xbf16>, vector<16x128xf32> -> vector<16x128xf32>
    %c0_4 = arith.constant 0 : index
    %c0_5 = arith.constant 0 : index
    %5 = vector.load %arg6[%c0_4, %c0_5] : memref<1x128xf32, #tpu.memory_space<vmem>>, vector<1x128xf32>
    %6 = vector.broadcast %5 : vector<1x128xf32> to vector<16x128xf32>
    %7 = arith.mulf %4, %6 : vector<16x128xf32>
    %c0_6 = arith.constant 0 : index
    %c0_7 = arith.constant 0 : index
    %8 = vector.load %arg7[%c0_6, %c0_7] : memref<1x128xf32, #tpu.memory_space<vmem>>, vector<1x128xf32>
    %9 = vector.broadcast %8 : vector<1x128xf32> to vector<16x128xf32>
    %10 = arith.addf %7, %9 : vector<16x128xf32>
    %cst_8 = arith.constant 0.000000e+00 : f32
    %11 = vector.broadcast %cst_8 : f32 to vector<16x128xf32>
    %12 = arith.maximumf %10, %11 : vector<16x128xf32>
    %c0_9 = arith.constant 0 : index
    %c0_10 = arith.constant 0 : index
    %c0_11 = arith.constant 0 : index
    %13 = vector.load %arg3[%c0_9, %c0_10, %c0_11] : memref<1x16x8xf32, #tpu.memory_space<vmem>>, vector<1x16x8xf32>
    %14 = vector.shape_cast %13 : vector<1x16x8xf32> to vector<16x8xf32>
    %15 = arith.truncf %14 : vector<16x8xf32> to vector<16x8xbf16>
    %c0_12 = arith.constant 0 : index
    %c0_13 = arith.constant 0 : index
    %16 = vector.load %arg5[%c0_12, %c0_13] : memref<8x128xbf16, #tpu.memory_space<vmem>>, vector<8x128xbf16>
    %cst_14 = arith.constant dense<0.000000e+00> : vector<16x128xf32>
    %17 = tpu.matmul %15, %16, %cst_14 {dimension_numbers = #tpu.dot_dimension_numbers<[1], [0], [0], [1], [0, 0, 1, 1], [], []>} : vector<16x8xbf16>, vector<8x128xbf16>, vector<16x128xf32> -> vector<16x128xf32>
    %c0_15 = arith.constant 0 : index
    %c0_16 = arith.constant 0 : index
    %18 = vector.load %arg6[%c0_15, %c0_16] : memref<1x128xf32, #tpu.memory_space<vmem>>, vector<1x128xf32>
    %19 = vector.broadcast %18 : vector<1x128xf32> to vector<16x128xf32>
    %20 = arith.mulf %17, %19 : vector<16x128xf32>
    %c0_17 = arith.constant 0 : index
    %c0_18 = arith.constant 0 : index
    %21 = vector.load %arg7[%c0_17, %c0_18] : memref<1x128xf32, #tpu.memory_space<vmem>>, vector<1x128xf32>
    %22 = vector.broadcast %21 : vector<1x128xf32> to vector<16x128xf32>
    %23 = arith.addf %20, %22 : vector<16x128xf32>
    %cst_19 = arith.constant 0.000000e+00 : f32
    %24 = vector.broadcast %cst_19 : f32 to vector<16x128xf32>
    %25 = arith.maximumf %23, %24 : vector<16x128xf32>
    %26 = vector.shape_cast %12 : vector<16x128xf32> to vector<16x1x128xf32>
    %27 = vector.shape_cast %25 : vector<16x128xf32> to vector<1x16x128xf32>
    %28 = vector.broadcast %26 : vector<16x1x128xf32> to vector<16x16x128xf32>
    %29 = vector.broadcast %27 : vector<1x16x128xf32> to vector<16x16x128xf32>
    %30 = arith.subf %28, %29 : vector<16x16x128xf32>
    %31 = arith.mulf %30, %30 : vector<16x16x128xf32>
    %cst_20 = arith.constant 9.99999971E-10 : f32
    %32 = vector.broadcast %cst_20 : f32 to vector<16x16x128xf32>
    %33 = arith.addf %31, %32 : vector<16x16x128xf32>
    %34 = math.sqrt %33 : vector<16x16x128xf32>
    %35 = vector.shape_cast %34 : vector<16x16x128xf32> to vector<256x128xf32>
    %36 = arith.truncf %35 : vector<256x128xf32> to vector<256x128xbf16>
    %c0_21 = arith.constant 0 : index
    %c0_22 = arith.constant 0 : index
    %37 = vector.load %arg8[%c0_21, %c0_22] : memref<128x128xbf16, #tpu.memory_space<vmem>>, vector<128x128xbf16>
    %cst_23 = arith.constant dense<0.000000e+00> : vector<256x128xf32>
    %38 = tpu.matmul %36, %37, %cst_23 {dimension_numbers = #tpu.dot_dimension_numbers<[1], [0], [0], [1], [0, 0, 1, 1], [], []>} : vector<256x128xbf16>, vector<128x128xbf16>, vector<256x128xf32> -> vector<256x128xf32>
    %c0_24 = arith.constant 0 : index
    %c0_25 = arith.constant 0 : index
    %39 = vector.load %arg9[%c0_24, %c0_25] : memref<1x128xf32, #tpu.memory_space<vmem>>, vector<1x128xf32>
    %40 = vector.broadcast %39 : vector<1x128xf32> to vector<256x128xf32>
    %41 = arith.mulf %38, %40 : vector<256x128xf32>
    %c0_26 = arith.constant 0 : index
    %c0_27 = arith.constant 0 : index
    %42 = vector.load %arg10[%c0_26, %c0_27] : memref<1x128xf32, #tpu.memory_space<vmem>>, vector<1x128xf32>
    %43 = vector.broadcast %42 : vector<1x128xf32> to vector<256x128xf32>
    %44 = arith.addf %41, %43 : vector<256x128xf32>
    %cst_28 = arith.constant 0.000000e+00 : f32
    %45 = vector.broadcast %cst_28 : f32 to vector<256x128xf32>
    %46 = arith.maximumf %44, %45 : vector<256x128xf32>
    %c0_29 = arith.constant 0 : index
    %c0_30 = arith.constant 0 : index
    %47 = vector.load %arg11[%c0_29, %c0_30] : memref<1x128xf32, #tpu.memory_space<vmem>>, vector<1x128xf32>
    %48 = vector.broadcast %47 : vector<1x128xf32> to vector<256x128xf32>
    %49 = arith.mulf %46, %48 : vector<256x128xf32>
    %cst_31 = arith.constant dense<0.000000e+00> : vector<256xf32>
    %50 = vector.multi_reduction <add>, %49, %cst_31 [1] : vector<256x128xf32> to vector<256xf32>
    %c0_32 = arith.constant 0 : index
    %51 = memref.load %arg12[%c0_32] : memref<1xf32, #tpu.memory_space<smem>>
    %52 = vector.broadcast %51 : f32 to vector<256xf32>
    %53 = arith.addf %50, %52 : vector<256xf32>
    %54 = arith.negf %53 : vector<256xf32>
    %55 = math.exp %54 : vector<256xf32>
    %cst_33 = arith.constant 1.000000e+00 : f32
    %56 = vector.broadcast %cst_33 : f32 to vector<256xf32>
    %57 = arith.addf %56, %55 : vector<256xf32>
    %58 = arith.divf %56, %57 : vector<256xf32>
    %59 = vector.shape_cast %58 : vector<256xf32> to vector<1x256xf32>
    %c0_34 = arith.constant 0 : index
    %c0_35 = arith.constant 0 : index
    %c0_36 = arith.constant 0 : index
    %60 = vector.load %arg4[%c0_34, %c0_35, %c0_36] : memref<1x1x256xf32, #tpu.memory_space<vmem>>, vector<1x1x256xf32>
    %61 = vector.shape_cast %60 : vector<1x1x256xf32> to vector<1x256xf32>
    %cst_37 = arith.constant 0.000000e+00 : f32
    %62 = vector.broadcast %cst_37 : f32 to vector<1x256xf32>
    %63 = arith.cmpf one, %61, %62 : vector<1x256xf32>
    %cst_38 = arith.constant 1.000000e+00 : f32
    %64 = vector.broadcast %cst_38 : f32 to vector<1x256xf32>
    %65 = arith.select %63, %64, %59 : vector<1x256xi1>, vector<1x256xf32>
    %c0_39 = arith.constant 0 : index
    %c0_40 = arith.constant 0 : index
    %c0_41 = arith.constant 0 : index
    %c0_42 = arith.constant 0 : index
    %66 = vector.load %arg13[%c0_39, %c0_40, %c0_41, %c0_42] : memref<1x1x1x256xf32, #tpu.memory_space<vmem>>, vector<1x1x1x256xf32>
    %67 = vector.shape_cast %66 : vector<1x1x1x256xf32> to vector<1x256xf32>
    %68 = vector.shape_cast %65 : vector<1x256xf32> to vector<1x1x1x256xf32>
    tpu.vector_store %arg13[%c0_39, %c0_40, %c0_41, %c0_42], %68 {strides = array<i32>} : memref<1x1x1x256xf32, #tpu.memory_space<vmem>>, vector<1x1x1x256xf32>,
    return
  }
  func.func @transform_0(%arg0: i32, %arg1: i32) -> (i32, i32, i32) {
    %c0_i32 = arith.constant 0 : i32
    %c0_i32_0 = arith.constant 0 : i32
    return %arg0, %arg1, %c0_i32 : i32, i32, i32
  }
  func.func @transform_1(%arg0: i32, %arg1: i32) -> (i32, i32, i32) {
    %c0_i32 = arith.constant 0 : i32
    %c0_i32_0 = arith.constant 0 : i32
    %c0_i32_1 = arith.constant 0 : i32
    return %arg0, %c0_i32, %c0_i32_0 : i32, i32, i32
  }
  func.func @transform_2(%arg0: i32, %arg1: i32) -> (i32, i32, i32) {
    %c0_i32 = arith.constant 0 : i32
    %c0_i32_0 = arith.constant 0 : i32
    %c0_i32_1 = arith.constant 0 : i32
    return %arg1, %c0_i32, %c0_i32_0 : i32, i32, i32
  }
  func.func @transform_3(%arg0: i32, %arg1: i32) -> (i32, i32) {
    %c0_i32 = arith.constant 0 : i32
    %c0_i32_0 = arith.constant 0 : i32
    %c0_i32_1 = arith.constant 0 : i32
    return %c0_i32, %c0_i32_0 : i32, i32
  }
  func.func @transform_4(%arg0: i32, %arg1: i32) -> (i32, i32) {
    %c0_i32 = arith.constant 0 : i32
    %c0_i32_0 = arith.constant 0 : i32
    %c0_i32_1 = arith.constant 0 : i32
    return %c0_i32, %c0_i32_0 : i32, i32
  }
  func.func @transform_5(%arg0: i32, %arg1: i32) -> (i32, i32) {
    %c0_i32 = arith.constant 0 : i32
    %c0_i32_0 = arith.constant 0 : i32
    %c0_i32_1 = arith.constant 0 : i32
    return %c0_i32, %c0_i32_0 : i32, i32
  }
  func.func @transform_6(%arg0: i32, %arg1: i32) -> (i32, i32) {
    %c0_i32 = arith.constant 0 : i32
    %c0_i32_0 = arith.constant 0 : i32
    %c0_i32_1 = arith.constant 0 : i32
    return %c0_i32, %c0_i32_0 : i32, i32
  }
  func.func @transform_7(%arg0: i32, %arg1: i32) -> (i32, i32) {
    %c0_i32 = arith.constant 0 : i32
    %c0_i32_0 = arith.constant 0 : i32
    %c0_i32_1 = arith.constant 0 : i32
    return %c0_i32, %c0_i32_0 : i32, i32
  }
  func.func @transform_8(%arg0: i32, %arg1: i32) -> (i32, i32) {
    %c0_i32 = arith.constant 0 : i32
    %c0_i32_0 = arith.constant 0 : i32
    %c0_i32_1 = arith.constant 0 : i32
    return %c0_i32, %c0_i32_0 : i32, i32
  }
  func.func @transform_9(%arg0: i32, %arg1: i32) -> (i32, i32) {
    %c0_i32 = arith.constant 0 : i32
    %c0_i32_0 = arith.constant 0 : i32
    %c0_i32_1 = arith.constant 0 : i32
    return %c0_i32, %c0_i32_0 : i32, i32
  }
  func.func @transform_10(%arg0: i32, %arg1: i32) -> i32 {
    %c0_i32 = arith.constant 0 : i32
    %c0_i32_0 = arith.constant 0 : i32
    return %c0_i32 : i32
  }
  func.func @transform_11(%arg0: i32, %arg1: i32) -> (i32, i32, i32, i32) {
    %c0_i32 = arith.constant 0 : i32
    %c0_i32_0 = arith.constant 0 : i32
    %c0_i32_1 = arith.constant 0 : i32
    return %arg0, %arg1, %c0_i32, %c0_i32_0 : i32, i32, i32, i32
  }
}

</mosaic_0001>

<llo_original>
// kernel: tpu_custom_call.1
$region0: #{tpu_custom_call.1}
  #allocation0 [shape = 'u32[]', space=smem, size = 0x4, offset = 0x4, fixed_abs, tag = 'smem constant byte address 0x4 - core index']
  #allocation1 [shape = 'u32[144,128]{1,0:T(1,128)}', space=vmem, size = 0x12000, scoped, tag = 'internal scratch']
  #allocation2 [shape = 'f32[1]{0:T(128)S(6)}', space=smem, size = 0x200, scoped, tag = 'scoped memory for tpu_custom_call.1']
  %s0 = inlined_call_operand.vmem [shape: f32[2,16,8], index: 0, kind: input, shape index: {}]
  %s1 = inlined_call_operand.vmem [shape: f32[2,16,8], index: 1, kind: input, shape index: {}]
  %s2 = inlined_call_operand.vmem [shape: f32[1,1,256], index: 2, kind: input, shape index: {}]
  %s3 = inlined_call_operand.vmem [shape: bf16[8,128], index: 3, kind: input, shape index: {}]
  %s4 = inlined_call_operand.vmem [shape: f32[1,128], index: 4, kind: input, shape index: {}]
  %s5 = inlined_call_operand.vmem [shape: f32[1,128], index: 5, kind: input, shape index: {}]
  %s6 = inlined_call_operand.vmem [shape: bf16[128,128], index: 6, kind: input, shape index: {}]
  %s7 = inlined_call_operand.vmem [shape: f32[1,128], index: 7, kind: input, shape index: {}]
  %s8 = inlined_call_operand.vmem [shape: f32[1,128], index: 8, kind: input, shape index: {}]
  %s9 = inlined_call_operand.vmem [shape: f32[1,128], index: 9, kind: input, shape index: {}]
  %s10 = inlined_call_operand.<no memory space> [shape: f32[1], index: 10, kind: input, shape index: {}]
  %s11 = inlined_call_operand.hbm [shape: f32[2,1,1,256], index: 11, kind: output, shape index: {}]
  %s12 = sld [smem:[#allocation0]]
  $region77: #{tpu_custom_call.1} parent=0
    _
  %s14 = ssub.s32 1, %s12
  %s15 = scalar_select 0, %s14, %s12
  %16 = sst [smem:[#allocation2]] %s10
  $region1: #{tpu_custom_call.1} parent=0
    #allocation3 [shape = 'u8[2048]{0}', space=vmem, size = 0x800, scoped, tag = 'output window, operand 0']
    #allocation4 [shape = 's32[2]{0}', space=sflag, size = 0x8, scoped, tag = 'scoped memory for tpu_custom_call.1']
    %17 = vsyncpa [#allocation4], 0
    %s18 = scalar_lea.sflag [#allocation4], 1
    %19 = vsyncpa %s18, 0
    loop: start=0, step=1, limit=4
    $region2: #{tpu_custom_call.1} parent=1 // loop_pre_header
      _
    $region3: #{tpu_custom_call.1} parent=1 // loop_header
      %s21 = sphi 0, %s25
      %p22 = scmp.ge.s32.totalorder %s21, 4
      %s28 = sphi 0, %s40
      %s29 = sphi 0, %s36
      %s30 = sphi 0, %s28
      %s31 = sphi 0, %s29
      %s32 = sphi 0, %s30
      %s33 = sphi 0, %s31
      %s45 = sphi 0, %s47
      %s48 = sphi 0, %s45
      %s49 = sphi 0, %s48
      %s65 = sphi 0, %s49
      %s71 = sphi 0, %s73
      %s74 = sphi 0, %s71
      %s75 = sphi 0, %s74
      %s91 = sphi 0, %s75
      %s97 = sphi 0, %s99
      %s100 = sphi 0, %s97
      %s101 = sphi 0, %s100
      %s117 = sphi 0, %s101
      %s121 = sphi 0, %s121
      %s123 = sphi 0, %s121
      %s124 = sphi 0, %s123
      %s138 = sphi 0, %s124
      %s142 = sphi 0, %s142
      %s144 = sphi 0, %s142
      %s145 = sphi 0, %s144
      %s159 = sphi 0, %s145
      %s163 = sphi 0, %s163
      %s165 = sphi 0, %s163
      %s166 = sphi 0, %s165
      %s180 = sphi 0, %s166
      %s184 = sphi 0, %s184
      %s186 = sphi 0, %s184
      %s187 = sphi 0, %s186
      %s201 = sphi 0, %s187
      %s205 = sphi 0, %s205
      %s207 = sphi 0, %s205
      %s208 = sphi 0, %s207
      %s222 = sphi 0, %s208
      %s226 = sphi 0, %s226
      %s228 = sphi 0, %s226
      %s229 = sphi 0, %s228
      %s243 = sphi 0, %s229
      %s247 = sphi 0, %s247
      %s249 = sphi 0, %s247
      %s250 = sphi 0, %s249
      %s264 = sphi 0, %s250
      %s268 = sphi 0, %s268
      %s270 = sphi 0, %s268
      %s271 = sphi 0, %s270
      %s285 = sphi 0, %s271
      %s293 = sphi 0, %s295
      %s296 = sphi 0, %s293
      %s297 = sphi 0, %s296
      %s313 = sphi 0, %s297
    $region4: #{tpu_custom_call.1} parent=1 // loop_header_branch
      %24 = sbr.rel (%p22) target = $region8
    $region5: #{tpu_custom_call.1} parent=1 // loop_body
      %s26 = ssub.s32 %s21, 1
      %s27 = ssub.s32 %s21, 2
      %s34 = sadd.s32 1, %s29
      %p35 = scmp.ge.s32.totalorder %s34, 1
      %s36 = scalar_select %p35, 0, %s34
      %s37 = sadd.s32 1, %s28
      %s38 = scalar_select %p35, %s37, %s28
      %p39 = scmp.ge.s32.totalorder %s38, 2
      %s40 = scalar_select %p39, 0, %s38
      %s41 = ssub.s32 %s28, %s40
      %s42 = ssub.s32 %s29, %s36
      %s43 = sor.u32 %s41, %s42
      %p44 = scmp.eq.s32.totalorder %s43, 0
      %s46 = sadd.s32 %s45, 1
      %s47 = scalar_select %p44, %s45, %s46
      %p50 = pneg %p44
      %p51 = scmp.eq.s32.totalorder %s21, 1
      %p52 = por %p50, %p51
      %p53 = scmp.ne.s32.totalorder %s45, %s48
      %p54 = scmp.eq.s32.totalorder %s21, 0
      %p55 = por %p53, %p54
      %p56 = scmp.ne.s32.totalorder %s45, %s48
      %p57 = scmp.eq.s32.totalorder %s26, 1
      %p58 = por %p56, %p57
      %p59 = scmp.ne.s32.totalorder %s48, %s49
      %p60 = scmp.eq.s32.totalorder %s26, 0
      %p61 = por %p59, %p60
      %p62 = scmp.ne.s32.totalorder %s48, %s49
      %p63 = scmp.eq.s32.totalorder %s27, 1
      %p64 = por %p62, %p63
      %p66 = scmp.ne.s32.totalorder %s49, %s65
      %p67 = scmp.eq.s32.totalorder %s27, 0
      %p68 = por %p66, %p67
      %s69 = ssub.s32 %s28, %s40
      %p70 = scmp.eq.s32.totalorder %s69, 0
      %s72 = sadd.s32 %s71, 1
      %s73 = scalar_select %p70, %s71, %s72
      %p76 = pneg %p70
      %p77 = scmp.eq.s32.totalorder %s21, 1
      %p78 = por %p76, %p77
      %p79 = scmp.ne.s32.totalorder %s71, %s74
      %p80 = scmp.eq.s32.totalorder %s21, 0
      %p81 = por %p79, %p80
      %p82 = scmp.ne.s32.totalorder %s71, %s74
      %p83 = scmp.eq.s32.totalorder %s26, 1
      %p84 = por %p82, %p83
      %p85 = scmp.ne.s32.totalorder %s74, %s75
      %p86 = scmp.eq.s32.totalorder %s26, 0
      %p87 = por %p85, %p86
      %p88 = scmp.ne.s32.totalorder %s74, %s75
      %p89 = scmp.eq.s32.totalorder %s27, 1
      %p90 = por %p88, %p89
      %p92 = scmp.ne.s32.totalorder %s75, %s91
      %p93 = scmp.eq.s32.totalorder %s27, 0
      %p94 = por %p92, %p93
      %s95 = ssub.s32 %s29, %s36
      %p96 = scmp.eq.s32.totalorder %s95, 0
      %s98 = sadd.s32 %s97, 1
      %s99 = scalar_select %p96, %s97, %s98
      %p102 = pneg %p96
      %p103 = scmp.eq.s32.totalorder %s21, 1
      %p104 = por %p102, %p103
      %p105 = scmp.ne.s32.totalorder %s97, %s100
      %p106 = scmp.eq.s32.totalorder %s21, 0
      %p107 = por %p105, %p106
      %p108 = scmp.ne.s32.totalorder %s97, %s100
      %p109 = scmp.eq.s32.totalorder %s26, 1
      %p110 = por %p108, %p109
      %p111 = scmp.ne.s32.totalorder %s100, %s101
      %p112 = scmp.eq.s32.totalorder %s26, 0
      %p113 = por %p111, %p112
      %p114 = scmp.ne.s32.totalorder %s100, %s101
      %p115 = scmp.eq.s32.totalorder %s27, 1
      %p116 = por %p114, %p115
      %p118 = scmp.ne.s32.totalorder %s101, %s117
      %p119 = scmp.eq.s32.totalorder %s27, 0
      %p120 = por %p118, %p119
      %s122 = sadd.s32 %s121, 1
      %p125 = scmp.eq.s32.totalorder %s21, 1
      %p126 = scmp.ne.s32.totalorder %s121, %s123
      %p127 = scmp.eq.s32.totalorder %s21, 0
      %p128 = por %p126, %p127
      %p129 = scmp.ne.s32.totalorder %s121, %s123
      %p130 = scmp.eq.s32.totalorder %s26, 1
      %p131 = por %p129, %p130
      %p132 = scmp.ne.s32.totalorder %s123, %s124
      %p133 = scmp.eq.s32.totalorder %s26, 0
      %p134 = por %p132, %p133
      %p135 = scmp.ne.s32.totalorder %s123, %s124
      %p136 = scmp.eq.s32.totalorder %s27, 1
      %p137 = por %p135, %p136
      %p139 = scmp.ne.s32.totalorder %s124, %s138
      %p140 = scmp.eq.s32.totalorder %s27, 0
      %p141 = por %p139, %p140
      %s143 = sadd.s32 %s142, 1
      %p146 = scmp.eq.s32.totalorder %s21, 1
      %p147 = scmp.ne.s32.totalorder %s142, %s144
      %p148 = scmp.eq.s32.totalorder %s21, 0
      %p149 = por %p147, %p148
      %p150 = scmp.ne.s32.totalorder %s142, %s144
      %p151 = scmp.eq.s32.totalorder %s26, 1
      %p152 = por %p150, %p151
      %p153 = scmp.ne.s32.totalorder %s144, %s145
      %p154 = scmp.eq.s32.totalorder %s26, 0
      %p155 = por %p153, %p154
      %p156 = scmp.ne.s32.totalorder %s144, %s145
      %p157 = scmp.eq.s32.totalorder %s27, 1
      %p158 = por %p156, %p157
      %p160 = scmp.ne.s32.totalorder %s145, %s159
      %p161 = scmp.eq.s32.totalorder %s27, 0
      %p162 = por %p160, %p161
      %s164 = sadd.s32 %s163, 1
      %p167 = scmp.eq.s32.totalorder %s21, 1
      %p168 = scmp.ne.s32.totalorder %s163, %s165
      %p169 = scmp.eq.s32.totalorder %s21, 0
      %p170 = por %p168, %p169
      %p171 = scmp.ne.s32.totalorder %s163, %s165
      %p172 = scmp.eq.s32.totalorder %s26, 1
      %p173 = por %p171, %p172
      %p174 = scmp.ne.s32.totalorder %s165, %s166
      %p175 = scmp.eq.s32.totalorder %s26, 0
      %p176 = por %p174, %p175
      %p177 = scmp.ne.s32.totalorder %s165, %s166
      %p178 = scmp.eq.s32.totalorder %s27, 1
      %p179 = por %p177, %p178
      %p181 = scmp.ne.s32.totalorder %s166, %s180
      %p182 = scmp.eq.s32.totalorder %s27, 0
      %p183 = por %p181, %p182
      %s185 = sadd.s32 %s184, 1
      %p188 = scmp.eq.s32.totalorder %s21, 1
      %p189 = scmp.ne.s32.totalorder %s184, %s186
      %p190 = scmp.eq.s32.totalorder %s21, 0
      %p191 = por %p189, %p190
      %p192 = scmp.ne.s32.totalorder %s184, %s186
      %p193 = scmp.eq.s32.totalorder %s26, 1
      %p194 = por %p192, %p193
      %p195 = scmp.ne.s32.totalorder %s186, %s187
      %p196 = scmp.eq.s32.totalorder %s26, 0
      %p197 = por %p195, %p196
      %p198 = scmp.ne.s32.totalorder %s186, %s187
      %p199 = scmp.eq.s32.totalorder %s27, 1
      %p200 = por %p198, %p199
      %p202 = scmp.ne.s32.totalorder %s187, %s201
      %p203 = scmp.eq.s32.totalorder %s27, 0
      %p204 = por %p202, %p203
      %s206 = sadd.s32 %s205, 1
      %p209 = scmp.eq.s32.totalorder %s21, 1
      %p210 = scmp.ne.s32.totalorder %s205, %s207
      %p211 = scmp.eq.s32.totalorder %s21, 0
      %p212 = por %p210, %p211
      %p213 = scmp.ne.s32.totalorder %s205, %s207
      %p214 = scmp.eq.s32.totalorder %s26, 1
      %p215 = por %p213, %p214
      %p216 = scmp.ne.s32.totalorder %s207, %s208
      %p217 = scmp.eq.s32.totalorder %s26, 0
      %p218 = por %p216, %p217
      %p219 = scmp.ne.s32.totalorder %s207, %s208
      %p220 = scmp.eq.s32.totalorder %s27, 1
      %p221 = por %p219, %p220
      %p223 = scmp.ne.s32.totalorder %s208, %s222
      %p224 = scmp.eq.s32.totalorder %s27, 0
      %p225 = por %p223, %p224
      %s227 = sadd.s32 %s226, 1
      %p230 = scmp.eq.s32.totalorder %s21, 1
      %p231 = scmp.ne.s32.totalorder %s226, %s228
      %p232 = scmp.eq.s32.totalorder %s21, 0
      %p233 = por %p231, %p232
      %p234 = scmp.ne.s32.totalorder %s226, %s228
      %p235 = scmp.eq.s32.totalorder %s26, 1
      %p236 = por %p234, %p235
      %p237 = scmp.ne.s32.totalorder %s228, %s229
      %p238 = scmp.eq.s32.totalorder %s26, 0
      %p239 = por %p237, %p238
      %p240 = scmp.ne.s32.totalorder %s228, %s229
      %p241 = scmp.eq.s32.totalorder %s27, 1
      %p242 = por %p240, %p241
      %p244 = scmp.ne.s32.totalorder %s229, %s243
      %p245 = scmp.eq.s32.totalorder %s27, 0
      %p246 = por %p244, %p245
      %s248 = sadd.s32 %s247, 1
      %p251 = scmp.eq.s32.totalorder %s21, 1
      %p252 = scmp.ne.s32.totalorder %s247, %s249
      %p253 = scmp.eq.s32.totalorder %s21, 0
      %p254 = por %p252, %p253
      %p255 = scmp.ne.s32.totalorder %s247, %s249
      %p256 = scmp.eq.s32.totalorder %s26, 1
      %p257 = por %p255, %p256
      %p258 = scmp.ne.s32.totalorder %s249, %s250
      %p259 = scmp.eq.s32.totalorder %s26, 0
      %p260 = por %p258, %p259
      %p261 = scmp.ne.s32.totalorder %s249, %s250
      %p262 = scmp.eq.s32.totalorder %s27, 1
      %p263 = por %p261, %p262
      %p265 = scmp.ne.s32.totalorder %s250, %s264
      %p266 = scmp.eq.s32.totalorder %s27, 0
      %p267 = por %p265, %p266
      %s269 = sadd.s32 %s268, 1
      %p272 = scmp.eq.s32.totalorder %s21, 1
      %p273 = scmp.ne.s32.totalorder %s268, %s270
      %p274 = scmp.eq.s32.totalorder %s21, 0
      %p275 = por %p273, %p274
      %p276 = scmp.ne.s32.totalorder %s268, %s270
      %p277 = scmp.eq.s32.totalorder %s26, 1
      %p278 = por %p276, %p277
      %p279 = scmp.ne.s32.totalorder %s270, %s271
      %p280 = scmp.eq.s32.totalorder %s26, 0
      %p281 = por %p279, %p280
      %p282 = scmp.ne.s32.totalorder %s270, %s271
      %p283 = scmp.eq.s32.totalorder %s27, 1
      %p284 = por %p282, %p283
      %p286 = scmp.ne.s32.totalorder %s271, %s285
      %p287 = scmp.eq.s32.totalorder %s27, 0
      %p288 = por %p286, %p287
      %s289 = ssub.s32 %s28, %s40
      %s290 = ssub.s32 %s29, %s36
      %s291 = sor.u32 %s289, %s290
      %p292 = scmp.eq.s32.totalorder %s291, 0
      %s294 = sadd.s32 %s293, 1
      %s295 = scalar_select %p292, %s293, %s294
      %p298 = pneg %p292
      %p299 = scmp.eq.s32.totalorder %s21, 1
      %p300 = por %p298, %p299
      %p301 = scmp.ne.s32.totalorder %s293, %s296
      %p302 = scmp.eq.s32.totalorder %s21, 0
      %p303 = por %p301, %p302
      %p304 = scmp.ne.s32.totalorder %s293, %s296
      %p305 = scmp.eq.s32.totalorder %s26, 1
      %p306 = por %p304, %p305
      %p307 = scmp.ne.s32.totalorder %s296, %s297
      %p308 = scmp.eq.s32.totalorder %s26, 0
      %p309 = por %p307, %p308
      %p310 = scmp.ne.s32.totalorder %s296, %s297
      %p311 = scmp.eq.s32.totalorder %s27, 1
      %p312 = por %p310, %p311
      %p314 = scmp.ne.s32.totalorder %s297, %s313
      %p315 = scmp.eq.s32.totalorder %s27, 0
      %p316 = por %p314, %p315
      %p317 = scmp.le.s32.totalorder 1, %s21
      %p318 = scmp.lt.s32.totalorder %s21, 3
      %p319 = pnand %p317, %p318
      %p320 = pneg %p319
      // Predicated region
      $region9: #{tpu_custom_call.1} parent=5 // pred_check
        _
      $region10: #{tpu_custom_call.1} parent=5 // pred_check_branch
        %322 = sbr.rel (%p319) target = $region12
      $region11: #{tpu_custom_call.1} parent=5 // pred_region
        %s323 = ssub.s32 %s21, 1
        // Predicated region
        $region13: #{tpu_custom_call.1} parent=11 // pred_check
          %p324 = pneg %p113
        $region14: #{tpu_custom_call.1} parent=11 // pred_check_branch
          %326 = sbr.rel (%p324) target = $region16
        $region15: #{tpu_custom_call.1} parent=11 // pred_region
          %p327 = scmp.lt.s32.totalorder %s31, 0
          %s328 = scalar_select %p327, %s31, 0
          %s329 = smul.addr %s328, 2
          %s330 = scalar_lea.vmem %s2, %s329
        $region16: #{tpu_custom_call.1} parent=11 // pred_fallthru
          _
        // Predicated region
        $region17: #{tpu_custom_call.1} parent=11 // pred_check
          %p331 = pneg %p134
        $region18: #{tpu_custom_call.1} parent=11 // pred_check_branch
          %333 = sbr.rel (%p331) target = $region20
        $region19: #{tpu_custom_call.1} parent=11 // pred_region
          _
        $region20: #{tpu_custom_call.1} parent=11 // pred_fallthru
          _
        // Predicated region
        $region21: #{tpu_custom_call.1} parent=11 // pred_check
          %p334 = pneg %p155
        $region22: #{tpu_custom_call.1} parent=11 // pred_check_branch
          %336 = sbr.rel (%p334) target = $region24
        $region23: #{tpu_custom_call.1} parent=11 // pred_region
          _
        $region24: #{tpu_custom_call.1} parent=11 // pred_fallthru
          _
        // Predicated region
        $region25: #{tpu_custom_call.1} parent=11 // pred_check
          %p337 = pneg %p176
        $region26: #{tpu_custom_call.1} parent=11 // pred_check_branch
          %339 = sbr.rel (%p337) target = $region28
        $region27: #{tpu_custom_call.1} parent=11 // pred_region
          _
        $region28: #{tpu_custom_call.1} parent=11 // pred_fallthru
          _
        // Predicated region
        $region29: #{tpu_custom_call.1} parent=11 // pred_check
          %p340 = pneg %p197
        $region30: #{tpu_custom_call.1} parent=11 // pred_check_branch
          %342 = sbr.rel (%p340) target = $region32
        $region31: #{tpu_custom_call.1} parent=11 // pred_region
          _
        $region32: #{tpu_custom_call.1} parent=11 // pred_fallthru
          _
        // Predicated region
        $region33: #{tpu_custom_call.1} parent=11 // pred_check
          %p343 = pneg %p218
        $region34: #{tpu_custom_call.1} parent=11 // pred_check_branch
          %345 = sbr.rel (%p343) target = $region36
        $region35: #{tpu_custom_call.1} parent=11 // pred_region
          _
        $region36: #{tpu_custom_call.1} parent=11 // pred_fallthru
          _
        // Predicated region
        $region37: #{tpu_custom_call.1} parent=11 // pred_check
          %p346 = pneg %p239
        $region38: #{tpu_custom_call.1} parent=11 // pred_check_branch
          %348 = sbr.rel (%p346) target = $region40
        $region39: #{tpu_custom_call.1} parent=11 // pred_region
          _
        $region40: #{tpu_custom_call.1} parent=11 // pred_fallthru
          _
        // Predicated region
        $region41: #{tpu_custom_call.1} parent=11 // pred_check
          %p349 = pneg %p260
        $region42: #{tpu_custom_call.1} parent=11 // pred_check_branch
          %351 = sbr.rel (%p349) target = $region44
        $region43: #{tpu_custom_call.1} parent=11 // pred_region
          _
        $region44: #{tpu_custom_call.1} parent=11 // pred_fallthru
          _
        // Predicated region
        $region45: #{tpu_custom_call.1} parent=11 // pred_check
          %p352 = pneg %p281
        $region46: #{tpu_custom_call.1} parent=11 // pred_check_branch
          %354 = sbr.rel (%p352) target = $region48
        $region47: #{tpu_custom_call.1} parent=11 // pred_region
          _
        $region48: #{tpu_custom_call.1} parent=11 // pred_fallthru
          _
      $region12: #{tpu_custom_call.1} parent=5 // pred_fallthru
        _
      %p355 = scmp.lt.s32.totalorder %s21, 2
      // Predicated region
      $region49: #{tpu_custom_call.1} parent=5 // pred_check
        %p356 = pneg %p355
      $region50: #{tpu_custom_call.1} parent=5 // pred_check_branch
        %358 = sbr.rel (%p356) target = $region52
      $region51: #{tpu_custom_call.1} parent=5 // pred_region
        // Predicated region
        $region53: #{tpu_custom_call.1} parent=51 // pred_check
          %p359 = pneg %p55
        $region54: #{tpu_custom_call.1} parent=51 // pred_check_branch
          %361 = sbr.rel (%p359) target = $region56
        $region55: #{tpu_custom_call.1} parent=51 // pred_region
          %s362 = smul.u32 2, %s29
          %p363 = scmp.lt.s32.totalorder %s28, 1
          %s364 = scalar_select %p363, %s28, 1
          %p365 = scmp.lt.s32.totalorder %s362, 1
          %s366 = scalar_select %p365, %s362, 1
          %s367 = smul.addr %s364, 2
          %s368 = sadd.s32 %s366, %s367
          %s369 = smul.addr %s368, 8
          %s370 = scalar_lea.vmem %s0, %s369
          %s371 = smul.u32 2, %s29
        $region56: #{tpu_custom_call.1} parent=51 // pred_fallthru
          _
        // Predicated region
        $region57: #{tpu_custom_call.1} parent=51 // pred_check
          %p372 = pneg %p81
        $region58: #{tpu_custom_call.1} parent=51 // pred_check_branch
          %374 = sbr.rel (%p372) target = $region60
        $region59: #{tpu_custom_call.1} parent=51 // pred_region
          %p375 = scmp.lt.s32.totalorder %s28, 1
          %s376 = scalar_select %p375, %s28, 1
          %s377 = smul.addr %s376, 2
          %s378 = smul.addr %s377, 8
          %s379 = scalar_lea.vmem %s1, %s378
        $region60: #{tpu_custom_call.1} parent=51 // pred_fallthru
          _
      $region52: #{tpu_custom_call.1} parent=5 // pred_fallthru
        _
      %p380 = scmp.le.s32.totalorder 1, %s21
      %p381 = scmp.lt.s32.totalorder %s21, 3
      %p382 = pnand %p380, %p381
      %p383 = pneg %p382
      // Predicated region
      $region61: #{tpu_custom_call.1} parent=5 // pred_check
        _
      $region62: #{tpu_custom_call.1} parent=5 // pred_check_branch
        %385 = sbr.rel (%p382) target = $region64
      $region63: #{tpu_custom_call.1} parent=5 // pred_region
        %s386 = ssub.s32 %s21, 1
        %s387 = smul.u32 2, %s31
        %p388 = scmp.lt.s32.totalorder %s30, 1
        %s389 = scalar_select %p388, %s30, 1
        %p390 = scmp.lt.s32.totalorder %s387, 1
        %s391 = scalar_select %p390, %s387, 1
        %s392 = smul.addr %s389, 2
        %s393 = sadd.s32 %s391, %s392
        %s394 = smul.addr %s393, 8
        %s395 = scalar_lea.vmem %s0, %s394
        %p396 = pneg %p61
        %p397 = pneg %p58
        %p398 = scmp.lt.s32.totalorder %s30, 1
        %s399 = scalar_select %p398, %s30, 1
        %s400 = smul.addr %s399, 2
        %s401 = smul.addr %s400, 8
        %s402 = scalar_lea.vmem %s1, %s401
        %p403 = pneg %p87
        %p404 = pneg %p84
        %p405 = scmp.lt.s32.totalorder %s31, 0
        %s406 = scalar_select %p405, %s31, 0
        %s407 = smul.addr %s406, 2
        %s408 = scalar_lea.vmem %s2, %s407
        %p409 = pneg %p113
        %p410 = pneg %p110
        %p411 = pneg %p134
        %p412 = pneg %p131
        %p413 = pneg %p155
        %p414 = pneg %p152
        %p415 = pneg %p176
        %p416 = pneg %p173
        %p417 = pneg %p197
        %p418 = pneg %p194
        %p419 = pneg %p218
        %p420 = pneg %p215
        %p421 = pneg %p239
        %p422 = pneg %p236
        %p423 = pneg %p260
        %p424 = pneg %p257
        %p425 = pneg %p281
        %p426 = pneg %p278
        %p427 = pneg %p309
        %p428 = pneg %p306
        %s429 = sand.u32 %s296, 1
        %s430 = scalar_lea.sflag [#allocation4], %s429
        %s431 = sand.u32 %s296, 1
        %s432 = smul.addr %s431, 2
        %s433 = scalar_lea.vmem [#allocation3], %s432
        %s434 = smul.u32 2, %s31
        %p435 = scmp.lt.s32.totalorder %s30, 1
        %s436 = scalar_select %p435, %s30, 1
        %p437 = scmp.lt.s32.totalorder %s434, 1
        %s438 = scalar_select %p437, %s434, 1
        %s439 = smul.addr %s436, 2
        %s440 = sadd.s32 %s438, %s439
        %s441 = smul.addr %s440, 8
        %s442 = scalar_lea.vmem %s0, %s441
        %s443 = smul.u32 2, %s31
        %p444 = scmp.lt.s32.totalorder %s30, 1
        %s445 = scalar_select %p444, %s30, 1
        %s446 = smul.addr %s445, 2
        %s447 = smul.addr %s446, 8
        %s448 = scalar_lea.vmem %s1, %s447
        %p449 = scmp.lt.s32.totalorder %s31, 0
        %s450 = scalar_select %p449, %s31, 0
        %s451 = smul.addr %s450, 2
        %s452 = scalar_lea.vmem %s2, %s451
        %v454 = vld [vmem:[%s442] sm:$0xff]
        %v455 = vld [vmem:[%s442 + $0x8] sm:$0xff]
        %v456 = vpack.c.bf16 %v455, %v454
        %v457 = vld [vmem:[%s3] sm:$0xf]
        %vm458 = vcmask 64512
        %v460 = vsel %vm458, %v456, 0
        %vm462 = vcmask 1043456
        %v464 = vsel %vm462, %v457, 0
        %466 = vmatprep.subr.bf16.mxu0 0
        %467 = vmatpush1.bf16.msra.mxu0 %v464
        %468 = vmatprep.subr.bf16.mxu0 0
        %469 = vmatpush1.bf16.msra.mxu0 0
        %470 = vmatprep.subr.bf16.mxu0 0
        %471 = vmatpush1.bf16.msra.mxu0 0
        %472 = vmatprep.subr.bf16.mxu0 0
        %473 = vmatpush1.bf16.msra.mxu0 0
        %474 = vmatprep.subr.bf16.mxu0 0
        %475 = vmatpush1.bf16.msra.mxu0 0
        %476 = vmatprep.subr.bf16.mxu0 0
        %477 = vmatpush1.bf16.msra.mxu0 0
        %478 = vmatprep.subr.bf16.mxu0 0
        %479 = vmatpush1.bf16.msra.mxu0 0
        %480 = vmatprep.subr.bf16.mxu0 0
        %481 = vmatpush1.bf16.msra.mxu0 0
        %482 = vmatprep.subr.bf16.mxu0 0
        %483 = vmatpush1.bf16.msra.mxu0 0
        %484 = vmatprep.subr.bf16.mxu0 0
        %485 = vmatpush1.bf16.msra.mxu0 0
        %486 = vmatprep.subr.bf16.mxu0 0
        %487 = vmatpush1.bf16.msra.mxu0 0
        %488 = vmatprep.subr.bf16.mxu0 0
        %489 = vmatpush1.bf16.msra.mxu0 0
        %490 = vmatprep.subr.bf16.mxu0 0
        %491 = vmatpush1.bf16.msra.mxu0 0
        %492 = vmatprep.subr.bf16.mxu0 0
        %493 = vmatpush1.bf16.msra.mxu0 0
        %494 = vmatprep.subr.bf16.mxu0 0
        %495 = vmatpush1.bf16.msra.mxu0 0
        %496 = vmatprep.subr.bf16.mxu0 0
        %497 = vmatpush1.bf16.msra.mxu0 0
        %498 = vmatprep.mubr.bf16.mxu0 0
        %499 = vmatmul.mubr.bf16.gmra.mrb[0].mxu0 %v460
        %v500 = vpop.f32.mrb[0].mxu0
        %v501 = vadd.f32 0.0, %v500
        %v502 = vpop.f32.mrb[0].mxu0
        %v503 = vpop.f32.mrb[0].mxu0
        %v504 = vadd.f32 0.0, %v503
        %v505 = vpop.f32.mrb[0].mxu0
        %506 = vdwg.mxu0
        %v507 = vld [vmem:[%s4] sm:$0x1]
        %v509 = vlaneseq
        %v510 = vshrl.u32 %v509, 7
        %v511 = vsub.s32 0, %v510
        %v512 = vrot.slane %v507, %v511
        %v514 = vmul.f32 %v501, %v512
        %v515 = vmul.f32 %v504, %v512
        %v516 = vld [vmem:[%s5] sm:$0x1]
        %v518 = vlaneseq
        %v519 = vshrl.u32 %v518, 7
        %v520 = vsub.s32 0, %v519
        %v521 = vrot.slane %v516, %v520
        %v523 = vadd.f32 %v514, %v521
        %v524 = vadd.f32 %v515, %v521
        %v525 = vmax.f32 %v523, 0.0
        %v526 = vmax.f32 %v524, 0.0
        %v527 = vld [vmem:[%s448] sm:$0xff]
        %v528 = vld [vmem:[%s448 + $0x8] sm:$0xff]
        %v529 = vpack.c.bf16 %v528, %v527
        %v531 = vsel %vm458, %v529, 0
        %533 = vmatprep.subr.bf16.mxu0 0
        %534 = vmatpush1.bf16.msra.mxu0 %v464
        %535 = vmatprep.subr.bf16.mxu0 0
        %536 = vmatpush1.bf16.msra.mxu0 0
        %537 = vmatprep.subr.bf16.mxu0 0
        %538 = vmatpush1.bf16.msra.mxu0 0
        %539 = vmatprep.subr.bf16.mxu0 0
        %540 = vmatpush1.bf16.msra.mxu0 0
        %541 = vmatprep.subr.bf16.mxu0 0
        %542 = vmatpush1.bf16.msra.mxu0 0
        %543 = vmatprep.subr.bf16.mxu0 0
        %544 = vmatpush1.bf16.msra.mxu0 0
        %545 = vmatprep.subr.bf16.mxu0 0
        %546 = vmatpush1.bf16.msra.mxu0 0
        %547 = vmatprep.subr.bf16.mxu0 0
        %548 = vmatpush1.bf16.msra.mxu0 0
        %549 = vmatprep.subr.bf16.mxu0 0
        %550 = vmatpush1.bf16.msra.mxu0 0
        %551 = vmatprep.subr.bf16.mxu0 0
        %552 = vmatpush1.bf16.msra.mxu0 0
        %553 = vmatprep.subr.bf16.mxu0 0
        %554 = vmatpush1.bf16.msra.mxu0 0
        %555 = vmatprep.subr.bf16.mxu0 0
        %556 = vmatpush1.bf16.msra.mxu0 0
        %557 = vmatprep.subr.bf16.mxu0 0
        %558 = vmatpush1.bf16.msra.mxu0 0
        %559 = vmatprep.subr.bf16.mxu0 0
        %560 = vmatpush1.bf16.msra.mxu0 0
        %561 = vmatprep.subr.bf16.mxu0 0
        %562 = vmatpush1.bf16.msra.mxu0 0
        %563 = vmatprep.subr.bf16.mxu0 0
        %564 = vmatpush1.bf16.msra.mxu0 0
        %565 = vmatprep.mubr.bf16.mxu0 0
        %566 = vmatmul.mubr.bf16.gmra.mrb[0].mxu0 %v531
        %v567 = vpop.f32.mrb[0].mxu0
        %v568 = vadd.f32 0.0, %v567
        %v569 = vpop.f32.mrb[0].mxu0
        %v570 = vpop.f32.mrb[0].mxu0
        %v571 = vadd.f32 0.0, %v570
        %v572 = vpop.f32.mrb[0].mxu0
        %573 = vdwg.mxu0
        %v574 = vmul.f32 %v568, %v512
        %v575 = vmul.f32 %v571, %v512
        %v576 = vadd.f32 %v574, %v521
        %v577 = vadd.f32 %v575, %v521
        %v578 = vmax.f32 %v576, 0.0
        %v579 = vmax.f32 %v577, 0.0
        %v582 = vcombine.high %v525, %v525
        %v584 = vunpack.c.l.s4 1966171168
        %v585 = vunpack.c.0.s8 %v584
        %v586 = vlaneseq
        %v587 = vshrl.u32 %v586, 7
        %v588 = vsub.s32 %v585, %v587
        %v589 = vrot.slane %v525, %v588
        %v591 = vunpack.c.l.s4 1966171168
        %v592 = vunpack.c.0.s8 %v591
        %v593 = vlaneseq
        %v594 = vshrl.u32 %v593, 7
        %v595 = vsub.s32 %v592, %v594
        %v596 = vrot.slane %v582, %v595
        %v597 = vcombine.high %v589, %v589
        %v598 = vcombine.high %v596, %v596
        %v600 = vunpack.c.l.s4 1966171168
        %v601 = vunpack.c.0.s8 %v600
        %v602 = vlaneseq
        %v603 = vshrl.u32 %v602, 7
        %v604 = vsub.s32 %v601, %v603
        %v605 = vrot.slane %v589, %v604
        %v607 = vunpack.c.l.s4 1966171168
        %v608 = vunpack.c.0.s8 %v607
        %v609 = vlaneseq
        %v610 = vshrl.u32 %v609, 7
        %v611 = vsub.s32 %v608, %v610
        %v612 = vrot.slane %v596, %v611
        %v614 = vunpack.c.l.s4 1966171168
        %v615 = vunpack.c.0.s8 %v614
        %v616 = vlaneseq
        %v617 = vshrl.u32 %v616, 7
        %v618 = vsub.s32 %v615, %v617
        %v619 = vrot.slane %v597, %v618
        %v621 = vunpack.c.l.s4 1966171168
        %v622 = vunpack.c.0.s8 %v621
        %v623 = vlaneseq
        %v624 = vshrl.u32 %v623, 7
        %v625 = vsub.s32 %v622, %v624
        %v626 = vrot.slane %v598, %v625
        %v627 = vcombine.high %v605, %v605
        %v628 = vcombine.high %v612, %v612
        %v629 = vcombine.high %v619, %v619
        %v630 = vcombine.high %v626, %v626
        %v631 = vcombine.high %v526, %v526
        %v633 = vunpack.c.l.s4 1966171168
        %v634 = vunpack.c.0.s8 %v633
        %v635 = vlaneseq
        %v636 = vshrl.u32 %v635, 7
        %v637 = vsub.s32 %v634, %v636
        %v638 = vrot.slane %v526, %v637
        %v640 = vunpack.c.l.s4 1966171168
        %v641 = vunpack.c.0.s8 %v640
        %v642 = vlaneseq
        %v643 = vshrl.u32 %v642, 7
        %v644 = vsub.s32 %v641, %v643
        %v645 = vrot.slane %v631, %v644
        %v646 = vcombine.high %v638, %v638
        %v647 = vcombine.high %v645, %v645
        %v649 = vunpack.c.l.s4 1966171168
        %v650 = vunpack.c.0.s8 %v649
        %v651 = vlaneseq
        %v652 = vshrl.u32 %v651, 7
        %v653 = vsub.s32 %v650, %v652
        %v654 = vrot.slane %v638, %v653
        %v656 = vunpack.c.l.s4 1966171168
        %v657 = vunpack.c.0.s8 %v656
        %v658 = vlaneseq
        %v659 = vshrl.u32 %v658, 7
        %v660 = vsub.s32 %v657, %v659
        %v661 = vrot.slane %v645, %v660
        %v663 = vunpack.c.l.s4 1966171168
        %v664 = vunpack.c.0.s8 %v663
        %v665 = vlaneseq
        %v666 = vshrl.u32 %v665, 7
        %v667 = vsub.s32 %v664, %v666
        %v668 = vrot.slane %v646, %v667
        %v670 = vunpack.c.l.s4 1966171168
        %v671 = vunpack.c.0.s8 %v670
        %v672 = vlaneseq
        %v673 = vshrl.u32 %v672, 7
        %v674 = vsub.s32 %v671, %v673
        %v675 = vrot.slane %v647, %v674
        %v676 = vcombine.high %v654, %v654
        %v677 = vcombine.high %v661, %v661
        %v678 = vcombine.high %v668, %v668
        %v679 = vcombine.high %v675, %v675
        %v680 = vlaneseq
        %v681 = vshrl.u32 %v680, 7
        %v682 = vsub.s32 0, %v681
        %v683 = vrot.slane %v605, %v682
        %v684 = vlaneseq
        %v685 = vshrl.u32 %v684, 7
        %v686 = vsub.s32 0, %v685
        %v687 = vrot.slane %v619, %v686
        %v688 = vlaneseq
        %v689 = vshrl.u32 %v688, 7
        %v690 = vsub.s32 0, %v689
        %v691 = vrot.slane %v627, %v690
        %v692 = vlaneseq
        %v693 = vshrl.u32 %v692, 7
        %v694 = vsub.s32 0, %v693
        %v695 = vrot.slane %v629, %v694
        %v696 = vlaneseq
        %v697 = vshrl.u32 %v696, 7
        %v698 = vsub.s32 0, %v697
        %v699 = vrot.slane %v612, %v698
        %v700 = vlaneseq
        %v701 = vshrl.u32 %v700, 7
        %v702 = vsub.s32 0, %v701
        %v703 = vrot.slane %v626, %v702
        %v704 = vlaneseq
        %v705 = vshrl.u32 %v704, 7
        %v706 = vsub.s32 0, %v705
        %v707 = vrot.slane %v628, %v706
        %v708 = vlaneseq
        %v709 = vshrl.u32 %v708, 7
        %v710 = vsub.s32 0, %v709
        %v711 = vrot.slane %v630, %v710
        %v712 = vlaneseq
        %v713 = vshrl.u32 %v712, 7
        %v714 = vsub.s32 0, %v713
        %v715 = vrot.slane %v654, %v714
        %v716 = vlaneseq
        %v717 = vshrl.u32 %v716, 7
        %v718 = vsub.s32 0, %v717
        %v719 = vrot.slane %v668, %v718
        %v720 = vlaneseq
        %v721 = vshrl.u32 %v720, 7
        %v722 = vsub.s32 0, %v721
        %v723 = vrot.slane %v676, %v722
        %v724 = vlaneseq
        %v725 = vshrl.u32 %v724, 7
        %v726 = vsub.s32 0, %v725
        %v727 = vrot.slane %v678, %v726
        %v728 = vlaneseq
        %v729 = vshrl.u32 %v728, 7
        %v730 = vsub.s32 0, %v729
        %v731 = vrot.slane %v661, %v730
        %v732 = vlaneseq
        %v733 = vshrl.u32 %v732, 7
        %v734 = vsub.s32 0, %v733
        %v735 = vrot.slane %v675, %v734
        %v736 = vlaneseq
        %v737 = vshrl.u32 %v736, 7
        %v738 = vsub.s32 0, %v737
        %v739 = vrot.slane %v677, %v738
        %v740 = vlaneseq
        %v741 = vshrl.u32 %v740, 7
        %v742 = vsub.s32 0, %v741
        %v743 = vrot.slane %v679, %v742
        %v760 = vsub.f32 %v683, %v578
        %v761 = vsub.f32 %v683, %v579
        %v762 = vsub.f32 %v687, %v578
        %v763 = vsub.f32 %v687, %v579
        %v764 = vsub.f32 %v691, %v578
        %v765 = vsub.f32 %v691, %v579
        %v766 = vsub.f32 %v695, %v578
        %v767 = vsub.f32 %v695, %v579
        %v768 = vsub.f32 %v699, %v578
        %v769 = vsub.f32 %v699, %v579
        %v770 = vsub.f32 %v703, %v578
        %v771 = vsub.f32 %v703, %v579
        %v772 = vsub.f32 %v707, %v578
        %v773 = vsub.f32 %v707, %v579
        %v774 = vsub.f32 %v711, %v578
        %v775 = vsub.f32 %v711, %v579
        %v776 = vsub.f32 %v715, %v578
        %v777 = vsub.f32 %v715, %v579
        %v778 = vsub.f32 %v719, %v578
        %v779 = vsub.f32 %v719, %v579
        %v780 = vsub.f32 %v723, %v578
        %v781 = vsub.f32 %v723, %v579
        %v782 = vsub.f32 %v727, %v578
        %v783 = vsub.f32 %v727, %v579
        %v784 = vsub.f32 %v731, %v578
        %v785 = vsub.f32 %v731, %v579
        %v786 = vsub.f32 %v735, %v578
        %v787 = vsub.f32 %v735, %v579
        %v788 = vsub.f32 %v739, %v578
        %v789 = vsub.f32 %v739, %v579
        %v790 = vsub.f32 %v743, %v578
        %v791 = vsub.f32 %v743, %v579
        %v792 = vmul.f32 %v760, %v760
        %v793 = vmul.f32 %v761, %v761
        %v794 = vmul.f32 %v762, %v762
        %v795 = vmul.f32 %v763, %v763
        %v796 = vmul.f32 %v764, %v764
        %v797 = vmul.f32 %v765, %v765
        %v798 = vmul.f32 %v766, %v766
        %v799 = vmul.f32 %v767, %v767
        %v800 = vmul.f32 %v768, %v768
        %v801 = vmul.f32 %v769, %v769
        %v802 = vmul.f32 %v770, %v770
        %v803 = vmul.f32 %v771, %v771
        %v804 = vmul.f32 %v772, %v772
        %v805 = vmul.f32 %v773, %v773
        %v806 = vmul.f32 %v774, %v774
        %v807 = vmul.f32 %v775, %v775
        %v808 = vmul.f32 %v776, %v776
        %v809 = vmul.f32 %v777, %v777
        %v810 = vmul.f32 %v778, %v778
        %v811 = vmul.f32 %v779, %v779
        %v812 = vmul.f32 %v780, %v780
        %v813 = vmul.f32 %v781, %v781
        %v814 = vmul.f32 %v782, %v782
        %v815 = vmul.f32 %v783, %v783
        %v816 = vmul.f32 %v784, %v784
        %v817 = vmul.f32 %v785, %v785
        %v818 = vmul.f32 %v786, %v786
        %v819 = vmul.f32 %v787, %v787
        %v820 = vmul.f32 %v788, %v788
        %v821 = vmul.f32 %v789, %v789
        %v822 = vmul.f32 %v790, %v790
        %v823 = vmul.f32 %v791, %v791
        %v824 = vadd.f32 %v792, 1e-09
        %v825 = vadd.f32 %v793, 1e-09
        %v826 = vadd.f32 %v794, 1e-09
        %v827 = vadd.f32 %v795, 1e-09
        %v828 = vadd.f32 %v796, 1e-09
        %v829 = vadd.f32 %v797, 1e-09
        %v830 = vadd.f32 %v798, 1e-09
        %v831 = vadd.f32 %v799, 1e-09
        %v832 = vadd.f32 %v800, 1e-09
        %v833 = vadd.f32 %v801, 1e-09
        %v834 = vadd.f32 %v802, 1e-09
        %v835 = vadd.f32 %v803, 1e-09
        %v836 = vadd.f32 %v804, 1e-09
        %v837 = vadd.f32 %v805, 1e-09
        %v838 = vadd.f32 %v806, 1e-09
        %v839 = vadd.f32 %v807, 1e-09
        %v840 = vadd.f32 %v808, 1e-09
        %v841 = vadd.f32 %v809, 1e-09
        %v842 = vadd.f32 %v810, 1e-09
        %v843 = vadd.f32 %v811, 1e-09
        %v844 = vadd.f32 %v812, 1e-09
        %v845 = vadd.f32 %v813, 1e-09
        %v846 = vadd.f32 %v814, 1e-09
        %v847 = vadd.f32 %v815, 1e-09
        %v848 = vadd.f32 %v816, 1e-09
        %v849 = vadd.f32 %v817, 1e-09
        %v850 = vadd.f32 %v818, 1e-09
        %v851 = vadd.f32 %v819, 1e-09
        %v852 = vadd.f32 %v820, 1e-09
        %v853 = vadd.f32 %v821, 1e-09
        %v854 = vadd.f32 %v822, 1e-09
        %v855 = vadd.f32 %v823, 1e-09
        %v856 = vrsqrt.pop %v824
        %v857 = vmul.f32 %v824, %v856
        %vm858 = vcmp.eq.f32.partialorder %v824, inf
        %v859 = vsel %vm858, %v824, %v857
        %vm860 = vcmp.eq.f32.partialorder %v824, 0.0
        %v861 = vand.u32 %v824, 2147483648
        %v862 = vsel %vm860, %v861, %v859
        %v863 = vrsqrt.pop %v825
        %v864 = vmul.f32 %v825, %v863
        %vm865 = vcmp.eq.f32.partialorder %v825, inf
        %v866 = vsel %vm865, %v825, %v864
        %vm867 = vcmp.eq.f32.partialorder %v825, 0.0
        %v868 = vand.u32 %v825, 2147483648
        %v869 = vsel %vm867, %v868, %v866
        %v870 = vrsqrt.pop %v826
        %v871 = vmul.f32 %v826, %v870
        %vm872 = vcmp.eq.f32.partialorder %v826, inf
        %v873 = vsel %vm872, %v826, %v871
        %vm874 = vcmp.eq.f32.partialorder %v826, 0.0
        %v875 = vand.u32 %v826, 2147483648
        %v876 = vsel %vm874, %v875, %v873
        %v877 = vrsqrt.pop %v827
        %v878 = vmul.f32 %v827, %v877
        %vm879 = vcmp.eq.f32.partialorder %v827, inf
        %v880 = vsel %vm879, %v827, %v878
        %vm881 = vcmp.eq.f32.partialorder %v827, 0.0
        %v882 = vand.u32 %v827, 2147483648
        %v883 = vsel %vm881, %v882, %v880
        %v884 = vrsqrt.pop %v828
        %v885 = vmul.f32 %v828, %v884
        %vm886 = vcmp.eq.f32.partialorder %v828, inf
        %v887 = vsel %vm886, %v828, %v885
        %vm888 = vcmp.eq.f32.partialorder %v828, 0.0
        %v889 = vand.u32 %v828, 2147483648
        %v890 = vsel %vm888, %v889, %v887
        %v891 = vrsqrt.pop %v829
        %v892 = vmul.f32 %v829, %v891
        %vm893 = vcmp.eq.f32.partialorder %v829, inf
        %v894 = vsel %vm893, %v829, %v892
        %vm895 = vcmp.eq.f32.partialorder %v829, 0.0
        %v896 = vand.u32 %v829, 2147483648
        %v897 = vsel %vm895, %v896, %v894
        %v898 = vrsqrt.pop %v830
        %v899 = vmul.f32 %v830, %v898
        %vm900 = vcmp.eq.f32.partialorder %v830, inf
        %v901 = vsel %vm900, %v830, %v899
        %vm902 = vcmp.eq.f32.partialorder %v830, 0.0
        %v903 = vand.u32 %v830, 2147483648
        %v904 = vsel %vm902, %v903, %v901
        %v905 = vrsqrt.pop %v831
        %v906 = vmul.f32 %v831, %v905
        %vm907 = vcmp.eq.f32.partialorder %v831, inf
        %v908 = vsel %vm907, %v831, %v906
        %vm909 = vcmp.eq.f32.partialorder %v831, 0.0
        %v910 = vand.u32 %v831, 2147483648
        %v911 = vsel %vm909, %v910, %v908
        %v912 = vrsqrt.pop %v832
        %v913 = vmul.f32 %v832, %v912
        %vm914 = vcmp.eq.f32.partialorder %v832, inf
        %v915 = vsel %vm914, %v832, %v913
        %vm916 = vcmp.eq.f32.partialorder %v832, 0.0
        %v917 = vand.u32 %v832, 2147483648
        %v918 = vsel %vm916, %v917, %v915
        %v919 = vrsqrt.pop %v833
        %v920 = vmul.f32 %v833, %v919
        %vm921 = vcmp.eq.f32.partialorder %v833, inf
        %v922 = vsel %vm921, %v833, %v920
        %vm923 = vcmp.eq.f32.partialorder %v833, 0.0
        %v924 = vand.u32 %v833, 2147483648
        %v925 = vsel %vm923, %v924, %v922
        %v926 = vrsqrt.pop %v834
        %v927 = vmul.f32 %v834, %v926
        %vm928 = vcmp.eq.f32.partialorder %v834, inf
        %v929 = vsel %vm928, %v834, %v927
        %vm930 = vcmp.eq.f32.partialorder %v834, 0.0
        %v931 = vand.u32 %v834, 2147483648
        %v932 = vsel %vm930, %v931, %v929
        %v933 = vrsqrt.pop %v835
        %v934 = vmul.f32 %v835, %v933
        %vm935 = vcmp.eq.f32.partialorder %v835, inf
        %v936 = vsel %vm935, %v835, %v934
        %vm937 = vcmp.eq.f32.partialorder %v835, 0.0
        %v938 = vand.u32 %v835, 2147483648
        %v939 = vsel %vm937, %v938, %v936
        %v940 = vrsqrt.pop %v836
        %v941 = vmul.f32 %v836, %v940
        %vm942 = vcmp.eq.f32.partialorder %v836, inf
        %v943 = vsel %vm942, %v836, %v941
        %vm944 = vcmp.eq.f32.partialorder %v836, 0.0
        %v945 = vand.u32 %v836, 2147483648
        %v946 = vsel %vm944, %v945, %v943
        %v947 = vrsqrt.pop %v837
        %v948 = vmul.f32 %v837, %v947
        %vm949 = vcmp.eq.f32.partialorder %v837, inf
        %v950 = vsel %vm949, %v837, %v948
        %vm951 = vcmp.eq.f32.partialorder %v837, 0.0
        %v952 = vand.u32 %v837, 2147483648
        %v953 = vsel %vm951, %v952, %v950
        %v954 = vrsqrt.pop %v838
        %v955 = vmul.f32 %v838, %v954
        %vm956 = vcmp.eq.f32.partialorder %v838, inf
        %v957 = vsel %vm956, %v838, %v955
        %vm958 = vcmp.eq.f32.partialorder %v838, 0.0
        %v959 = vand.u32 %v838, 2147483648
        %v960 = vsel %vm958, %v959, %v957
        %v961 = vrsqrt.pop %v839
        %v962 = vmul.f32 %v839, %v961
        %vm963 = vcmp.eq.f32.partialorder %v839, inf
        %v964 = vsel %vm963, %v839, %v962
        %vm965 = vcmp.eq.f32.partialorder %v839, 0.0
        %v966 = vand.u32 %v839, 2147483648
        %v967 = vsel %vm965, %v966, %v964
        %v968 = vrsqrt.pop %v840
        %v969 = vmul.f32 %v840, %v968
        %vm970 = vcmp.eq.f32.partialorder %v840, inf
        %v971 = vsel %vm970, %v840, %v969
        %vm972 = vcmp.eq.f32.partialorder %v840, 0.0
        %v973 = vand.u32 %v840, 2147483648
        %v974 = vsel %vm972, %v973, %v971
        %v975 = vrsqrt.pop %v841
        %v976 = vmul.f32 %v841, %v975
        %vm977 = vcmp.eq.f32.partialorder %v841, inf
        %v978 = vsel %vm977, %v841, %v976
        %vm979 = vcmp.eq.f32.partialorder %v841, 0.0
        %v980 = vand.u32 %v841, 2147483648
        %v981 = vsel %vm979, %v980, %v978
        %v982 = vrsqrt.pop %v842
        %v983 = vmul.f32 %v842, %v982
        %vm984 = vcmp.eq.f32.partialorder %v842, inf
        %v985 = vsel %vm984, %v842, %v983
        %vm986 = vcmp.eq.f32.partialorder %v842, 0.0
        %v987 = vand.u32 %v842, 2147483648
        %v988 = vsel %vm986, %v987, %v985
        %v989 = vrsqrt.pop %v843
        %v990 = vmul.f32 %v843, %v989
        %vm991 = vcmp.eq.f32.partialorder %v843, inf
        %v992 = vsel %vm991, %v843, %v990
        %vm993 = vcmp.eq.f32.partialorder %v843, 0.0
        %v994 = vand.u32 %v843, 2147483648
        %v995 = vsel %vm993, %v994, %v992
        %v996 = vrsqrt.pop %v844
        %v997 = vmul.f32 %v844, %v996
        %vm998 = vcmp.eq.f32.partialorder %v844, inf
        %v999 = vsel %vm998, %v844, %v997
        %vm1000 = vcmp.eq.f32.partialorder %v844, 0.0
        %v1001 = vand.u32 %v844, 2147483648
        %v1002 = vsel %vm1000, %v1001, %v999
        %v1003 = vrsqrt.pop %v845
        %v1004 = vmul.f32 %v845, %v1003
        %vm1005 = vcmp.eq.f32.partialorder %v845, inf
        %v1006 = vsel %vm1005, %v845, %v1004
        %vm1007 = vcmp.eq.f32.partialorder %v845, 0.0
        %v1008 = vand.u32 %v845, 2147483648
        %v1009 = vsel %vm1007, %v1008, %v1006
        %v1010 = vrsqrt.pop %v846
        %v1011 = vmul.f32 %v846, %v1010
        %vm1012 = vcmp.eq.f32.partialorder %v846, inf
        %v1013 = vsel %vm1012, %v846, %v1011
        %vm1014 = vcmp.eq.f32.partialorder %v846, 0.0
        %v1015 = vand.u32 %v846, 2147483648
        %v1016 = vsel %vm1014, %v1015, %v1013
        %v1017 = vrsqrt.pop %v847
        %v1018 = vmul.f32 %v847, %v1017
        %vm1019 = vcmp.eq.f32.partialorder %v847, inf
        %v1020 = vsel %vm1019, %v847, %v1018
        %vm1021 = vcmp.eq.f32.partialorder %v847, 0.0
        %v1022 = vand.u32 %v847, 2147483648
        %v1023 = vsel %vm1021, %v1022, %v1020
        %v1024 = vrsqrt.pop %v848
        %v1025 = vmul.f32 %v848, %v1024
        %vm1026 = vcmp.eq.f32.partialorder %v848, inf
        %v1027 = vsel %vm1026, %v848, %v1025
        %vm1028 = vcmp.eq.f32.partialorder %v848, 0.0
        %v1029 = vand.u32 %v848, 2147483648
        %v1030 = vsel %vm1028, %v1029, %v1027
        %v1031 = vrsqrt.pop %v849
        %v1032 = vmul.f32 %v849, %v1031
        %vm1033 = vcmp.eq.f32.partialorder %v849, inf
        %v1034 = vsel %vm1033, %v849, %v1032
        %vm1035 = vcmp.eq.f32.partialorder %v849, 0.0
        %v1036 = vand.u32 %v849, 2147483648
        %v1037 = vsel %vm1035, %v1036, %v1034
        %v1038 = vrsqrt.pop %v850
        %v1039 = vmul.f32 %v850, %v1038
        %vm1040 = vcmp.eq.f32.partialorder %v850, inf
        %v1041 = vsel %vm1040, %v850, %v1039
        %vm1042 = vcmp.eq.f32.partialorder %v850, 0.0
        %v1043 = vand.u32 %v850, 2147483648
        %v1044 = vsel %vm1042, %v1043, %v1041
        %v1045 = vrsqrt.pop %v851
        %v1046 = vmul.f32 %v851, %v1045
        %vm1047 = vcmp.eq.f32.partialorder %v851, inf
        %v1048 = vsel %vm1047, %v851, %v1046
        %vm1049 = vcmp.eq.f32.partialorder %v851, 0.0
        %v1050 = vand.u32 %v851, 2147483648
        %v1051 = vsel %vm1049, %v1050, %v1048
        %v1052 = vrsqrt.pop %v852
        %v1053 = vmul.f32 %v852, %v1052
        %vm1054 = vcmp.eq.f32.partialorder %v852, inf
        %v1055 = vsel %vm1054, %v852, %v1053
        %vm1056 = vcmp.eq.f32.partialorder %v852, 0.0
        %v1057 = vand.u32 %v852, 2147483648
        %v1058 = vsel %vm1056, %v1057, %v1055
        %v1059 = vrsqrt.pop %v853
        %v1060 = vmul.f32 %v853, %v1059
        %vm1061 = vcmp.eq.f32.partialorder %v853, inf
        %v1062 = vsel %vm1061, %v853, %v1060
        %vm1063 = vcmp.eq.f32.partialorder %v853, 0.0
        %v1064 = vand.u32 %v853, 2147483648
        %v1065 = vsel %vm1063, %v1064, %v1062
        %v1066 = vrsqrt.pop %v854
        %v1067 = vmul.f32 %v854, %v1066
        %vm1068 = vcmp.eq.f32.partialorder %v854, inf
        %v1069 = vsel %vm1068, %v854, %v1067
        %vm1070 = vcmp.eq.f32.partialorder %v854, 0.0
        %v1071 = vand.u32 %v854, 2147483648
        %v1072 = vsel %vm1070, %v1071, %v1069
        %v1073 = vrsqrt.pop %v855
        %v1074 = vmul.f32 %v855, %v1073
        %vm1075 = vcmp.eq.f32.partialorder %v855, inf
        %v1076 = vsel %vm1075, %v855, %v1074
        %vm1077 = vcmp.eq.f32.partialorder %v855, 0.0
        %v1078 = vand.u32 %v855, 2147483648
        %v1079 = vsel %vm1077, %v1078, %v1076
        %v1080 = vpack.c.bf16 %v869, %v862
        %v1081 = vpack.c.bf16 %v883, %v876
        %v1082 = vpack.c.bf16 %v897, %v890
        %v1083 = vpack.c.bf16 %v911, %v904
        %v1084 = vpack.c.bf16 %v925, %v918
        %v1085 = vpack.c.bf16 %v939, %v932
        %v1086 = vpack.c.bf16 %v953, %v946
        %v1087 = vpack.c.bf16 %v967, %v960
        %v1088 = vpack.c.bf16 %v981, %v974
        %v1089 = vpack.c.bf16 %v995, %v988
        %v1090 = vpack.c.bf16 %v1009, %v1002
        %v1091 = vpack.c.bf16 %v1023, %v1016
        %v1092 = vpack.c.bf16 %v1037, %v1030
        %v1093 = vpack.c.bf16 %v1051, %v1044
        %v1094 = vpack.c.bf16 %v1065, %v1058
        %v1095 = vpack.c.bf16 %v1079, %v1072
        %v1096 = vld [vmem:[%s6] sm:$0xf]
        %v1097 = vld [vmem:[%s6 + $0x4] sm:$0xf]
        %v1098 = vld [vmem:[%s6 + $0x8] sm:$0xf]
        %v1099 = vld [vmem:[%s6 + $0xc] sm:$0xf]
        %v1100 = vld [vmem:[%s6 + $0x10] sm:$0xf]
        %v1101 = vld [vmem:[%s6 + $0x14] sm:$0xf]
        %v1102 = vld [vmem:[%s6 + $0x18] sm:$0xf]
        %v1103 = vld [vmem:[%s6 + $0x1c] sm:$0xf]
        %v1104 = vld [vmem:[%s6 + $0x20] sm:$0xf]
        %v1105 = vld [vmem:[%s6 + $0x24] sm:$0xf]
        %v1106 = vld [vmem:[%s6 + $0x28] sm:$0xf]
        %v1107 = vld [vmem:[%s6 + $0x2c] sm:$0xf]
        %v1108 = vld [vmem:[%s6 + $0x30] sm:$0xf]
        %v1109 = vld [vmem:[%s6 + $0x34] sm:$0xf]
        %v1110 = vld [vmem:[%s6 + $0x38] sm:$0xf]
        %v1111 = vld [vmem:[%s6 + $0x3c] sm:$0xf]
        %v1128 = vunpack.c.l.b16 %v1096
        %v1129 = vunpack.c.l.b16 %v1097
        %v1130 = vunpack.c.l.b16 %v1098
        %v1131 = vunpack.c.l.b16 %v1099
        %v1132 = vunpack.c.l.b16 %v1100
        %v1133 = vunpack.c.l.b16 %v1101
        %v1134 = vunpack.c.l.b16 %v1102
        %v1135 = vunpack.c.l.b16 %v1103
        %v1136 = vunpack.c.l.b16 %v1104
        %v1137 = vunpack.c.l.b16 %v1105
        %v1138 = vunpack.c.l.b16 %v1106
        %v1139 = vunpack.c.l.b16 %v1107
        %v1140 = vunpack.c.l.b16 %v1108
        %v1141 = vunpack.c.l.b16 %v1109
        %v1142 = vunpack.c.l.b16 %v1110
        %v1143 = vunpack.c.l.b16 %v1111
        %v1144 = vpack.c.b16 %v1129, %v1128
        %v1145 = vpack.c.b16 %v1131, %v1130
        %v1146 = vpack.c.b16 %v1133, %v1132
        %v1147 = vpack.c.b16 %v1135, %v1134
        %v1148 = vpack.c.b16 %v1137, %v1136
        %v1149 = vpack.c.b16 %v1139, %v1138
        %v1150 = vpack.c.b16 %v1141, %v1140
        %v1151 = vpack.c.b16 %v1143, %v1142
        %1160 = vmatprep.subr.bf16.mxu0 0
        %1161 = vmatpush1.bf16.msra.mxu0 %v1144
        %1162 = vmatprep.subr.bf16.mxu0 0
        %1163 = vmatpush1.bf16.msra.mxu0 %v1145
        %1164 = vmatprep.subr.bf16.mxu0 0
        %1165 = vmatpush1.bf16.msra.mxu0 %v1146
        %1166 = vmatprep.subr.bf16.mxu0 0
        %1167 = vmatpush1.bf16.msra.mxu0 %v1147
        %1168 = vmatprep.subr.bf16.mxu0 0
        %1169 = vmatpush1.bf16.msra.mxu0 %v1148
        %1170 = vmatprep.subr.bf16.mxu0 0
        %1171 = vmatpush1.bf16.msra.mxu0 %v1149
        %1172 = vmatprep.subr.bf16.mxu0 0
        %1173 = vmatpush1.bf16.msra.mxu0 %v1150
        %1174 = vmatprep.subr.bf16.mxu0 0
        %1175 = vmatpush1.bf16.msra.mxu0 %v1151
        %1176 = vmatprep.subr.bf16.mxu0 0
        %1177 = vmatpush1.bf16.msra.mxu0 0
        %1178 = vmatprep.subr.bf16.mxu0 0
        %1179 = vmatpush1.bf16.msra.mxu0 0
        %1180 = vmatprep.subr.bf16.mxu0 0
        %1181 = vmatpush1.bf16.msra.mxu0 0
        %1182 = vmatprep.subr.bf16.mxu0 0
        %1183 = vmatpush1.bf16.msra.mxu0 0
        %1184 = vmatprep.subr.bf16.mxu0 0
        %1185 = vmatpush1.bf16.msra.mxu0 0
        %1186 = vmatprep.subr.bf16.mxu0 0
        %1187 = vmatpush1.bf16.msra.mxu0 0
        %1188 = vmatprep.subr.bf16.mxu0 0
        %1189 = vmatpush1.bf16.msra.mxu0 0
        %1190 = vmatprep.subr.bf16.mxu0 0
        %1191 = vmatpush1.bf16.msra.mxu0 0
        %1192 = vmatprep.mubr.bf16.mxu0 0
        %1193 = vmatmul.mubr.bf16.gmra.mrb[0].mxu0 %v1080
        %v1194 = vpop.f32.mrb[0].mxu0
        %v1195 = vadd.f32 0.0, %v1194
        %v1196 = vpop.f32.mrb[0].mxu0
        %v1197 = vpop.f32.mrb[0].mxu0
        %v1198 = vadd.f32 0.0, %v1197
        %v1199 = vpop.f32.mrb[0].mxu0
        %1200 = vmatprep.mubr.bf16.mxu0 0
        %1201 = vmatmul.mubr.bf16.gmra.mrb[0].mxu0 %v1081
        %v1202 = vpop.f32.mrb[0].mxu0
        %v1203 = vadd.f32 0.0, %v1202
        %v1204 = vpop.f32.mrb[0].mxu0
        %v1205 = vpop.f32.mrb[0].mxu0
        %v1206 = vadd.f32 0.0, %v1205
        %v1207 = vpop.f32.mrb[0].mxu0
        %1208 = vmatprep.mubr.bf16.mxu0 0
        %1209 = vmatmul.mubr.bf16.gmra.mrb[0].mxu0 %v1082
        %v1210 = vpop.f32.mrb[0].mxu0
        %v1211 = vadd.f32 0.0, %v1210
        %v1212 = vpop.f32.mrb[0].mxu0
        %v1213 = vpop.f32.mrb[0].mxu0
        %v1214 = vadd.f32 0.0, %v1213
        %v1215 = vpop.f32.mrb[0].mxu0
        %1216 = vmatprep.mubr.bf16.mxu0 0
        %1217 = vmatmul.mubr.bf16.gmra.mrb[0].mxu0 %v1083
        %v1218 = vpop.f32.mrb[0].mxu0
        %v1219 = vadd.f32 0.0, %v1218
        %v1220 = vpop.f32.mrb[0].mxu0
        %v1221 = vpop.f32.mrb[0].mxu0
        %v1222 = vadd.f32 0.0, %v1221
        %v1223 = vpop.f32.mrb[0].mxu0
        %1224 = vmatprep.mubr.bf16.mxu0 0
        %1225 = vmatmul.mubr.bf16.gmra.mrb[0].mxu0 %v1084
        %v1226 = vpop.f32.mrb[0].mxu0
        %v1227 = vadd.f32 0.0, %v1226
        %v1228 = vpop.f32.mrb[0].mxu0
        %v1229 = vpop.f32.mrb[0].mxu0
        %v1230 = vadd.f32 0.0, %v1229
        %v1231 = vpop.f32.mrb[0].mxu0
        %1232 = vmatprep.mubr.bf16.mxu0 0
        %1233 = vmatmul.mubr.bf16.gmra.mrb[0].mxu0 %v1085
        %v1234 = vpop.f32.mrb[0].mxu0
        %v1235 = vadd.f32 0.0, %v1234
        %v1236 = vpop.f32.mrb[0].mxu0
        %v1237 = vpop.f32.mrb[0].mxu0
        %v1238 = vadd.f32 0.0, %v1237
        %v1239 = vpop.f32.mrb[0].mxu0
        %1240 = vmatprep.mubr.bf16.mxu0 0
        %1241 = vmatmul.mubr.bf16.gmra.mrb[0].mxu0 %v1086
        %v1242 = vpop.f32.mrb[0].mxu0
        %v1243 = vadd.f32 0.0, %v1242
        %v1244 = vpop.f32.mrb[0].mxu0
        %v1245 = vpop.f32.mrb[0].mxu0
        %v1246 = vadd.f32 0.0, %v1245
        %v1247 = vpop.f32.mrb[0].mxu0
        %1248 = vmatprep.mubr.bf16.mxu0 0
        %1249 = vmatmul.mubr.bf16.gmra.mrb[0].mxu0 %v1087
        %v1250 = vpop.f32.mrb[0].mxu0
        %v1251 = vadd.f32 0.0, %v1250
        %v1252 = vpop.f32.mrb[0].mxu0
        %v1253 = vpop.f32.mrb[0].mxu0
        %v1254 = vadd.f32 0.0, %v1253
        %v1255 = vpop.f32.mrb[0].mxu0
        %1256 = vmatprep.mubr.bf16.mxu0 0
        %1257 = vmatmul.mubr.bf16.gmra.mrb[0].mxu0 %v1088
        %v1258 = vpop.f32.mrb[0].mxu0
        %v1259 = vadd.f32 0.0, %v1258
        %v1260 = vpop.f32.mrb[0].mxu0
        %v1261 = vpop.f32.mrb[0].mxu0
        %v1262 = vadd.f32 0.0, %v1261
        %v1263 = vpop.f32.mrb[0].mxu0
        %1264 = vmatprep.mubr.bf16.mxu0 0
        %1265 = vmatmul.mubr.bf16.gmra.mrb[0].mxu0 %v1089
        %v1266 = vpop.f32.mrb[0].mxu0
        %v1267 = vadd.f32 0.0, %v1266
        %v1268 = vpop.f32.mrb[0].mxu0
        %v1269 = vpop.f32.mrb[0].mxu0
        %v1270 = vadd.f32 0.0, %v1269
        %v1271 = vpop.f32.mrb[0].mxu0
        %1272 = vmatprep.mubr.bf16.mxu0 0
        %1273 = vmatmul.mubr.bf16.gmra.mrb[0].mxu0 %v1090
        %v1274 = vpop.f32.mrb[0].mxu0
        %v1275 = vadd.f32 0.0, %v1274
        %v1276 = vpop.f32.mrb[0].mxu0
        %v1277 = vpop.f32.mrb[0].mxu0
        %v1278 = vadd.f32 0.0, %v1277
        %v1279 = vpop.f32.mrb[0].mxu0
        %1280 = vmatprep.mubr.bf16.mxu0 0
        %1281 = vmatmul.mubr.bf16.gmra.mrb[0].mxu0 %v1091
        %v1282 = vpop.f32.mrb[0].mxu0
        %v1283 = vadd.f32 0.0, %v1282
        %v1284 = vpop.f32.mrb[0].mxu0
        %v1285 = vpop.f32.mrb[0].mxu0
        %v1286 = vadd.f32 0.0, %v1285
        %v1287 = vpop.f32.mrb[0].mxu0
        %1288 = vmatprep.mubr.bf16.mxu0 0
        %1289 = vmatmul.mubr.bf16.gmra.mrb[0].mxu0 %v1092
        %v1290 = vpop.f32.mrb[0].mxu0
        %v1291 = vadd.f32 0.0, %v1290
        %v1292 = vpop.f32.mrb[0].mxu0
        %v1293 = vpop.f32.mrb[0].mxu0
        %v1294 = vadd.f32 0.0, %v1293
        %v1295 = vpop.f32.mrb[0].mxu0
        %1296 = vmatprep.mubr.bf16.mxu0 0
        %1297 = vmatmul.mubr.bf16.gmra.mrb[0].mxu0 %v1093
        %v1298 = vpop.f32.mrb[0].mxu0
        %v1299 = vadd.f32 0.0, %v1298
        %v1300 = vpop.f32.mrb[0].mxu0
        %v1301 = vpop.f32.mrb[0].mxu0
        %v1302 = vadd.f32 0.0, %v1301
        %v1303 = vpop.f32.mrb[0].mxu0
        %1304 = vmatprep.mubr.bf16.mxu0 0
        %1305 = vmatmul.mubr.bf16.gmra.mrb[0].mxu0 %v1094
        %v1306 = vpop.f32.mrb[0].mxu0
        %v1307 = vadd.f32 0.0, %v1306
        %v1308 = vpop.f32.mrb[0].mxu0
        %v1309 = vpop.f32.mrb[0].mxu0
        %v1310 = vadd.f32 0.0, %v1309
        %v1311 = vpop.f32.mrb[0].mxu0
        %1312 = vmatprep.mubr.bf16.mxu0 0
        %1313 = vmatmul.mubr.bf16.gmra.mrb[0].mxu0 %v1095
        %v1314 = vpop.f32.mrb[0].mxu0
        %v1315 = vadd.f32 0.0, %v1314
        %v1316 = vpop.f32.mrb[0].mxu0
        %v1317 = vpop.f32.mrb[0].mxu0
        %v1318 = vadd.f32 0.0, %v1317
        %v1319 = vpop.f32.mrb[0].mxu0
        %1320 = vdwg.mxu0
        %v1321 = vld [vmem:[%s7] sm:$0x1]
        %v1323 = vlaneseq
        %v1324 = vshrl.u32 %v1323, 7
        %v1325 = vsub.s32 0, %v1324
        %v1326 = vrot.slane %v1321, %v1325
        %v1328 = vmul.f32 %v1195, %v1326
        %v1329 = vmul.f32 %v1198, %v1326
        %v1330 = vmul.f32 %v1203, %v1326
        %v1331 = vmul.f32 %v1206, %v1326
        %v1332 = vmul.f32 %v1211, %v1326
        %v1333 = vmul.f32 %v1214, %v1326
        %v1334 = vmul.f32 %v1219, %v1326
        %v1335 = vmul.f32 %v1222, %v1326
        %v1336 = vmul.f32 %v1227, %v1326
        %v1337 = vmul.f32 %v1230, %v1326
        %v1338 = vmul.f32 %v1235, %v1326
        %v1339 = vmul.f32 %v1238, %v1326
        %v1340 = vmul.f32 %v1243, %v1326
        %v1341 = vmul.f32 %v1246, %v1326
        %v1342 = vmul.f32 %v1251, %v1326
        %v1343 = vmul.f32 %v1254, %v1326
        %v1344 = vmul.f32 %v1259, %v1326
        %v1345 = vmul.f32 %v1262, %v1326
        %v1346 = vmul.f32 %v1267, %v1326
        %v1347 = vmul.f32 %v1270, %v1326
        %v1348 = vmul.f32 %v1275, %v1326
        %v1349 = vmul.f32 %v1278, %v1326
        %v1350 = vmul.f32 %v1283, %v1326
        %v1351 = vmul.f32 %v1286, %v1326
        %v1352 = vmul.f32 %v1291, %v1326
        %v1353 = vmul.f32 %v1294, %v1326
        %v1354 = vmul.f32 %v1299, %v1326
        %v1355 = vmul.f32 %v1302, %v1326
        %v1356 = vmul.f32 %v1307, %v1326
        %v1357 = vmul.f32 %v1310, %v1326
        %v1358 = vmul.f32 %v1315, %v1326
        %v1359 = vmul.f32 %v1318, %v1326
        %v1360 = vld [vmem:[%s8] sm:$0x1]
        %v1362 = vlaneseq
        %v1363 = vshrl.u32 %v1362, 7
        %v1364 = vsub.s32 0, %v1363
        %v1365 = vrot.slane %v1360, %v1364
        %v1367 = vadd.f32 %v1328, %v1365
        %v1368 = vadd.f32 %v1329, %v1365
        %v1369 = vadd.f32 %v1330, %v1365
        %v1370 = vadd.f32 %v1331, %v1365
        %v1371 = vadd.f32 %v1332, %v1365
        %v1372 = vadd.f32 %v1333, %v1365
        %v1373 = vadd.f32 %v1334, %v1365
        %v1374 = vadd.f32 %v1335, %v1365
        %v1375 = vadd.f32 %v1336, %v1365
        %v1376 = vadd.f32 %v1337, %v1365
        %v1377 = vadd.f32 %v1338, %v1365
        %v1378 = vadd.f32 %v1339, %v1365
        %v1379 = vadd.f32 %v1340, %v1365
        %v1380 = vadd.f32 %v1341, %v1365
        %v1381 = vadd.f32 %v1342, %v1365
        %v1382 = vadd.f32 %v1343, %v1365
        %v1383 = vadd.f32 %v1344, %v1365
        %v1384 = vadd.f32 %v1345, %v1365
        %v1385 = vadd.f32 %v1346, %v1365
        %v1386 = vadd.f32 %v1347, %v1365
        %v1387 = vadd.f32 %v1348, %v1365
        %v1388 = vadd.f32 %v1349, %v1365
        %v1389 = vadd.f32 %v1350, %v1365
        %v1390 = vadd.f32 %v1351, %v1365
        %v1391 = vadd.f32 %v1352, %v1365
        %v1392 = vadd.f32 %v1353, %v1365
        %v1393 = vadd.f32 %v1354, %v1365
        %v1394 = vadd.f32 %v1355, %v1365
        %v1395 = vadd.f32 %v1356, %v1365
        %v1396 = vadd.f32 %v1357, %v1365
        %v1397 = vadd.f32 %v1358, %v1365
        %v1398 = vadd.f32 %v1359, %v1365
        %v1399 = vmax.f32 %v1367, 0.0
        %v1400 = vmax.f32 %v1368, 0.0
        %v1401 = vmax.f32 %v1369, 0.0
        %v1402 = vmax.f32 %v1370, 0.0
        %v1403 = vmax.f32 %v1371, 0.0
        %v1404 = vmax.f32 %v1372, 0.0
        %v1405 = vmax.f32 %v1373, 0.0
        %v1406 = vmax.f32 %v1374, 0.0
        %v1407 = vmax.f32 %v1375, 0.0
        %v1408 = vmax.f32 %v1376, 0.0
        %v1409 = vmax.f32 %v1377, 0.0
        %v1410 = vmax.f32 %v1378, 0.0
        %v1411 = vmax.f32 %v1379, 0.0
        %v1412 = vmax.f32 %v1380, 0.0
        %v1413 = vmax.f32 %v1381, 0.0
        %v1414 = vmax.f32 %v1382, 0.0
        %v1415 = vmax.f32 %v1383, 0.0
        %v1416 = vmax.f32 %v1384, 0.0
        %v1417 = vmax.f32 %v1385, 0.0
        %v1418 = vmax.f32 %v1386, 0.0
        %v1419 = vmax.f32 %v1387, 0.0
        %v1420 = vmax.f32 %v1388, 0.0
        %v1421 = vmax.f32 %v1389, 0.0
        %v1422 = vmax.f32 %v1390, 0.0
        %v1423 = vmax.f32 %v1391, 0.0
        %v1424 = vmax.f32 %v1392, 0.0
        %v1425 = vmax.f32 %v1393, 0.0
        %v1426 = vmax.f32 %v1394, 0.0
        %v1427 = vmax.f32 %v1395, 0.0
        %v1428 = vmax.f32 %v1396, 0.0
        %v1429 = vmax.f32 %v1397, 0.0
        %v1430 = vmax.f32 %v1398, 0.0
        %v1431 = vld [vmem:[%s9] sm:$0x1]
        %v1433 = vlaneseq
        %v1434 = vshrl.u32 %v1433, 7
        %v1435 = vsub.s32 0, %v1434
        %v1436 = vrot.slane %v1431, %v1435
        %v1438 = vmul.f32 %v1399, %v1436
        %v1439 = vmul.f32 %v1400, %v1436
        %v1440 = vmul.f32 %v1401, %v1436
        %v1441 = vmul.f32 %v1402, %v1436
        %v1442 = vmul.f32 %v1403, %v1436
        %v1443 = vmul.f32 %v1404, %v1436
        %v1444 = vmul.f32 %v1405, %v1436
        %v1445 = vmul.f32 %v1406, %v1436
        %v1446 = vmul.f32 %v1407, %v1436
        %v1447 = vmul.f32 %v1408, %v1436
        %v1448 = vmul.f32 %v1409, %v1436
        %v1449 = vmul.f32 %v1410, %v1436
        %v1450 = vmul.f32 %v1411, %v1436
        %v1451 = vmul.f32 %v1412, %v1436
        %v1452 = vmul.f32 %v1413, %v1436
        %v1453 = vmul.f32 %v1414, %v1436
        %v1454 = vmul.f32 %v1415, %v1436
        %v1455 = vmul.f32 %v1416, %v1436
        %v1456 = vmul.f32 %v1417, %v1436
        %v1457 = vmul.f32 %v1418, %v1436
        %v1458 = vmul.f32 %v1419, %v1436
        %v1459 = vmul.f32 %v1420, %v1436
        %v1460 = vmul.f32 %v1421, %v1436
        %v1461 = vmul.f32 %v1422, %v1436
        %v1462 = vmul.f32 %v1423, %v1436
        %v1463 = vmul.f32 %v1424, %v1436
        %v1464 = vmul.f32 %v1425, %v1436
        %v1465 = vmul.f32 %v1426, %v1436
        %v1466 = vmul.f32 %v1427, %v1436
        %v1467 = vmul.f32 %v1428, %v1436
        %v1468 = vmul.f32 %v1429, %v1436
        %v1469 = vmul.f32 %v1430, %v1436
        %1470 = vadd.xlane.f32.xlu0 %v1438
        %v1471 = vpop.xlane.xlu0 %1470
        %1472 = vadd.xlane.f32.xlu0 %v1439
        %v1473 = vpop.xlane.xlu0 %1472
        %1474 = vadd.xlane.f32.xlu0 %v1440
        %v1475 = vpop.xlane.xlu0 %1474
        %1476 = vadd.xlane.f32.xlu0 %v1441
        %v1477 = vpop.xlane.xlu0 %1476
        %1478 = vadd.xlane.f32.xlu0 %v1442
        %v1479 = vpop.xlane.xlu0 %1478
        %1480 = vadd.xlane.f32.xlu0 %v1443
        %v1481 = vpop.xlane.xlu0 %1480
        %1482 = vadd.xlane.f32.xlu0 %v1444
        %v1483 = vpop.xlane.xlu0 %1482
        %1484 = vadd.xlane.f32.xlu0 %v1445
        %v1485 = vpop.xlane.xlu0 %1484
        %1486 = vadd.xlane.f32.xlu0 %v1446
        %v1487 = vpop.xlane.xlu0 %1486
        %1488 = vadd.xlane.f32.xlu0 %v1447
        %v1489 = vpop.xlane.xlu0 %1488
        %1490 = vadd.xlane.f32.xlu0 %v1448
        %v1491 = vpop.xlane.xlu0 %1490
        %1492 = vadd.xlane.f32.xlu0 %v1449
        %v1493 = vpop.xlane.xlu0 %1492
        %1494 = vadd.xlane.f32.xlu0 %v1450
        %v1495 = vpop.xlane.xlu0 %1494
        %1496 = vadd.xlane.f32.xlu0 %v1451
        %v1497 = vpop.xlane.xlu0 %1496
        %1498 = vadd.xlane.f32.xlu0 %v1452
        %v1499 = vpop.xlane.xlu0 %1498
        %1500 = vadd.xlane.f32.xlu0 %v1453
        %v1501 = vpop.xlane.xlu0 %1500
        %1502 = vadd.xlane.f32.xlu0 %v1454
        %v1503 = vpop.xlane.xlu0 %1502
        %1504 = vadd.xlane.f32.xlu0 %v1455
        %v1505 = vpop.xlane.xlu0 %1504
        %1506 = vadd.xlane.f32.xlu0 %v1456
        %v1507 = vpop.xlane.xlu0 %1506
        %1508 = vadd.xlane.f32.xlu0 %v1457
        %v1509 = vpop.xlane.xlu0 %1508
        %1510 = vadd.xlane.f32.xlu0 %v1458
        %v1511 = vpop.xlane.xlu0 %1510
        %1512 = vadd.xlane.f32.xlu0 %v1459
        %v1513 = vpop.xlane.xlu0 %1512
        %1514 = vadd.xlane.f32.xlu0 %v1460
        %v1515 = vpop.xlane.xlu0 %1514
        %1516 = vadd.xlane.f32.xlu0 %v1461
        %v1517 = vpop.xlane.xlu0 %1516
        %1518 = vadd.xlane.f32.xlu0 %v1462
        %v1519 = vpop.xlane.xlu0 %1518
        %1520 = vadd.xlane.f32.xlu0 %v1463
        %v1521 = vpop.xlane.xlu0 %1520
        %1522 = vadd.xlane.f32.xlu0 %v1464
        %v1523 = vpop.xlane.xlu0 %1522
        %1524 = vadd.xlane.f32.xlu0 %v1465
        %v1525 = vpop.xlane.xlu0 %1524
        %1526 = vadd.xlane.f32.xlu0 %v1466
        %v1527 = vpop.xlane.xlu0 %1526
        %1528 = vadd.xlane.f32.xlu0 %v1467
        %v1529 = vpop.xlane.xlu0 %1528
        %1530 = vadd.xlane.f32.xlu0 %v1468
        %v1531 = vpop.xlane.xlu0 %1530
        %1532 = vadd.xlane.f32.xlu0 %v1469
        %v1533 = vpop.xlane.xlu0 %1532
        %s1534 = sld [smem:[#allocation2]]
        %v1535 = vstv %s1534
        %v1536 = vadd.f32 %v1471, %v1535
        %v1537 = vadd.f32 %v1473, %v1535
        %v1538 = vadd.f32 %v1475, %v1535
        %v1539 = vadd.f32 %v1477, %v1535
        %v1540 = vadd.f32 %v1479, %v1535
        %v1541 = vadd.f32 %v1481, %v1535
        %v1542 = vadd.f32 %v1483, %v1535
        %v1543 = vadd.f32 %v1485, %v1535
        %v1544 = vadd.f32 %v1487, %v1535
        %v1545 = vadd.f32 %v1489, %v1535
        %v1546 = vadd.f32 %v1491, %v1535
        %v1547 = vadd.f32 %v1493, %v1535
        %v1548 = vadd.f32 %v1495, %v1535
        %v1549 = vadd.f32 %v1497, %v1535
        %v1550 = vadd.f32 %v1499, %v1535
        %v1551 = vadd.f32 %v1501, %v1535
        %v1552 = vadd.f32 %v1503, %v1535
        %v1553 = vadd.f32 %v1505, %v1535
        %v1554 = vadd.f32 %v1507, %v1535
        %v1555 = vadd.f32 %v1509, %v1535
        %v1556 = vadd.f32 %v1511, %v1535
        %v1557 = vadd.f32 %v1513, %v1535
        %v1558 = vadd.f32 %v1515, %v1535
        %v1559 = vadd.f32 %v1517, %v1535
        %v1560 = vadd.f32 %v1519, %v1535
        %v1561 = vadd.f32 %v1521, %v1535
        %v1562 = vadd.f32 %v1523, %v1535
        %v1563 = vadd.f32 %v1525, %v1535
        %v1564 = vadd.f32 %v1527, %v1535
        %v1565 = vadd.f32 %v1529, %v1535
        %v1566 = vadd.f32 %v1531, %v1535
        %v1567 = vadd.f32 %v1533, %v1535
        %v1568 = vxor.u32 %v1536, 2147483648
        %v1569 = vxor.u32 %v1537, 2147483648
        %v1570 = vxor.u32 %v1538, 2147483648
        %v1571 = vxor.u32 %v1539, 2147483648
        %v1572 = vxor.u32 %v1540, 2147483648
        %v1573 = vxor.u32 %v1541, 2147483648
        %v1574 = vxor.u32 %v1542, 2147483648
        %v1575 = vxor.u32 %v1543, 2147483648
        %v1576 = vxor.u32 %v1544, 2147483648
        %v1577 = vxor.u32 %v1545, 2147483648
        %v1578 = vxor.u32 %v1546, 2147483648
        %v1579 = vxor.u32 %v1547, 2147483648
        %v1580 = vxor.u32 %v1548, 2147483648
        %v1581 = vxor.u32 %v1549, 2147483648
        %v1582 = vxor.u32 %v1550, 2147483648
        %v1583 = vxor.u32 %v1551, 2147483648
        %v1584 = vxor.u32 %v1552, 2147483648
        %v1585 = vxor.u32 %v1553, 2147483648
        %v1586 = vxor.u32 %v1554, 2147483648
        %v1587 = vxor.u32 %v1555, 2147483648
        %v1588 = vxor.u32 %v1556, 2147483648
        %v1589 = vxor.u32 %v1557, 2147483648
        %v1590 = vxor.u32 %v1558, 2147483648
        %v1591 = vxor.u32 %v1559, 2147483648
        %v1592 = vxor.u32 %v1560, 2147483648
        %v1593 = vxor.u32 %v1561, 2147483648
        %v1594 = vxor.u32 %v1562, 2147483648
        %v1595 = vxor.u32 %v1563, 2147483648
        %v1596 = vxor.u32 %v1564, 2147483648
        %v1597 = vxor.u32 %v1565, 2147483648
        %v1598 = vxor.u32 %v1566, 2147483648
        %v1599 = vxor.u32 %v1567, 2147483648
        %v1600 = vmul.f32 %v1568, 1.442695
        %v1601 = vpow.pop %v1600
        %v1602 = vmul.f32 %v1569, 1.442695
        %v1603 = vpow.pop %v1602
        %v1604 = vmul.f32 %v1570, 1.442695
        %v1605 = vpow.pop %v1604
        %v1606 = vmul.f32 %v1571, 1.442695
        %v1607 = vpow.pop %v1606
        %v1608 = vmul.f32 %v1572, 1.442695
        %v1609 = vpow.pop %v1608
        %v1610 = vmul.f32 %v1573, 1.442695
        %v1611 = vpow.pop %v1610
        %v1612 = vmul.f32 %v1574, 1.442695
        %v1613 = vpow.pop %v1612
        %v1614 = vmul.f32 %v1575, 1.442695
        %v1615 = vpow.pop %v1614
        %v1616 = vmul.f32 %v1576, 1.442695
        %v1617 = vpow.pop %v1616
        %v1618 = vmul.f32 %v1577, 1.442695
        %v1619 = vpow.pop %v1618
        %v1620 = vmul.f32 %v1578, 1.442695
        %v1621 = vpow.pop %v1620
        %v1622 = vmul.f32 %v1579, 1.442695
        %v1623 = vpow.pop %v1622
        %v1624 = vmul.f32 %v1580, 1.442695
        %v1625 = vpow.pop %v1624
        %v1626 = vmul.f32 %v1581, 1.442695
        %v1627 = vpow.pop %v1626
        %v1628 = vmul.f32 %v1582, 1.442695
        %v1629 = vpow.pop %v1628
        %v1630 = vmul.f32 %v1583, 1.442695
        %v1631 = vpow.pop %v1630
        %v1632 = vmul.f32 %v1584, 1.442695
        %v1633 = vpow.pop %v1632
        %v1634 = vmul.f32 %v1585, 1.442695
        %v1635 = vpow.pop %v1634
        %v1636 = vmul.f32 %v1586, 1.442695
        %v1637 = vpow.pop %v1636
        %v1638 = vmul.f32 %v1587, 1.442695
        %v1639 = vpow.pop %v1638
        %v1640 = vmul.f32 %v1588, 1.442695
        %v1641 = vpow.pop %v1640
        %v1642 = vmul.f32 %v1589, 1.442695
        %v1643 = vpow.pop %v1642
        %v1644 = vmul.f32 %v1590, 1.442695
        %v1645 = vpow.pop %v1644
        %v1646 = vmul.f32 %v1591, 1.442695
        %v1647 = vpow.pop %v1646
        %v1648 = vmul.f32 %v1592, 1.442695
        %v1649 = vpow.pop %v1648
        %v1650 = vmul.f32 %v1593, 1.442695
        %v1651 = vpow.pop %v1650
        %v1652 = vmul.f32 %v1594, 1.442695
        %v1653 = vpow.pop %v1652
        %v1654 = vmul.f32 %v1595, 1.442695
        %v1655 = vpow.pop %v1654
        %v1656 = vmul.f32 %v1596, 1.442695
        %v1657 = vpow.pop %v1656
        %v1658 = vmul.f32 %v1597, 1.442695
        %v1659 = vpow.pop %v1658
        %v1660 = vmul.f32 %v1598, 1.442695
        %v1661 = vpow.pop %v1660
        %v1662 = vmul.f32 %v1599, 1.442695
        %v1663 = vpow.pop %v1662
        %v1664 = vadd.f32 %v1601, 1.0
        %v1665 = vadd.f32 %v1603, 1.0
        %v1666 = vadd.f32 %v1605, 1.0
        %v1667 = vadd.f32 %v1607, 1.0
        %v1668 = vadd.f32 %v1609, 1.0
        %v1669 = vadd.f32 %v1611, 1.0
        %v1670 = vadd.f32 %v1613, 1.0
        %v1671 = vadd.f32 %v1615, 1.0
        %v1672 = vadd.f32 %v1617, 1.0
        %v1673 = vadd.f32 %v1619, 1.0
        %v1674 = vadd.f32 %v1621, 1.0
        %v1675 = vadd.f32 %v1623, 1.0
        %v1676 = vadd.f32 %v1625, 1.0
        %v1677 = vadd.f32 %v1627, 1.0
        %v1678 = vadd.f32 %v1629, 1.0
        %v1679 = vadd.f32 %v1631, 1.0
        %v1680 = vadd.f32 %v1633, 1.0
        %v1681 = vadd.f32 %v1635, 1.0
        %v1682 = vadd.f32 %v1637, 1.0
        %v1683 = vadd.f32 %v1639, 1.0
        %v1684 = vadd.f32 %v1641, 1.0
        %v1685 = vadd.f32 %v1643, 1.0
        %v1686 = vadd.f32 %v1645, 1.0
        %v1687 = vadd.f32 %v1647, 1.0
        %v1688 = vadd.f32 %v1649, 1.0
        %v1689 = vadd.f32 %v1651, 1.0
        %v1690 = vadd.f32 %v1653, 1.0
        %v1691 = vadd.f32 %v1655, 1.0
        %v1692 = vadd.f32 %v1657, 1.0
        %v1693 = vadd.f32 %v1659, 1.0
        %v1694 = vadd.f32 %v1661, 1.0
        %v1695 = vadd.f32 %v1663, 1.0
        %v1696 = vrcp.pop %v1664
        %v1697 = vmul.f32 1.0, %v1696
        %v1698 = vrcp.pop %v1665
        %v1699 = vmul.f32 1.0, %v1698
        %v1700 = vrcp.pop %v1666
        %v1701 = vmul.f32 1.0, %v1700
        %v1702 = vrcp.pop %v1667
        %v1703 = vmul.f32 1.0, %v1702
        %v1704 = vrcp.pop %v1668
        %v1705 = vmul.f32 1.0, %v1704
        %v1706 = vrcp.pop %v1669
        %v1707 = vmul.f32 1.0, %v1706
        %v1708 = vrcp.pop %v1670
        %v1709 = vmul.f32 1.0, %v1708
        %v1710 = vrcp.pop %v1671
        %v1711 = vmul.f32 1.0, %v1710
        %v1712 = vrcp.pop %v1672
        %v1713 = vmul.f32 1.0, %v1712
        %v1714 = vrcp.pop %v1673
        %v1715 = vmul.f32 1.0, %v1714
        %v1716 = vrcp.pop %v1674
        %v1717 = vmul.f32 1.0, %v1716
        %v1718 = vrcp.pop %v1675
        %v1719 = vmul.f32 1.0, %v1718
        %v1720 = vrcp.pop %v1676
        %v1721 = vmul.f32 1.0, %v1720
        %v1722 = vrcp.pop %v1677
        %v1723 = vmul.f32 1.0, %v1722
        %v1724 = vrcp.pop %v1678
        %v1725 = vmul.f32 1.0, %v1724
        %v1726 = vrcp.pop %v1679
        %v1727 = vmul.f32 1.0, %v1726
        %v1728 = vrcp.pop %v1680
        %v1729 = vmul.f32 1.0, %v1728
        %v1730 = vrcp.pop %v1681
        %v1731 = vmul.f32 1.0, %v1730
        %v1732 = vrcp.pop %v1682
        %v1733 = vmul.f32 1.0, %v1732
        %v1734 = vrcp.pop %v1683
        %v1735 = vmul.f32 1.0, %v1734
        %v1736 = vrcp.pop %v1684
        %v1737 = vmul.f32 1.0, %v1736
        %v1738 = vrcp.pop %v1685
        %v1739 = vmul.f32 1.0, %v1738
        %v1740 = vrcp.pop %v1686
        %v1741 = vmul.f32 1.0, %v1740
        %v1742 = vrcp.pop %v1687
        %v1743 = vmul.f32 1.0, %v1742
        %v1744 = vrcp.pop %v1688
        %v1745 = vmul.f32 1.0, %v1744
        %v1746 = vrcp.pop %v1689
        %v1747 = vmul.f32 1.0, %v1746
        %v1748 = vrcp.pop %v1690
        %v1749 = vmul.f32 1.0, %v1748
        %v1750 = vrcp.pop %v1691
        %v1751 = vmul.f32 1.0, %v1750
        %v1752 = vrcp.pop %v1692
        %v1753 = vmul.f32 1.0, %v1752
        %v1754 = vrcp.pop %v1693
        %v1755 = vmul.f32 1.0, %v1754
        %v1756 = vrcp.pop %v1694
        %v1757 = vmul.f32 1.0, %v1756
        %v1758 = vrcp.pop %v1695
        %v1759 = vmul.f32 1.0, %v1758
        %v1760 = vld [vmem:[%s452] sm:$0x3]
        %vm1761 = vcmp.ne.f32.partialorder %v1760, 0.0
        %v1794 = vlaneseq
        %v1795 = vshrl.u32 %v1794, 7
        %v1796 = vsub.s32 0, %v1795
        %v1797 = vrot.slane %v1697, %v1796
        %v1798 = vlaneseq
        %v1799 = vshrl.u32 %v1798, 7
        %v1800 = vsub.s32 1, %v1799
        %v1801 = vrot.slane %v1697, %v1800
        %v1802 = vlaneseq
        %v1803 = vshrl.u32 %v1802, 7
        %v1804 = vsub.s32 2, %v1803
        %v1805 = vrot.slane %v1697, %v1804
        %v1806 = vlaneseq
        %v1807 = vshrl.u32 %v1806, 7
        %v1808 = vsub.s32 3, %v1807
        %v1809 = vrot.slane %v1697, %v1808
        %v1810 = vlaneseq
        %v1811 = vshrl.u32 %v1810, 7
        %v1812 = vsub.s32 4, %v1811
        %v1813 = vrot.slane %v1697, %v1812
        %v1814 = vlaneseq
        %v1815 = vshrl.u32 %v1814, 7
        %v1816 = vsub.s32 5, %v1815
        %v1817 = vrot.slane %v1697, %v1816
        %v1818 = vlaneseq
        %v1819 = vshrl.u32 %v1818, 7
        %v1820 = vsub.s32 6, %v1819
        %v1821 = vrot.slane %v1697, %v1820
        %v1822 = vlaneseq
        %v1823 = vshrl.u32 %v1822, 7
        %v1824 = vsub.s32 7, %v1823
        %v1825 = vrot.slane %v1697, %v1824
        %v1826 = vlaneseq
        %v1827 = vshrl.u32 %v1826, 7
        %v1828 = vsub.s32 0, %v1827
        %v1829 = vrot.slane %v1699, %v1828
        %v1830 = vlaneseq
        %v1831 = vshrl.u32 %v1830, 7
        %v1832 = vsub.s32 1, %v1831
        %v1833 = vrot.slane %v1699, %v1832
        %v1834 = vlaneseq
        %v1835 = vshrl.u32 %v1834, 7
        %v1836 = vsub.s32 2, %v1835
        %v1837 = vrot.slane %v1699, %v1836
        %v1838 = vlaneseq
        %v1839 = vshrl.u32 %v1838, 7
        %v1840 = vsub.s32 3, %v1839
        %v1841 = vrot.slane %v1699, %v1840
        %v1842 = vlaneseq
        %v1843 = vshrl.u32 %v1842, 7
        %v1844 = vsub.s32 4, %v1843
        %v1845 = vrot.slane %v1699, %v1844
        %v1846 = vlaneseq
        %v1847 = vshrl.u32 %v1846, 7
        %v1848 = vsub.s32 5, %v1847
        %v1849 = vrot.slane %v1699, %v1848
        %v1850 = vlaneseq
        %v1851 = vshrl.u32 %v1850, 7
        %v1852 = vsub.s32 6, %v1851
        %v1853 = vrot.slane %v1699, %v1852
        %v1854 = vlaneseq
        %v1855 = vshrl.u32 %v1854, 7
        %v1856 = vsub.s32 7, %v1855
        %v1857 = vrot.slane %v1699, %v1856
        %v1858 = vlaneseq
        %v1859 = vshrl.u32 %v1858, 7
        %v1860 = vsub.s32 0, %v1859
        %v1861 = vrot.slane %v1701, %v1860
        %v1862 = vlaneseq
        %v1863 = vshrl.u32 %v1862, 7
        %v1864 = vsub.s32 1, %v1863
        %v1865 = vrot.slane %v1701, %v1864
        %v1866 = vlaneseq
        %v1867 = vshrl.u32 %v1866, 7
        %v1868 = vsub.s32 2, %v1867
        %v1869 = vrot.slane %v1701, %v1868
        %v1870 = vlaneseq
        %v1871 = vshrl.u32 %v1870, 7
        %v1872 = vsub.s32 3, %v1871
        %v1873 = vrot.slane %v1701, %v1872
        %v1874 = vlaneseq
        %v1875 = vshrl.u32 %v1874, 7
        %v1876 = vsub.s32 4, %v1875
        %v1877 = vrot.slane %v1701, %v1876
        %v1878 = vlaneseq
        %v1879 = vshrl.u32 %v1878, 7
        %v1880 = vsub.s32 5, %v1879
        %v1881 = vrot.slane %v1701, %v1880
        %v1882 = vlaneseq
        %v1883 = vshrl.u32 %v1882, 7
        %v1884 = vsub.s32 6, %v1883
        %v1885 = vrot.slane %v1701, %v1884
        %v1886 = vlaneseq
        %v1887 = vshrl.u32 %v1886, 7
        %v1888 = vsub.s32 7, %v1887
        %v1889 = vrot.slane %v1701, %v1888
        %v1890 = vlaneseq
        %v1891 = vshrl.u32 %v1890, 7
        %v1892 = vsub.s32 0, %v1891
        %v1893 = vrot.slane %v1703, %v1892
        %v1894 = vlaneseq
        %v1895 = vshrl.u32 %v1894, 7
        %v1896 = vsub.s32 1, %v1895
        %v1897 = vrot.slane %v1703, %v1896
        %v1898 = vlaneseq
        %v1899 = vshrl.u32 %v1898, 7
        %v1900 = vsub.s32 2, %v1899
        %v1901 = vrot.slane %v1703, %v1900
        %v1902 = vlaneseq
        %v1903 = vshrl.u32 %v1902, 7
        %v1904 = vsub.s32 3, %v1903
        %v1905 = vrot.slane %v1703, %v1904
        %v1906 = vlaneseq
        %v1907 = vshrl.u32 %v1906, 7
        %v1908 = vsub.s32 4, %v1907
        %v1909 = vrot.slane %v1703, %v1908
        %v1910 = vlaneseq
        %v1911 = vshrl.u32 %v1910, 7
        %v1912 = vsub.s32 5, %v1911
        %v1913 = vrot.slane %v1703, %v1912
        %v1914 = vlaneseq
        %v1915 = vshrl.u32 %v1914, 7
        %v1916 = vsub.s32 6, %v1915
        %v1917 = vrot.slane %v1703, %v1916
        %v1918 = vlaneseq
        %v1919 = vshrl.u32 %v1918, 7
        %v1920 = vsub.s32 7, %v1919
        %v1921 = vrot.slane %v1703, %v1920
        %v1922 = vlaneseq
        %v1923 = vshrl.u32 %v1922, 7
        %v1924 = vsub.s32 0, %v1923
        %v1925 = vrot.slane %v1705, %v1924
        %v1926 = vlaneseq
        %v1927 = vshrl.u32 %v1926, 7
        %v1928 = vsub.s32 1, %v1927
        %v1929 = vrot.slane %v1705, %v1928
        %v1930 = vlaneseq
        %v1931 = vshrl.u32 %v1930, 7
        %v1932 = vsub.s32 2, %v1931
        %v1933 = vrot.slane %v1705, %v1932
        %v1934 = vlaneseq
        %v1935 = vshrl.u32 %v1934, 7
        %v1936 = vsub.s32 3, %v1935
        %v1937 = vrot.slane %v1705, %v1936
        %v1938 = vlaneseq
        %v1939 = vshrl.u32 %v1938, 7
        %v1940 = vsub.s32 4, %v1939
        %v1941 = vrot.slane %v1705, %v1940
        %v1942 = vlaneseq
        %v1943 = vshrl.u32 %v1942, 7
        %v1944 = vsub.s32 5, %v1943
        %v1945 = vrot.slane %v1705, %v1944
        %v1946 = vlaneseq
        %v1947 = vshrl.u32 %v1946, 7
        %v1948 = vsub.s32 6, %v1947
        %v1949 = vrot.slane %v1705, %v1948
        %v1950 = vlaneseq
        %v1951 = vshrl.u32 %v1950, 7
        %v1952 = vsub.s32 7, %v1951
        %v1953 = vrot.slane %v1705, %v1952
        %v1954 = vlaneseq
        %v1955 = vshrl.u32 %v1954, 7
        %v1956 = vsub.s32 0, %v1955
        %v1957 = vrot.slane %v1707, %v1956
        %v1958 = vlaneseq
        %v1959 = vshrl.u32 %v1958, 7
        %v1960 = vsub.s32 1, %v1959
        %v1961 = vrot.slane %v1707, %v1960
        %v1962 = vlaneseq
        %v1963 = vshrl.u32 %v1962, 7
        %v1964 = vsub.s32 2, %v1963
        %v1965 = vrot.slane %v1707, %v1964
        %v1966 = vlaneseq
        %v1967 = vshrl.u32 %v1966, 7
        %v1968 = vsub.s32 3, %v1967
        %v1969 = vrot.slane %v1707, %v1968
        %v1970 = vlaneseq
        %v1971 = vshrl.u32 %v1970, 7
        %v1972 = vsub.s32 4, %v1971
        %v1973 = vrot.slane %v1707, %v1972
        %v1974 = vlaneseq
        %v1975 = vshrl.u32 %v1974, 7
        %v1976 = vsub.s32 5, %v1975
        %v1977 = vrot.slane %v1707, %v1976
        %v1978 = vlaneseq
        %v1979 = vshrl.u32 %v1978, 7
        %v1980 = vsub.s32 6, %v1979
        %v1981 = vrot.slane %v1707, %v1980
        %v1982 = vlaneseq
        %v1983 = vshrl.u32 %v1982, 7
        %v1984 = vsub.s32 7, %v1983
        %v1985 = vrot.slane %v1707, %v1984
        %v1986 = vlaneseq
        %v1987 = vshrl.u32 %v1986, 7
        %v1988 = vsub.s32 0, %v1987
        %v1989 = vrot.slane %v1709, %v1988
        %v1990 = vlaneseq
        %v1991 = vshrl.u32 %v1990, 7
        %v1992 = vsub.s32 1, %v1991
        %v1993 = vrot.slane %v1709, %v1992
        %v1994 = vlaneseq
        %v1995 = vshrl.u32 %v1994, 7
        %v1996 = vsub.s32 2, %v1995
        %v1997 = vrot.slane %v1709, %v1996
        %v1998 = vlaneseq
        %v1999 = vshrl.u32 %v1998, 7
        %v2000 = vsub.s32 3, %v1999
        %v2001 = vrot.slane %v1709, %v2000
        %v2002 = vlaneseq
        %v2003 = vshrl.u32 %v2002, 7
        %v2004 = vsub.s32 4, %v2003
        %v2005 = vrot.slane %v1709, %v2004
        %v2006 = vlaneseq
        %v2007 = vshrl.u32 %v2006, 7
        %v2008 = vsub.s32 5, %v2007
        %v2009 = vrot.slane %v1709, %v2008
        %v2010 = vlaneseq
        %v2011 = vshrl.u32 %v2010, 7
        %v2012 = vsub.s32 6, %v2011
        %v2013 = vrot.slane %v1709, %v2012
        %v2014 = vlaneseq
        %v2015 = vshrl.u32 %v2014, 7
        %v2016 = vsub.s32 7, %v2015
        %v2017 = vrot.slane %v1709, %v2016
        %v2018 = vlaneseq
        %v2019 = vshrl.u32 %v2018, 7
        %v2020 = vsub.s32 0, %v2019
        %v2021 = vrot.slane %v1711, %v2020
        %v2022 = vlaneseq
        %v2023 = vshrl.u32 %v2022, 7
        %v2024 = vsub.s32 1, %v2023
        %v2025 = vrot.slane %v1711, %v2024
        %v2026 = vlaneseq
        %v2027 = vshrl.u32 %v2026, 7
        %v2028 = vsub.s32 2, %v2027
        %v2029 = vrot.slane %v1711, %v2028
        %v2030 = vlaneseq
        %v2031 = vshrl.u32 %v2030, 7
        %v2032 = vsub.s32 3, %v2031
        %v2033 = vrot.slane %v1711, %v2032
        %v2034 = vlaneseq
        %v2035 = vshrl.u32 %v2034, 7
        %v2036 = vsub.s32 4, %v2035
        %v2037 = vrot.slane %v1711, %v2036
        %v2038 = vlaneseq
        %v2039 = vshrl.u32 %v2038, 7
        %v2040 = vsub.s32 5, %v2039
        %v2041 = vrot.slane %v1711, %v2040
        %v2042 = vlaneseq
        %v2043 = vshrl.u32 %v2042, 7
        %v2044 = vsub.s32 6, %v2043
        %v2045 = vrot.slane %v1711, %v2044
        %v2046 = vlaneseq
        %v2047 = vshrl.u32 %v2046, 7
        %v2048 = vsub.s32 7, %v2047
        %v2049 = vrot.slane %v1711, %v2048
        %v2050 = vlaneseq
        %v2051 = vshrl.u32 %v2050, 7
        %v2052 = vsub.s32 0, %v2051
        %v2053 = vrot.slane %v1713, %v2052
        %v2054 = vlaneseq
        %v2055 = vshrl.u32 %v2054, 7
        %v2056 = vsub.s32 1, %v2055
        %v2057 = vrot.slane %v1713, %v2056
        %v2058 = vlaneseq
        %v2059 = vshrl.u32 %v2058, 7
        %v2060 = vsub.s32 2, %v2059
        %v2061 = vrot.slane %v1713, %v2060
        %v2062 = vlaneseq
        %v2063 = vshrl.u32 %v2062, 7
        %v2064 = vsub.s32 3, %v2063
        %v2065 = vrot.slane %v1713, %v2064
        %v2066 = vlaneseq
        %v2067 = vshrl.u32 %v2066, 7
        %v2068 = vsub.s32 4, %v2067
        %v2069 = vrot.slane %v1713, %v2068
        %v2070 = vlaneseq
        %v2071 = vshrl.u32 %v2070, 7
        %v2072 = vsub.s32 5, %v2071
        %v2073 = vrot.slane %v1713, %v2072
        %v2074 = vlaneseq
        %v2075 = vshrl.u32 %v2074, 7
        %v2076 = vsub.s32 6, %v2075
        %v2077 = vrot.slane %v1713, %v2076
        %v2078 = vlaneseq
        %v2079 = vshrl.u32 %v2078, 7
        %v2080 = vsub.s32 7, %v2079
        %v2081 = vrot.slane %v1713, %v2080
        %v2082 = vlaneseq
        %v2083 = vshrl.u32 %v2082, 7
        %v2084 = vsub.s32 0, %v2083
        %v2085 = vrot.slane %v1715, %v2084
        %v2086 = vlaneseq
        %v2087 = vshrl.u32 %v2086, 7
        %v2088 = vsub.s32 1, %v2087
        %v2089 = vrot.slane %v1715, %v2088
        %v2090 = vlaneseq
        %v2091 = vshrl.u32 %v2090, 7
        %v2092 = vsub.s32 2, %v2091
        %v2093 = vrot.slane %v1715, %v2092
        %v2094 = vlaneseq
        %v2095 = vshrl.u32 %v2094, 7
        %v2096 = vsub.s32 3, %v2095
        %v2097 = vrot.slane %v1715, %v2096
        %v2098 = vlaneseq
        %v2099 = vshrl.u32 %v2098, 7
        %v2100 = vsub.s32 4, %v2099
        %v2101 = vrot.slane %v1715, %v2100
        %v2102 = vlaneseq
        %v2103 = vshrl.u32 %v2102, 7
        %v2104 = vsub.s32 5, %v2103
        %v2105 = vrot.slane %v1715, %v2104
        %v2106 = vlaneseq
        %v2107 = vshrl.u32 %v2106, 7
        %v2108 = vsub.s32 6, %v2107
        %v2109 = vrot.slane %v1715, %v2108
        %v2110 = vlaneseq
        %v2111 = vshrl.u32 %v2110, 7
        %v2112 = vsub.s32 7, %v2111
        %v2113 = vrot.slane %v1715, %v2112
        %v2114 = vlaneseq
        %v2115 = vshrl.u32 %v2114, 7
        %v2116 = vsub.s32 0, %v2115
        %v2117 = vrot.slane %v1717, %v2116
        %v2118 = vlaneseq
        %v2119 = vshrl.u32 %v2118, 7
        %v2120 = vsub.s32 1, %v2119
        %v2121 = vrot.slane %v1717, %v2120
        %v2122 = vlaneseq
        %v2123 = vshrl.u32 %v2122, 7
        %v2124 = vsub.s32 2, %v2123
        %v2125 = vrot.slane %v1717, %v2124
        %v2126 = vlaneseq
        %v2127 = vshrl.u32 %v2126, 7
        %v2128 = vsub.s32 3, %v2127
        %v2129 = vrot.slane %v1717, %v2128
        %v2130 = vlaneseq
        %v2131 = vshrl.u32 %v2130, 7
        %v2132 = vsub.s32 4, %v2131
        %v2133 = vrot.slane %v1717, %v2132
        %v2134 = vlaneseq
        %v2135 = vshrl.u32 %v2134, 7
        %v2136 = vsub.s32 5, %v2135
        %v2137 = vrot.slane %v1717, %v2136
        %v2138 = vlaneseq
        %v2139 = vshrl.u32 %v2138, 7
        %v2140 = vsub.s32 6, %v2139
        %v2141 = vrot.slane %v1717, %v2140
        %v2142 = vlaneseq
        %v2143 = vshrl.u32 %v2142, 7
        %v2144 = vsub.s32 7, %v2143
        %v2145 = vrot.slane %v1717, %v2144
        %v2146 = vlaneseq
        %v2147 = vshrl.u32 %v2146, 7
        %v2148 = vsub.s32 0, %v2147
        %v2149 = vrot.slane %v1719, %v2148
        %v2150 = vlaneseq
        %v2151 = vshrl.u32 %v2150, 7
        %v2152 = vsub.s32 1, %v2151
        %v2153 = vrot.slane %v1719, %v2152
        %v2154 = vlaneseq
        %v2155 = vshrl.u32 %v2154, 7
        %v2156 = vsub.s32 2, %v2155
        %v2157 = vrot.slane %v1719, %v2156
        %v2158 = vlaneseq
        %v2159 = vshrl.u32 %v2158, 7
        %v2160 = vsub.s32 3, %v2159
        %v2161 = vrot.slane %v1719, %v2160
        %v2162 = vlaneseq
        %v2163 = vshrl.u32 %v2162, 7
        %v2164 = vsub.s32 4, %v2163
        %v2165 = vrot.slane %v1719, %v2164
        %v2166 = vlaneseq
        %v2167 = vshrl.u32 %v2166, 7
        %v2168 = vsub.s32 5, %v2167
        %v2169 = vrot.slane %v1719, %v2168
        %v2170 = vlaneseq
        %v2171 = vshrl.u32 %v2170, 7
        %v2172 = vsub.s32 6, %v2171
        %v2173 = vrot.slane %v1719, %v2172
        %v2174 = vlaneseq
        %v2175 = vshrl.u32 %v2174, 7
        %v2176 = vsub.s32 7, %v2175
        %v2177 = vrot.slane %v1719, %v2176
        %v2178 = vlaneseq
        %v2179 = vshrl.u32 %v2178, 7
        %v2180 = vsub.s32 0, %v2179
        %v2181 = vrot.slane %v1721, %v2180
        %v2182 = vlaneseq
        %v2183 = vshrl.u32 %v2182, 7
        %v2184 = vsub.s32 1, %v2183
        %v2185 = vrot.slane %v1721, %v2184
        %v2186 = vlaneseq
        %v2187 = vshrl.u32 %v2186, 7
        %v2188 = vsub.s32 2, %v2187
        %v2189 = vrot.slane %v1721, %v2188
        %v2190 = vlaneseq
        %v2191 = vshrl.u32 %v2190, 7
        %v2192 = vsub.s32 3, %v2191
        %v2193 = vrot.slane %v1721, %v2192
        %v2194 = vlaneseq
        %v2195 = vshrl.u32 %v2194, 7
        %v2196 = vsub.s32 4, %v2195
        %v2197 = vrot.slane %v1721, %v2196
        %v2198 = vlaneseq
        %v2199 = vshrl.u32 %v2198, 7
        %v2200 = vsub.s32 5, %v2199
        %v2201 = vrot.slane %v1721, %v2200
        %v2202 = vlaneseq
        %v2203 = vshrl.u32 %v2202, 7
        %v2204 = vsub.s32 6, %v2203
        %v2205 = vrot.slane %v1721, %v2204
        %v2206 = vlaneseq
        %v2207 = vshrl.u32 %v2206, 7
        %v2208 = vsub.s32 7, %v2207
        %v2209 = vrot.slane %v1721, %v2208
        %v2210 = vlaneseq
        %v2211 = vshrl.u32 %v2210, 7
        %v2212 = vsub.s32 0, %v2211
        %v2213 = vrot.slane %v1723, %v2212
        %v2214 = vlaneseq
        %v2215 = vshrl.u32 %v2214, 7
        %v2216 = vsub.s32 1, %v2215
        %v2217 = vrot.slane %v1723, %v2216
        %v2218 = vlaneseq
        %v2219 = vshrl.u32 %v2218, 7
        %v2220 = vsub.s32 2, %v2219
        %v2221 = vrot.slane %v1723, %v2220
        %v2222 = vlaneseq
        %v2223 = vshrl.u32 %v2222, 7
        %v2224 = vsub.s32 3, %v2223
        %v2225 = vrot.slane %v1723, %v2224
        %v2226 = vlaneseq
        %v2227 = vshrl.u32 %v2226, 7
        %v2228 = vsub.s32 4, %v2227
        %v2229 = vrot.slane %v1723, %v2228
        %v2230 = vlaneseq
        %v2231 = vshrl.u32 %v2230, 7
        %v2232 = vsub.s32 5, %v2231
        %v2233 = vrot.slane %v1723, %v2232
        %v2234 = vlaneseq
        %v2235 = vshrl.u32 %v2234, 7
        %v2236 = vsub.s32 6, %v2235
        %v2237 = vrot.slane %v1723, %v2236
        %v2238 = vlaneseq
        %v2239 = vshrl.u32 %v2238, 7
        %v2240 = vsub.s32 7, %v2239
        %v2241 = vrot.slane %v1723, %v2240
        %v2242 = vlaneseq
        %v2243 = vshrl.u32 %v2242, 7
        %v2244 = vsub.s32 0, %v2243
        %v2245 = vrot.slane %v1725, %v2244
        %v2246 = vlaneseq
        %v2247 = vshrl.u32 %v2246, 7
        %v2248 = vsub.s32 1, %v2247
        %v2249 = vrot.slane %v1725, %v2248
        %v2250 = vlaneseq
        %v2251 = vshrl.u32 %v2250, 7
        %v2252 = vsub.s32 2, %v2251
        %v2253 = vrot.slane %v1725, %v2252
        %v2254 = vlaneseq
        %v2255 = vshrl.u32 %v2254, 7
        %v2256 = vsub.s32 3, %v2255
        %v2257 = vrot.slane %v1725, %v2256
        %v2258 = vlaneseq
        %v2259 = vshrl.u32 %v2258, 7
        %v2260 = vsub.s32 4, %v2259
        %v2261 = vrot.slane %v1725, %v2260
        %v2262 = vlaneseq
        %v2263 = vshrl.u32 %v2262, 7
        %v2264 = vsub.s32 5, %v2263
        %v2265 = vrot.slane %v1725, %v2264
        %v2266 = vlaneseq
        %v2267 = vshrl.u32 %v2266, 7
        %v2268 = vsub.s32 6, %v2267
        %v2269 = vrot.slane %v1725, %v2268
        %v2270 = vlaneseq
        %v2271 = vshrl.u32 %v2270, 7
        %v2272 = vsub.s32 7, %v2271
        %v2273 = vrot.slane %v1725, %v2272
        %v2274 = vlaneseq
        %v2275 = vshrl.u32 %v2274, 7
        %v2276 = vsub.s32 0, %v2275
        %v2277 = vrot.slane %v1727, %v2276
        %v2278 = vlaneseq
        %v2279 = vshrl.u32 %v2278, 7
        %v2280 = vsub.s32 1, %v2279
        %v2281 = vrot.slane %v1727, %v2280
        %v2282 = vlaneseq
        %v2283 = vshrl.u32 %v2282, 7
        %v2284 = vsub.s32 2, %v2283
        %v2285 = vrot.slane %v1727, %v2284
        %v2286 = vlaneseq
        %v2287 = vshrl.u32 %v2286, 7
        %v2288 = vsub.s32 3, %v2287
        %v2289 = vrot.slane %v1727, %v2288
        %v2290 = vlaneseq
        %v2291 = vshrl.u32 %v2290, 7
        %v2292 = vsub.s32 4, %v2291
        %v2293 = vrot.slane %v1727, %v2292
        %v2294 = vlaneseq
        %v2295 = vshrl.u32 %v2294, 7
        %v2296 = vsub.s32 5, %v2295
        %v2297 = vrot.slane %v1727, %v2296
        %v2298 = vlaneseq
        %v2299 = vshrl.u32 %v2298, 7
        %v2300 = vsub.s32 6, %v2299
        %v2301 = vrot.slane %v1727, %v2300
        %v2302 = vlaneseq
        %v2303 = vshrl.u32 %v2302, 7
        %v2304 = vsub.s32 7, %v2303
        %v2305 = vrot.slane %v1727, %v2304
        %v2306 = vlaneseq
        %v2307 = vshrl.u32 %v2306, 7
        %v2308 = vsub.s32 0, %v2307
        %v2309 = vrot.slane %v1729, %v2308
        %v2310 = vlaneseq
        %v2311 = vshrl.u32 %v2310, 7
        %v2312 = vsub.s32 1, %v2311
        %v2313 = vrot.slane %v1729, %v2312
        %v2314 = vlaneseq
        %v2315 = vshrl.u32 %v2314, 7
        %v2316 = vsub.s32 2, %v2315
        %v2317 = vrot.slane %v1729, %v2316
        %v2318 = vlaneseq
        %v2319 = vshrl.u32 %v2318, 7
        %v2320 = vsub.s32 3, %v2319
        %v2321 = vrot.slane %v1729, %v2320
        %v2322 = vlaneseq
        %v2323 = vshrl.u32 %v2322, 7
        %v2324 = vsub.s32 4, %v2323
        %v2325 = vrot.slane %v1729, %v2324
        %v2326 = vlaneseq
        %v2327 = vshrl.u32 %v2326, 7
        %v2328 = vsub.s32 5, %v2327
        %v2329 = vrot.slane %v1729, %v2328
        %v2330 = vlaneseq
        %v2331 = vshrl.u32 %v2330, 7
        %v2332 = vsub.s32 6, %v2331
        %v2333 = vrot.slane %v1729, %v2332
        %v2334 = vlaneseq
        %v2335 = vshrl.u32 %v2334, 7
        %v2336 = vsub.s32 7, %v2335
        %v2337 = vrot.slane %v1729, %v2336
        %v2338 = vlaneseq
        %v2339 = vshrl.u32 %v2338, 7
        %v2340 = vsub.s32 0, %v2339
        %v2341 = vrot.slane %v1731, %v2340
        %v2342 = vlaneseq
        %v2343 = vshrl.u32 %v2342, 7
        %v2344 = vsub.s32 1, %v2343
        %v2345 = vrot.slane %v1731, %v2344
        %v2346 = vlaneseq
        %v2347 = vshrl.u32 %v2346, 7
        %v2348 = vsub.s32 2, %v2347
        %v2349 = vrot.slane %v1731, %v2348
        %v2350 = vlaneseq
        %v2351 = vshrl.u32 %v2350, 7
        %v2352 = vsub.s32 3, %v2351
        %v2353 = vrot.slane %v1731, %v2352
        %v2354 = vlaneseq
        %v2355 = vshrl.u32 %v2354, 7
        %v2356 = vsub.s32 4, %v2355
        %v2357 = vrot.slane %v1731, %v2356
        %v2358 = vlaneseq
        %v2359 = vshrl.u32 %v2358, 7
        %v2360 = vsub.s32 5, %v2359
        %v2361 = vrot.slane %v1731, %v2360
        %v2362 = vlaneseq
        %v2363 = vshrl.u32 %v2362, 7
        %v2364 = vsub.s32 6, %v2363
        %v2365 = vrot.slane %v1731, %v2364
        %v2366 = vlaneseq
        %v2367 = vshrl.u32 %v2366, 7
        %v2368 = vsub.s32 7, %v2367
        %v2369 = vrot.slane %v1731, %v2368
        %v2370 = vlaneseq
        %v2371 = vshrl.u32 %v2370, 7
        %v2372 = vsub.s32 0, %v2371
        %v2373 = vrot.slane %v1733, %v2372
        %v2374 = vlaneseq
        %v2375 = vshrl.u32 %v2374, 7
        %v2376 = vsub.s32 1, %v2375
        %v2377 = vrot.slane %v1733, %v2376
        %v2378 = vlaneseq
        %v2379 = vshrl.u32 %v2378, 7
        %v2380 = vsub.s32 2, %v2379
        %v2381 = vrot.slane %v1733, %v2380
        %v2382 = vlaneseq
        %v2383 = vshrl.u32 %v2382, 7
        %v2384 = vsub.s32 3, %v2383
        %v2385 = vrot.slane %v1733, %v2384
        %v2386 = vlaneseq
        %v2387 = vshrl.u32 %v2386, 7
        %v2388 = vsub.s32 4, %v2387
        %v2389 = vrot.slane %v1733, %v2388
        %v2390 = vlaneseq
        %v2391 = vshrl.u32 %v2390, 7
        %v2392 = vsub.s32 5, %v2391
        %v2393 = vrot.slane %v1733, %v2392
        %v2394 = vlaneseq
        %v2395 = vshrl.u32 %v2394, 7
        %v2396 = vsub.s32 6, %v2395
        %v2397 = vrot.slane %v1733, %v2396
        %v2398 = vlaneseq
        %v2399 = vshrl.u32 %v2398, 7
        %v2400 = vsub.s32 7, %v2399
        %v2401 = vrot.slane %v1733, %v2400
        %v2402 = vlaneseq
        %v2403 = vshrl.u32 %v2402, 7
        %v2404 = vsub.s32 0, %v2403
        %v2405 = vrot.slane %v1735, %v2404
        %v2406 = vlaneseq
        %v2407 = vshrl.u32 %v2406, 7
        %v2408 = vsub.s32 1, %v2407
        %v2409 = vrot.slane %v1735, %v2408
        %v2410 = vlaneseq
        %v2411 = vshrl.u32 %v2410, 7
        %v2412 = vsub.s32 2, %v2411
        %v2413 = vrot.slane %v1735, %v2412
        %v2414 = vlaneseq
        %v2415 = vshrl.u32 %v2414, 7
        %v2416 = vsub.s32 3, %v2415
        %v2417 = vrot.slane %v1735, %v2416
        %v2418 = vlaneseq
        %v2419 = vshrl.u32 %v2418, 7
        %v2420 = vsub.s32 4, %v2419
        %v2421 = vrot.slane %v1735, %v2420
        %v2422 = vlaneseq
        %v2423 = vshrl.u32 %v2422, 7
        %v2424 = vsub.s32 5, %v2423
        %v2425 = vrot.slane %v1735, %v2424
        %v2426 = vlaneseq
        %v2427 = vshrl.u32 %v2426, 7
        %v2428 = vsub.s32 6, %v2427
        %v2429 = vrot.slane %v1735, %v2428
        %v2430 = vlaneseq
        %v2431 = vshrl.u32 %v2430, 7
        %v2432 = vsub.s32 7, %v2431
        %v2433 = vrot.slane %v1735, %v2432
        %v2434 = vlaneseq
        %v2435 = vshrl.u32 %v2434, 7
        %v2436 = vsub.s32 0, %v2435
        %v2437 = vrot.slane %v1737, %v2436
        %v2438 = vlaneseq
        %v2439 = vshrl.u32 %v2438, 7
        %v2440 = vsub.s32 1, %v2439
        %v2441 = vrot.slane %v1737, %v2440
        %v2442 = vlaneseq
        %v2443 = vshrl.u32 %v2442, 7
        %v2444 = vsub.s32 2, %v2443
        %v2445 = vrot.slane %v1737, %v2444
        %v2446 = vlaneseq
        %v2447 = vshrl.u32 %v2446, 7
        %v2448 = vsub.s32 3, %v2447
        %v2449 = vrot.slane %v1737, %v2448
        %v2450 = vlaneseq
        %v2451 = vshrl.u32 %v2450, 7
        %v2452 = vsub.s32 4, %v2451
        %v2453 = vrot.slane %v1737, %v2452
        %v2454 = vlaneseq
        %v2455 = vshrl.u32 %v2454, 7
        %v2456 = vsub.s32 5, %v2455
        %v2457 = vrot.slane %v1737, %v2456
        %v2458 = vlaneseq
        %v2459 = vshrl.u32 %v2458, 7
        %v2460 = vsub.s32 6, %v2459
        %v2461 = vrot.slane %v1737, %v2460
        %v2462 = vlaneseq
        %v2463 = vshrl.u32 %v2462, 7
        %v2464 = vsub.s32 7, %v2463
        %v2465 = vrot.slane %v1737, %v2464
        %v2466 = vlaneseq
        %v2467 = vshrl.u32 %v2466, 7
        %v2468 = vsub.s32 0, %v2467
        %v2469 = vrot.slane %v1739, %v2468
        %v2470 = vlaneseq
        %v2471 = vshrl.u32 %v2470, 7
        %v2472 = vsub.s32 1, %v2471
        %v2473 = vrot.slane %v1739, %v2472
        %v2474 = vlaneseq
        %v2475 = vshrl.u32 %v2474, 7
        %v2476 = vsub.s32 2, %v2475
        %v2477 = vrot.slane %v1739, %v2476
        %v2478 = vlaneseq
        %v2479 = vshrl.u32 %v2478, 7
        %v2480 = vsub.s32 3, %v2479
        %v2481 = vrot.slane %v1739, %v2480
        %v2482 = vlaneseq
        %v2483 = vshrl.u32 %v2482, 7
        %v2484 = vsub.s32 4, %v2483
        %v2485 = vrot.slane %v1739, %v2484
        %v2486 = vlaneseq
        %v2487 = vshrl.u32 %v2486, 7
        %v2488 = vsub.s32 5, %v2487
        %v2489 = vrot.slane %v1739, %v2488
        %v2490 = vlaneseq
        %v2491 = vshrl.u32 %v2490, 7
        %v2492 = vsub.s32 6, %v2491
        %v2493 = vrot.slane %v1739, %v2492
        %v2494 = vlaneseq
        %v2495 = vshrl.u32 %v2494, 7
        %v2496 = vsub.s32 7, %v2495
        %v2497 = vrot.slane %v1739, %v2496
        %v2498 = vlaneseq
        %v2499 = vshrl.u32 %v2498, 7
        %v2500 = vsub.s32 0, %v2499
        %v2501 = vrot.slane %v1741, %v2500
        %v2502 = vlaneseq
        %v2503 = vshrl.u32 %v2502, 7
        %v2504 = vsub.s32 1, %v2503
        %v2505 = vrot.slane %v1741, %v2504
        %v2506 = vlaneseq
        %v2507 = vshrl.u32 %v2506, 7
        %v2508 = vsub.s32 2, %v2507
        %v2509 = vrot.slane %v1741, %v2508
        %v2510 = vlaneseq
        %v2511 = vshrl.u32 %v2510, 7
        %v2512 = vsub.s32 3, %v2511
        %v2513 = vrot.slane %v1741, %v2512
        %v2514 = vlaneseq
        %v2515 = vshrl.u32 %v2514, 7
        %v2516 = vsub.s32 4, %v2515
        %v2517 = vrot.slane %v1741, %v2516
        %v2518 = vlaneseq
        %v2519 = vshrl.u32 %v2518, 7
        %v2520 = vsub.s32 5, %v2519
        %v2521 = vrot.slane %v1741, %v2520
        %v2522 = vlaneseq
        %v2523 = vshrl.u32 %v2522, 7
        %v2524 = vsub.s32 6, %v2523
        %v2525 = vrot.slane %v1741, %v2524
        %v2526 = vlaneseq
        %v2527 = vshrl.u32 %v2526, 7
        %v2528 = vsub.s32 7, %v2527
        %v2529 = vrot.slane %v1741, %v2528
        %v2530 = vlaneseq
        %v2531 = vshrl.u32 %v2530, 7
        %v2532 = vsub.s32 0, %v2531
        %v2533 = vrot.slane %v1743, %v2532
        %v2534 = vlaneseq
        %v2535 = vshrl.u32 %v2534, 7
        %v2536 = vsub.s32 1, %v2535
        %v2537 = vrot.slane %v1743, %v2536
        %v2538 = vlaneseq
        %v2539 = vshrl.u32 %v2538, 7
        %v2540 = vsub.s32 2, %v2539
        %v2541 = vrot.slane %v1743, %v2540
        %v2542 = vlaneseq
        %v2543 = vshrl.u32 %v2542, 7
        %v2544 = vsub.s32 3, %v2543
        %v2545 = vrot.slane %v1743, %v2544
        %v2546 = vlaneseq
        %v2547 = vshrl.u32 %v2546, 7
        %v2548 = vsub.s32 4, %v2547
        %v2549 = vrot.slane %v1743, %v2548
        %v2550 = vlaneseq
        %v2551 = vshrl.u32 %v2550, 7
        %v2552 = vsub.s32 5, %v2551
        %v2553 = vrot.slane %v1743, %v2552
        %v2554 = vlaneseq
        %v2555 = vshrl.u32 %v2554, 7
        %v2556 = vsub.s32 6, %v2555
        %v2557 = vrot.slane %v1743, %v2556
        %v2558 = vlaneseq
        %v2559 = vshrl.u32 %v2558, 7
        %v2560 = vsub.s32 7, %v2559
        %v2561 = vrot.slane %v1743, %v2560
        %v2562 = vlaneseq
        %v2563 = vshrl.u32 %v2562, 7
        %v2564 = vsub.s32 0, %v2563
        %v2565 = vrot.slane %v1745, %v2564
        %v2566 = vlaneseq
        %v2567 = vshrl.u32 %v2566, 7
        %v2568 = vsub.s32 1, %v2567
        %v2569 = vrot.slane %v1745, %v2568
        %v2570 = vlaneseq
        %v2571 = vshrl.u32 %v2570, 7
        %v2572 = vsub.s32 2, %v2571
        %v2573 = vrot.slane %v1745, %v2572
        %v2574 = vlaneseq
        %v2575 = vshrl.u32 %v2574, 7
        %v2576 = vsub.s32 3, %v2575
        %v2577 = vrot.slane %v1745, %v2576
        %v2578 = vlaneseq
        %v2579 = vshrl.u32 %v2578, 7
        %v2580 = vsub.s32 4, %v2579
        %v2581 = vrot.slane %v1745, %v2580
        %v2582 = vlaneseq
        %v2583 = vshrl.u32 %v2582, 7
        %v2584 = vsub.s32 5, %v2583
        %v2585 = vrot.slane %v1745, %v2584
        %v2586 = vlaneseq
        %v2587 = vshrl.u32 %v2586, 7
        %v2588 = vsub.s32 6, %v2587
        %v2589 = vrot.slane %v1745, %v2588
        %v2590 = vlaneseq
        %v2591 = vshrl.u32 %v2590, 7
        %v2592 = vsub.s32 7, %v2591
        %v2593 = vrot.slane %v1745, %v2592
        %v2594 = vlaneseq
        %v2595 = vshrl.u32 %v2594, 7
        %v2596 = vsub.s32 0, %v2595
        %v2597 = vrot.slane %v1747, %v2596
        %v2598 = vlaneseq
        %v2599 = vshrl.u32 %v2598, 7
        %v2600 = vsub.s32 1, %v2599
        %v2601 = vrot.slane %v1747, %v2600
        %v2602 = vlaneseq
        %v2603 = vshrl.u32 %v2602, 7
        %v2604 = vsub.s32 2, %v2603
        %v2605 = vrot.slane %v1747, %v2604
        %v2606 = vlaneseq
        %v2607 = vshrl.u32 %v2606, 7
        %v2608 = vsub.s32 3, %v2607
        %v2609 = vrot.slane %v1747, %v2608
        %v2610 = vlaneseq
        %v2611 = vshrl.u32 %v2610, 7
        %v2612 = vsub.s32 4, %v2611
        %v2613 = vrot.slane %v1747, %v2612
        %v2614 = vlaneseq
        %v2615 = vshrl.u32 %v2614, 7
        %v2616 = vsub.s32 5, %v2615
        %v2617 = vrot.slane %v1747, %v2616
        %v2618 = vlaneseq
        %v2619 = vshrl.u32 %v2618, 7
        %v2620 = vsub.s32 6, %v2619
        %v2621 = vrot.slane %v1747, %v2620
        %v2622 = vlaneseq
        %v2623 = vshrl.u32 %v2622, 7
        %v2624 = vsub.s32 7, %v2623
        %v2625 = vrot.slane %v1747, %v2624
        %v2626 = vlaneseq
        %v2627 = vshrl.u32 %v2626, 7
        %v2628 = vsub.s32 0, %v2627
        %v2629 = vrot.slane %v1749, %v2628
        %v2630 = vlaneseq
        %v2631 = vshrl.u32 %v2630, 7
        %v2632 = vsub.s32 1, %v2631
        %v2633 = vrot.slane %v1749, %v2632
        %v2634 = vlaneseq
        %v2635 = vshrl.u32 %v2634, 7
        %v2636 = vsub.s32 2, %v2635
        %v2637 = vrot.slane %v1749, %v2636
        %v2638 = vlaneseq
        %v2639 = vshrl.u32 %v2638, 7
        %v2640 = vsub.s32 3, %v2639
        %v2641 = vrot.slane %v1749, %v2640
        %v2642 = vlaneseq
        %v2643 = vshrl.u32 %v2642, 7
        %v2644 = vsub.s32 4, %v2643
        %v2645 = vrot.slane %v1749, %v2644
        %v2646 = vlaneseq
        %v2647 = vshrl.u32 %v2646, 7
        %v2648 = vsub.s32 5, %v2647
        %v2649 = vrot.slane %v1749, %v2648
        %v2650 = vlaneseq
        %v2651 = vshrl.u32 %v2650, 7
        %v2652 = vsub.s32 6, %v2651
        %v2653 = vrot.slane %v1749, %v2652
        %v2654 = vlaneseq
        %v2655 = vshrl.u32 %v2654, 7
        %v2656 = vsub.s32 7, %v2655
        %v2657 = vrot.slane %v1749, %v2656
        %v2658 = vlaneseq
        %v2659 = vshrl.u32 %v2658, 7
        %v2660 = vsub.s32 0, %v2659
        %v2661 = vrot.slane %v1751, %v2660
        %v2662 = vlaneseq
        %v2663 = vshrl.u32 %v2662, 7
        %v2664 = vsub.s32 1, %v2663
        %v2665 = vrot.slane %v1751, %v2664
        %v2666 = vlaneseq
        %v2667 = vshrl.u32 %v2666, 7
        %v2668 = vsub.s32 2, %v2667
        %v2669 = vrot.slane %v1751, %v2668
        %v2670 = vlaneseq
        %v2671 = vshrl.u32 %v2670, 7
        %v2672 = vsub.s32 3, %v2671
        %v2673 = vrot.slane %v1751, %v2672
        %v2674 = vlaneseq
        %v2675 = vshrl.u32 %v2674, 7
        %v2676 = vsub.s32 4, %v2675
        %v2677 = vrot.slane %v1751, %v2676
        %v2678 = vlaneseq
        %v2679 = vshrl.u32 %v2678, 7
        %v2680 = vsub.s32 5, %v2679
        %v2681 = vrot.slane %v1751, %v2680
        %v2682 = vlaneseq
        %v2683 = vshrl.u32 %v2682, 7
        %v2684 = vsub.s32 6, %v2683
        %v2685 = vrot.slane %v1751, %v2684
        %v2686 = vlaneseq
        %v2687 = vshrl.u32 %v2686, 7
        %v2688 = vsub.s32 7, %v2687
        %v2689 = vrot.slane %v1751, %v2688
        %v2690 = vlaneseq
        %v2691 = vshrl.u32 %v2690, 7
        %v2692 = vsub.s32 0, %v2691
        %v2693 = vrot.slane %v1753, %v2692
        %v2694 = vlaneseq
        %v2695 = vshrl.u32 %v2694, 7
        %v2696 = vsub.s32 1, %v2695
        %v2697 = vrot.slane %v1753, %v2696
        %v2698 = vlaneseq
        %v2699 = vshrl.u32 %v2698, 7
        %v2700 = vsub.s32 2, %v2699
        %v2701 = vrot.slane %v1753, %v2700
        %v2702 = vlaneseq
        %v2703 = vshrl.u32 %v2702, 7
        %v2704 = vsub.s32 3, %v2703
        %v2705 = vrot.slane %v1753, %v2704
        %v2706 = vlaneseq
        %v2707 = vshrl.u32 %v2706, 7
        %v2708 = vsub.s32 4, %v2707
        %v2709 = vrot.slane %v1753, %v2708
        %v2710 = vlaneseq
        %v2711 = vshrl.u32 %v2710, 7
        %v2712 = vsub.s32 5, %v2711
        %v2713 = vrot.slane %v1753, %v2712
        %v2714 = vlaneseq
        %v2715 = vshrl.u32 %v2714, 7
        %v2716 = vsub.s32 6, %v2715
        %v2717 = vrot.slane %v1753, %v2716
        %v2718 = vlaneseq
        %v2719 = vshrl.u32 %v2718, 7
        %v2720 = vsub.s32 7, %v2719
        %v2721 = vrot.slane %v1753, %v2720
        %v2722 = vlaneseq
        %v2723 = vshrl.u32 %v2722, 7
        %v2724 = vsub.s32 0, %v2723
        %v2725 = vrot.slane %v1755, %v2724
        %v2726 = vlaneseq
        %v2727 = vshrl.u32 %v2726, 7
        %v2728 = vsub.s32 1, %v2727
        %v2729 = vrot.slane %v1755, %v2728
        %v2730 = vlaneseq
        %v2731 = vshrl.u32 %v2730, 7
        %v2732 = vsub.s32 2, %v2731
        %v2733 = vrot.slane %v1755, %v2732
        %v2734 = vlaneseq
        %v2735 = vshrl.u32 %v2734, 7
        %v2736 = vsub.s32 3, %v2735
        %v2737 = vrot.slane %v1755, %v2736
        %v2738 = vlaneseq
        %v2739 = vshrl.u32 %v2738, 7
        %v2740 = vsub.s32 4, %v2739
        %v2741 = vrot.slane %v1755, %v2740
        %v2742 = vlaneseq
        %v2743 = vshrl.u32 %v2742, 7
        %v2744 = vsub.s32 5, %v2743
        %v2745 = vrot.slane %v1755, %v2744
        %v2746 = vlaneseq
        %v2747 = vshrl.u32 %v2746, 7
        %v2748 = vsub.s32 6, %v2747
        %v2749 = vrot.slane %v1755, %v2748
        %v2750 = vlaneseq
        %v2751 = vshrl.u32 %v2750, 7
        %v2752 = vsub.s32 7, %v2751
        %v2753 = vrot.slane %v1755, %v2752
        %v2754 = vlaneseq
        %v2755 = vshrl.u32 %v2754, 7
        %v2756 = vsub.s32 0, %v2755
        %v2757 = vrot.slane %v1757, %v2756
        %v2758 = vlaneseq
        %v2759 = vshrl.u32 %v2758, 7
        %v2760 = vsub.s32 1, %v2759
        %v2761 = vrot.slane %v1757, %v2760
        %v2762 = vlaneseq
        %v2763 = vshrl.u32 %v2762, 7
        %v2764 = vsub.s32 2, %v2763
        %v2765 = vrot.slane %v1757, %v2764
        %v2766 = vlaneseq
        %v2767 = vshrl.u32 %v2766, 7
        %v2768 = vsub.s32 3, %v2767
        %v2769 = vrot.slane %v1757, %v2768
        %v2770 = vlaneseq
        %v2771 = vshrl.u32 %v2770, 7
        %v2772 = vsub.s32 4, %v2771
        %v2773 = vrot.slane %v1757, %v2772
        %v2774 = vlaneseq
        %v2775 = vshrl.u32 %v2774, 7
        %v2776 = vsub.s32 5, %v2775
        %v2777 = vrot.slane %v1757, %v2776
        %v2778 = vlaneseq
        %v2779 = vshrl.u32 %v2778, 7
        %v2780 = vsub.s32 6, %v2779
        %v2781 = vrot.slane %v1757, %v2780
        %v2782 = vlaneseq
        %v2783 = vshrl.u32 %v2782, 7
        %v2784 = vsub.s32 7, %v2783
        %v2785 = vrot.slane %v1757, %v2784
        %v2786 = vlaneseq
        %v2787 = vshrl.u32 %v2786, 7
        %v2788 = vsub.s32 0, %v2787
        %v2789 = vrot.slane %v1759, %v2788
        %v2790 = vlaneseq
        %v2791 = vshrl.u32 %v2790, 7
        %v2792 = vsub.s32 1, %v2791
        %v2793 = vrot.slane %v1759, %v2792
        %v2794 = vlaneseq
        %v2795 = vshrl.u32 %v2794, 7
        %v2796 = vsub.s32 2, %v2795
        %v2797 = vrot.slane %v1759, %v2796
        %v2798 = vlaneseq
        %v2799 = vshrl.u32 %v2798, 7
        %v2800 = vsub.s32 3, %v2799
        %v2801 = vrot.slane %v1759, %v2800
        %v2802 = vlaneseq
        %v2803 = vshrl.u32 %v2802, 7
        %v2804 = vsub.s32 4, %v2803
        %v2805 = vrot.slane %v1759, %v2804
        %v2806 = vlaneseq
        %v2807 = vshrl.u32 %v2806, 7
        %v2808 = vsub.s32 5, %v2807
        %v2809 = vrot.slane %v1759, %v2808
        %v2810 = vlaneseq
        %v2811 = vshrl.u32 %v2810, 7
        %v2812 = vsub.s32 6, %v2811
        %v2813 = vrot.slane %v1759, %v2812
        %v2814 = vlaneseq
        %v2815 = vshrl.u32 %v2814, 7
        %v2816 = vsub.s32 7, %v2815
        %v2817 = vrot.slane %v1759, %v2816
        %v2818 = vcombine.low %v1797, %v1801
        %v2819 = vcombine.low %v1805, %v1809
        %v2820 = vcombine.low %v1813, %v1817
        %v2821 = vcombine.low %v1821, %v1825
        %v2823 = vunpack.c.l.s4 1966171168
        %v2824 = vunpack.c.0.s8 %v2823
        %v2825 = vlaneseq
        %v2826 = vshrl.u32 %v2825, 7
        %v2827 = vsub.s32 %v2824, %v2826
        %v2828 = vrot.slane %v2818, %v2827
        %v2830 = vunpack.c.l.s4 1966171168
        %v2831 = vunpack.c.0.s8 %v2830
        %v2832 = vlaneseq
        %v2833 = vshrl.u32 %v2832, 7
        %v2834 = vsub.s32 %v2831, %v2833
        %v2835 = vrot.slane %v2819, %v2834
        %v2837 = vunpack.c.l.s4 1966171168
        %v2838 = vunpack.c.0.s8 %v2837
        %v2839 = vlaneseq
        %v2840 = vshrl.u32 %v2839, 7
        %v2841 = vsub.s32 %v2838, %v2840
        %v2842 = vrot.slane %v2820, %v2841
        %v2844 = vunpack.c.l.s4 1966171168
        %v2845 = vunpack.c.0.s8 %v2844
        %v2846 = vlaneseq
        %v2847 = vshrl.u32 %v2846, 7
        %v2848 = vsub.s32 %v2845, %v2847
        %v2849 = vrot.slane %v2821, %v2848
        %v2850 = vcombine.low %v2828, %v2835
        %v2851 = vcombine.low %v2842, %v2849
        %v2853 = vunpack.c.l.s4 1966171168
        %v2854 = vunpack.c.0.s8 %v2853
        %v2855 = vlaneseq
        %v2856 = vshrl.u32 %v2855, 7
        %v2857 = vsub.s32 %v2854, %v2856
        %v2858 = vrot.slane %v2850, %v2857
        %v2860 = vunpack.c.l.s4 1966171168
        %v2861 = vunpack.c.0.s8 %v2860
        %v2862 = vlaneseq
        %v2863 = vshrl.u32 %v2862, 7
        %v2864 = vsub.s32 %v2861, %v2863
        %v2865 = vrot.slane %v2851, %v2864
        %v2866 = vcombine.low %v2858, %v2865
        %v2867 = vcombine.low %v1829, %v1833
        %v2868 = vcombine.low %v1837, %v1841
        %v2869 = vcombine.low %v1845, %v1849
        %v2870 = vcombine.low %v1853, %v1857
        %v2872 = vunpack.c.l.s4 1966171168
        %v2873 = vunpack.c.0.s8 %v2872
        %v2874 = vlaneseq
        %v2875 = vshrl.u32 %v2874, 7
        %v2876 = vsub.s32 %v2873, %v2875
        %v2877 = vrot.slane %v2867, %v2876
        %v2879 = vunpack.c.l.s4 1966171168
        %v2880 = vunpack.c.0.s8 %v2879
        %v2881 = vlaneseq
        %v2882 = vshrl.u32 %v2881, 7
        %v2883 = vsub.s32 %v2880, %v2882
        %v2884 = vrot.slane %v2868, %v2883
        %v2886 = vunpack.c.l.s4 1966171168
        %v2887 = vunpack.c.0.s8 %v2886
        %v2888 = vlaneseq
        %v2889 = vshrl.u32 %v2888, 7
        %v2890 = vsub.s32 %v2887, %v2889
        %v2891 = vrot.slane %v2869, %v2890
        %v2893 = vunpack.c.l.s4 1966171168
        %v2894 = vunpack.c.0.s8 %v2893
        %v2895 = vlaneseq
        %v2896 = vshrl.u32 %v2895, 7
        %v2897 = vsub.s32 %v2894, %v2896
        %v2898 = vrot.slane %v2870, %v2897
        %v2899 = vcombine.low %v2877, %v2884
        %v2900 = vcombine.low %v2891, %v2898
        %v2902 = vunpack.c.l.s4 1966171168
        %v2903 = vunpack.c.0.s8 %v2902
        %v2904 = vlaneseq
        %v2905 = vshrl.u32 %v2904, 7
        %v2906 = vsub.s32 %v2903, %v2905
        %v2907 = vrot.slane %v2899, %v2906
        %v2909 = vunpack.c.l.s4 1966171168
        %v2910 = vunpack.c.0.s8 %v2909
        %v2911 = vlaneseq
        %v2912 = vshrl.u32 %v2911, 7
        %v2913 = vsub.s32 %v2910, %v2912
        %v2914 = vrot.slane %v2900, %v2913
        %v2915 = vcombine.low %v2907, %v2914
        %v2916 = vcombine.low %v1861, %v1865
        %v2917 = vcombine.low %v1869, %v1873
        %v2918 = vcombine.low %v1877, %v1881
        %v2919 = vcombine.low %v1885, %v1889
        %v2921 = vunpack.c.l.s4 1966171168
        %v2922 = vunpack.c.0.s8 %v2921
        %v2923 = vlaneseq
        %v2924 = vshrl.u32 %v2923, 7
        %v2925 = vsub.s32 %v2922, %v2924
        %v2926 = vrot.slane %v2916, %v2925
        %v2928 = vunpack.c.l.s4 1966171168
        %v2929 = vunpack.c.0.s8 %v2928
        %v2930 = vlaneseq
        %v2931 = vshrl.u32 %v2930, 7
        %v2932 = vsub.s32 %v2929, %v2931
        %v2933 = vrot.slane %v2917, %v2932
        %v2935 = vunpack.c.l.s4 1966171168
        %v2936 = vunpack.c.0.s8 %v2935
        %v2937 = vlaneseq
        %v2938 = vshrl.u32 %v2937, 7
        %v2939 = vsub.s32 %v2936, %v2938
        %v2940 = vrot.slane %v2918, %v2939
        %v2942 = vunpack.c.l.s4 1966171168
        %v2943 = vunpack.c.0.s8 %v2942
        %v2944 = vlaneseq
        %v2945 = vshrl.u32 %v2944, 7
        %v2946 = vsub.s32 %v2943, %v2945
        %v2947 = vrot.slane %v2919, %v2946
        %v2948 = vcombine.low %v2926, %v2933
        %v2949 = vcombine.low %v2940, %v2947
        %v2951 = vunpack.c.l.s4 1966171168
        %v2952 = vunpack.c.0.s8 %v2951
        %v2953 = vlaneseq
        %v2954 = vshrl.u32 %v2953, 7
        %v2955 = vsub.s32 %v2952, %v2954
        %v2956 = vrot.slane %v2948, %v2955
        %v2958 = vunpack.c.l.s4 1966171168
        %v2959 = vunpack.c.0.s8 %v2958
        %v2960 = vlaneseq
        %v2961 = vshrl.u32 %v2960, 7
        %v2962 = vsub.s32 %v2959, %v2961
        %v2963 = vrot.slane %v2949, %v2962
        %v2964 = vcombine.low %v2956, %v2963
        %v2965 = vcombine.low %v1893, %v1897
        %v2966 = vcombine.low %v1901, %v1905
        %v2967 = vcombine.low %v1909, %v1913
        %v2968 = vcombine.low %v1917, %v1921
        %v2970 = vunpack.c.l.s4 1966171168
        %v2971 = vunpack.c.0.s8 %v2970
        %v2972 = vlaneseq
        %v2973 = vshrl.u32 %v2972, 7
        %v2974 = vsub.s32 %v2971, %v2973
        %v2975 = vrot.slane %v2965, %v2974
        %v2977 = vunpack.c.l.s4 1966171168
        %v2978 = vunpack.c.0.s8 %v2977
        %v2979 = vlaneseq
        %v2980 = vshrl.u32 %v2979, 7
        %v2981 = vsub.s32 %v2978, %v2980
        %v2982 = vrot.slane %v2966, %v2981
        %v2984 = vunpack.c.l.s4 1966171168
        %v2985 = vunpack.c.0.s8 %v2984
        %v2986 = vlaneseq
        %v2987 = vshrl.u32 %v2986, 7
        %v2988 = vsub.s32 %v2985, %v2987
        %v2989 = vrot.slane %v2967, %v2988
        %v2991 = vunpack.c.l.s4 1966171168
        %v2992 = vunpack.c.0.s8 %v2991
        %v2993 = vlaneseq
        %v2994 = vshrl.u32 %v2993, 7
        %v2995 = vsub.s32 %v2992, %v2994
        %v2996 = vrot.slane %v2968, %v2995
        %v2997 = vcombine.low %v2975, %v2982
        %v2998 = vcombine.low %v2989, %v2996
        %v3000 = vunpack.c.l.s4 1966171168
        %v3001 = vunpack.c.0.s8 %v3000
        %v3002 = vlaneseq
        %v3003 = vshrl.u32 %v3002, 7
        %v3004 = vsub.s32 %v3001, %v3003
        %v3005 = vrot.slane %v2997, %v3004
        %v3007 = vunpack.c.l.s4 1966171168
        %v3008 = vunpack.c.0.s8 %v3007
        %v3009 = vlaneseq
        %v3010 = vshrl.u32 %v3009, 7
        %v3011 = vsub.s32 %v3008, %v3010
        %v3012 = vrot.slane %v2998, %v3011
        %v3013 = vcombine.low %v3005, %v3012
        %v3014 = vcombine.low %v1925, %v1929
        %v3015 = vcombine.low %v1933, %v1937
        %v3016 = vcombine.low %v1941, %v1945
        %v3017 = vcombine.low %v1949, %v1953
        %v3019 = vunpack.c.l.s4 1966171168
        %v3020 = vunpack.c.0.s8 %v3019
        %v3021 = vlaneseq
        %v3022 = vshrl.u32 %v3021, 7
        %v3023 = vsub.s32 %v3020, %v3022
        %v3024 = vrot.slane %v3014, %v3023
        %v3026 = vunpack.c.l.s4 1966171168
        %v3027 = vunpack.c.0.s8 %v3026
        %v3028 = vlaneseq
        %v3029 = vshrl.u32 %v3028, 7
        %v3030 = vsub.s32 %v3027, %v3029
        %v3031 = vrot.slane %v3015, %v3030
        %v3033 = vunpack.c.l.s4 1966171168
        %v3034 = vunpack.c.0.s8 %v3033
        %v3035 = vlaneseq
        %v3036 = vshrl.u32 %v3035, 7
        %v3037 = vsub.s32 %v3034, %v3036
        %v3038 = vrot.slane %v3016, %v3037
        %v3040 = vunpack.c.l.s4 1966171168
        %v3041 = vunpack.c.0.s8 %v3040
        %v3042 = vlaneseq
        %v3043 = vshrl.u32 %v3042, 7
        %v3044 = vsub.s32 %v3041, %v3043
        %v3045 = vrot.slane %v3017, %v3044
        %v3046 = vcombine.low %v3024, %v3031
        %v3047 = vcombine.low %v3038, %v3045
        %v3049 = vunpack.c.l.s4 1966171168
        %v3050 = vunpack.c.0.s8 %v3049
        %v3051 = vlaneseq
        %v3052 = vshrl.u32 %v3051, 7
        %v3053 = vsub.s32 %v3050, %v3052
        %v3054 = vrot.slane %v3046, %v3053
        %v3056 = vunpack.c.l.s4 1966171168
        %v3057 = vunpack.c.0.s8 %v3056
        %v3058 = vlaneseq
        %v3059 = vshrl.u32 %v3058, 7
        %v3060 = vsub.s32 %v3057, %v3059
        %v3061 = vrot.slane %v3047, %v3060
        %v3062 = vcombine.low %v3054, %v3061
        %v3063 = vcombine.low %v1957, %v1961
        %v3064 = vcombine.low %v1965, %v1969
        %v3065 = vcombine.low %v1973, %v1977
        %v3066 = vcombine.low %v1981, %v1985
        %v3068 = vunpack.c.l.s4 1966171168
        %v3069 = vunpack.c.0.s8 %v3068
        %v3070 = vlaneseq
        %v3071 = vshrl.u32 %v3070, 7
        %v3072 = vsub.s32 %v3069, %v3071
        %v3073 = vrot.slane %v3063, %v3072
        %v3075 = vunpack.c.l.s4 1966171168
        %v3076 = vunpack.c.0.s8 %v3075
        %v3077 = vlaneseq
        %v3078 = vshrl.u32 %v3077, 7
        %v3079 = vsub.s32 %v3076, %v3078
        %v3080 = vrot.slane %v3064, %v3079
        %v3082 = vunpack.c.l.s4 1966171168
        %v3083 = vunpack.c.0.s8 %v3082
        %v3084 = vlaneseq
        %v3085 = vshrl.u32 %v3084, 7
        %v3086 = vsub.s32 %v3083, %v3085
        %v3087 = vrot.slane %v3065, %v3086
        %v3089 = vunpack.c.l.s4 1966171168
        %v3090 = vunpack.c.0.s8 %v3089
        %v3091 = vlaneseq
        %v3092 = vshrl.u32 %v3091, 7
        %v3093 = vsub.s32 %v3090, %v3092
        %v3094 = vrot.slane %v3066, %v3093
        %v3095 = vcombine.low %v3073, %v3080
        %v3096 = vcombine.low %v3087, %v3094
        %v3098 = vunpack.c.l.s4 1966171168
        %v3099 = vunpack.c.0.s8 %v3098
        %v3100 = vlaneseq
        %v3101 = vshrl.u32 %v3100, 7
        %v3102 = vsub.s32 %v3099, %v3101
        %v3103 = vrot.slane %v3095, %v3102
        %v3105 = vunpack.c.l.s4 1966171168
        %v3106 = vunpack.c.0.s8 %v3105
        %v3107 = vlaneseq
        %v3108 = vshrl.u32 %v3107, 7
        %v3109 = vsub.s32 %v3106, %v3108
        %v3110 = vrot.slane %v3096, %v3109
        %v3111 = vcombine.low %v3103, %v3110
        %v3112 = vcombine.low %v1989, %v1993
        %v3113 = vcombine.low %v1997, %v2001
        %v3114 = vcombine.low %v2005, %v2009
        %v3115 = vcombine.low %v2013, %v2017
        %v3117 = vunpack.c.l.s4 1966171168
        %v3118 = vunpack.c.0.s8 %v3117
        %v3119 = vlaneseq
        %v3120 = vshrl.u32 %v3119, 7
        %v3121 = vsub.s32 %v3118, %v3120
        %v3122 = vrot.slane %v3112, %v3121
        %v3124 = vunpack.c.l.s4 1966171168
        %v3125 = vunpack.c.0.s8 %v3124
        %v3126 = vlaneseq
        %v3127 = vshrl.u32 %v3126, 7
        %v3128 = vsub.s32 %v3125, %v3127
        %v3129 = vrot.slane %v3113, %v3128
        %v3131 = vunpack.c.l.s4 1966171168
        %v3132 = vunpack.c.0.s8 %v3131
        %v3133 = vlaneseq
        %v3134 = vshrl.u32 %v3133, 7
        %v3135 = vsub.s32 %v3132, %v3134
        %v3136 = vrot.slane %v3114, %v3135
        %v3138 = vunpack.c.l.s4 1966171168
        %v3139 = vunpack.c.0.s8 %v3138
        %v3140 = vlaneseq
        %v3141 = vshrl.u32 %v3140, 7
        %v3142 = vsub.s32 %v3139, %v3141
        %v3143 = vrot.slane %v3115, %v3142
        %v3144 = vcombine.low %v3122, %v3129
        %v3145 = vcombine.low %v3136, %v3143
        %v3147 = vunpack.c.l.s4 1966171168
        %v3148 = vunpack.c.0.s8 %v3147
        %v3149 = vlaneseq
        %v3150 = vshrl.u32 %v3149, 7
        %v3151 = vsub.s32 %v3148, %v3150
        %v3152 = vrot.slane %v3144, %v3151
        %v3154 = vunpack.c.l.s4 1966171168
        %v3155 = vunpack.c.0.s8 %v3154
        %v3156 = vlaneseq
        %v3157 = vshrl.u32 %v3156, 7
        %v3158 = vsub.s32 %v3155, %v3157
        %v3159 = vrot.slane %v3145, %v3158
        %v3160 = vcombine.low %v3152, %v3159
        %v3161 = vcombine.low %v2021, %v2025
        %v3162 = vcombine.low %v2029, %v2033
        %v3163 = vcombine.low %v2037, %v2041
        %v3164 = vcombine.low %v2045, %v2049
        %v3166 = vunpack.c.l.s4 1966171168
        %v3167 = vunpack.c.0.s8 %v3166
        %v3168 = vlaneseq
        %v3169 = vshrl.u32 %v3168, 7
        %v3170 = vsub.s32 %v3167, %v3169
        %v3171 = vrot.slane %v3161, %v3170
        %v3173 = vunpack.c.l.s4 1966171168
        %v3174 = vunpack.c.0.s8 %v3173
        %v3175 = vlaneseq
        %v3176 = vshrl.u32 %v3175, 7
        %v3177 = vsub.s32 %v3174, %v3176
        %v3178 = vrot.slane %v3162, %v3177
        %v3180 = vunpack.c.l.s4 1966171168
        %v3181 = vunpack.c.0.s8 %v3180
        %v3182 = vlaneseq
        %v3183 = vshrl.u32 %v3182, 7
        %v3184 = vsub.s32 %v3181, %v3183
        %v3185 = vrot.slane %v3163, %v3184
        %v3187 = vunpack.c.l.s4 1966171168
        %v3188 = vunpack.c.0.s8 %v3187
        %v3189 = vlaneseq
        %v3190 = vshrl.u32 %v3189, 7
        %v3191 = vsub.s32 %v3188, %v3190
        %v3192 = vrot.slane %v3164, %v3191
        %v3193 = vcombine.low %v3171, %v3178
        %v3194 = vcombine.low %v3185, %v3192
        %v3196 = vunpack.c.l.s4 1966171168
        %v3197 = vunpack.c.0.s8 %v3196
        %v3198 = vlaneseq
        %v3199 = vshrl.u32 %v3198, 7
        %v3200 = vsub.s32 %v3197, %v3199
        %v3201 = vrot.slane %v3193, %v3200
        %v3203 = vunpack.c.l.s4 1966171168
        %v3204 = vunpack.c.0.s8 %v3203
        %v3205 = vlaneseq
        %v3206 = vshrl.u32 %v3205, 7
        %v3207 = vsub.s32 %v3204, %v3206
        %v3208 = vrot.slane %v3194, %v3207
        %v3209 = vcombine.low %v3201, %v3208
        %v3210 = vcombine.low %v2053, %v2057
        %v3211 = vcombine.low %v2061, %v2065
        %v3212 = vcombine.low %v2069, %v2073
        %v3213 = vcombine.low %v2077, %v2081
        %v3215 = vunpack.c.l.s4 1966171168
        %v3216 = vunpack.c.0.s8 %v3215
        %v3217 = vlaneseq
        %v3218 = vshrl.u32 %v3217, 7
        %v3219 = vsub.s32 %v3216, %v3218
        %v3220 = vrot.slane %v3210, %v3219
        %v3222 = vunpack.c.l.s4 1966171168
        %v3223 = vunpack.c.0.s8 %v3222
        %v3224 = vlaneseq
        %v3225 = vshrl.u32 %v3224, 7
        %v3226 = vsub.s32 %v3223, %v3225
        %v3227 = vrot.slane %v3211, %v3226
        %v3229 = vunpack.c.l.s4 1966171168
        %v3230 = vunpack.c.0.s8 %v3229
        %v3231 = vlaneseq
        %v3232 = vshrl.u32 %v3231, 7
        %v3233 = vsub.s32 %v3230, %v3232
        %v3234 = vrot.slane %v3212, %v3233
        %v3236 = vunpack.c.l.s4 1966171168
        %v3237 = vunpack.c.0.s8 %v3236
        %v3238 = vlaneseq
        %v3239 = vshrl.u32 %v3238, 7
        %v3240 = vsub.s32 %v3237, %v3239
        %v3241 = vrot.slane %v3213, %v3240
        %v3242 = vcombine.low %v3220, %v3227
        %v3243 = vcombine.low %v3234, %v3241
        %v3245 = vunpack.c.l.s4 1966171168
        %v3246 = vunpack.c.0.s8 %v3245
        %v3247 = vlaneseq
        %v3248 = vshrl.u32 %v3247, 7
        %v3249 = vsub.s32 %v3246, %v3248
        %v3250 = vrot.slane %v3242, %v3249
        %v3252 = vunpack.c.l.s4 1966171168
        %v3253 = vunpack.c.0.s8 %v3252
        %v3254 = vlaneseq
        %v3255 = vshrl.u32 %v3254, 7
        %v3256 = vsub.s32 %v3253, %v3255
        %v3257 = vrot.slane %v3243, %v3256
        %v3258 = vcombine.low %v3250, %v3257
        %v3259 = vcombine.low %v2085, %v2089
        %v3260 = vcombine.low %v2093, %v2097
        %v3261 = vcombine.low %v2101, %v2105
        %v3262 = vcombine.low %v2109, %v2113
        %v3264 = vunpack.c.l.s4 1966171168
        %v3265 = vunpack.c.0.s8 %v3264
        %v3266 = vlaneseq
        %v3267 = vshrl.u32 %v3266, 7
        %v3268 = vsub.s32 %v3265, %v3267
        %v3269 = vrot.slane %v3259, %v3268
        %v3271 = vunpack.c.l.s4 1966171168
        %v3272 = vunpack.c.0.s8 %v3271
        %v3273 = vlaneseq
        %v3274 = vshrl.u32 %v3273, 7
        %v3275 = vsub.s32 %v3272, %v3274
        %v3276 = vrot.slane %v3260, %v3275
        %v3278 = vunpack.c.l.s4 1966171168
        %v3279 = vunpack.c.0.s8 %v3278
        %v3280 = vlaneseq
        %v3281 = vshrl.u32 %v3280, 7
        %v3282 = vsub.s32 %v3279, %v3281
        %v3283 = vrot.slane %v3261, %v3282
        %v3285 = vunpack.c.l.s4 1966171168
        %v3286 = vunpack.c.0.s8 %v3285
        %v3287 = vlaneseq
        %v3288 = vshrl.u32 %v3287, 7
        %v3289 = vsub.s32 %v3286, %v3288
        %v3290 = vrot.slane %v3262, %v3289
        %v3291 = vcombine.low %v3269, %v3276
        %v3292 = vcombine.low %v3283, %v3290
        %v3294 = vunpack.c.l.s4 1966171168
        %v3295 = vunpack.c.0.s8 %v3294
        %v3296 = vlaneseq
        %v3297 = vshrl.u32 %v3296, 7
        %v3298 = vsub.s32 %v3295, %v3297
        %v3299 = vrot.slane %v3291, %v3298
        %v3301 = vunpack.c.l.s4 1966171168
        %v3302 = vunpack.c.0.s8 %v3301
        %v3303 = vlaneseq
        %v3304 = vshrl.u32 %v3303, 7
        %v3305 = vsub.s32 %v3302, %v3304
        %v3306 = vrot.slane %v3292, %v3305
        %v3307 = vcombine.low %v3299, %v3306
        %v3308 = vcombine.low %v2117, %v2121
        %v3309 = vcombine.low %v2125, %v2129
        %v3310 = vcombine.low %v2133, %v2137
        %v3311 = vcombine.low %v2141, %v2145
        %v3313 = vunpack.c.l.s4 1966171168
        %v3314 = vunpack.c.0.s8 %v3313
        %v3315 = vlaneseq
        %v3316 = vshrl.u32 %v3315, 7
        %v3317 = vsub.s32 %v3314, %v3316
        %v3318 = vrot.slane %v3308, %v3317
        %v3320 = vunpack.c.l.s4 1966171168
        %v3321 = vunpack.c.0.s8 %v3320
        %v3322 = vlaneseq
        %v3323 = vshrl.u32 %v3322, 7
        %v3324 = vsub.s32 %v3321, %v3323
        %v3325 = vrot.slane %v3309, %v3324
        %v3327 = vunpack.c.l.s4 1966171168
        %v3328 = vunpack.c.0.s8 %v3327
        %v3329 = vlaneseq
        %v3330 = vshrl.u32 %v3329, 7
        %v3331 = vsub.s32 %v3328, %v3330
        %v3332 = vrot.slane %v3310, %v3331
        %v3334 = vunpack.c.l.s4 1966171168
        %v3335 = vunpack.c.0.s8 %v3334
        %v3336 = vlaneseq
        %v3337 = vshrl.u32 %v3336, 7
        %v3338 = vsub.s32 %v3335, %v3337
        %v3339 = vrot.slane %v3311, %v3338
        %v3340 = vcombine.low %v3318, %v3325
        %v3341 = vcombine.low %v3332, %v3339
        %v3343 = vunpack.c.l.s4 1966171168
        %v3344 = vunpack.c.0.s8 %v3343
        %v3345 = vlaneseq
        %v3346 = vshrl.u32 %v3345, 7
        %v3347 = vsub.s32 %v3344, %v3346
        %v3348 = vrot.slane %v3340, %v3347
        %v3350 = vunpack.c.l.s4 1966171168
        %v3351 = vunpack.c.0.s8 %v3350
        %v3352 = vlaneseq
        %v3353 = vshrl.u32 %v3352, 7
        %v3354 = vsub.s32 %v3351, %v3353
        %v3355 = vrot.slane %v3341, %v3354
        %v3356 = vcombine.low %v3348, %v3355
        %v3357 = vcombine.low %v2149, %v2153
        %v3358 = vcombine.low %v2157, %v2161
        %v3359 = vcombine.low %v2165, %v2169
        %v3360 = vcombine.low %v2173, %v2177
        %v3362 = vunpack.c.l.s4 1966171168
        %v3363 = vunpack.c.0.s8 %v3362
        %v3364 = vlaneseq
        %v3365 = vshrl.u32 %v3364, 7
        %v3366 = vsub.s32 %v3363, %v3365
        %v3367 = vrot.slane %v3357, %v3366
        %v3369 = vunpack.c.l.s4 1966171168
        %v3370 = vunpack.c.0.s8 %v3369
        %v3371 = vlaneseq
        %v3372 = vshrl.u32 %v3371, 7
        %v3373 = vsub.s32 %v3370, %v3372
        %v3374 = vrot.slane %v3358, %v3373
        %v3376 = vunpack.c.l.s4 1966171168
        %v3377 = vunpack.c.0.s8 %v3376
        %v3378 = vlaneseq
        %v3379 = vshrl.u32 %v3378, 7
        %v3380 = vsub.s32 %v3377, %v3379
        %v3381 = vrot.slane %v3359, %v3380
        %v3383 = vunpack.c.l.s4 1966171168
        %v3384 = vunpack.c.0.s8 %v3383
        %v3385 = vlaneseq
        %v3386 = vshrl.u32 %v3385, 7
        %v3387 = vsub.s32 %v3384, %v3386
        %v3388 = vrot.slane %v3360, %v3387
        %v3389 = vcombine.low %v3367, %v3374
        %v3390 = vcombine.low %v3381, %v3388
        %v3392 = vunpack.c.l.s4 1966171168
        %v3393 = vunpack.c.0.s8 %v3392
        %v3394 = vlaneseq
        %v3395 = vshrl.u32 %v3394, 7
        %v3396 = vsub.s32 %v3393, %v3395
        %v3397 = vrot.slane %v3389, %v3396
        %v3399 = vunpack.c.l.s4 1966171168
        %v3400 = vunpack.c.0.s8 %v3399
        %v3401 = vlaneseq
        %v3402 = vshrl.u32 %v3401, 7
        %v3403 = vsub.s32 %v3400, %v3402
        %v3404 = vrot.slane %v3390, %v3403
        %v3405 = vcombine.low %v3397, %v3404
        %v3406 = vcombine.low %v2181, %v2185
        %v3407 = vcombine.low %v2189, %v2193
        %v3408 = vcombine.low %v2197, %v2201
        %v3409 = vcombine.low %v2205, %v2209
        %v3411 = vunpack.c.l.s4 1966171168
        %v3412 = vunpack.c.0.s8 %v3411
        %v3413 = vlaneseq
        %v3414 = vshrl.u32 %v3413, 7
        %v3415 = vsub.s32 %v3412, %v3414
        %v3416 = vrot.slane %v3406, %v3415
        %v3418 = vunpack.c.l.s4 1966171168
        %v3419 = vunpack.c.0.s8 %v3418
        %v3420 = vlaneseq
        %v3421 = vshrl.u32 %v3420, 7
        %v3422 = vsub.s32 %v3419, %v3421
        %v3423 = vrot.slane %v3407, %v3422
        %v3425 = vunpack.c.l.s4 1966171168
        %v3426 = vunpack.c.0.s8 %v3425
        %v3427 = vlaneseq
        %v3428 = vshrl.u32 %v3427, 7
        %v3429 = vsub.s32 %v3426, %v3428
        %v3430 = vrot.slane %v3408, %v3429
        %v3432 = vunpack.c.l.s4 1966171168
        %v3433 = vunpack.c.0.s8 %v3432
        %v3434 = vlaneseq
        %v3435 = vshrl.u32 %v3434, 7
        %v3436 = vsub.s32 %v3433, %v3435
        %v3437 = vrot.slane %v3409, %v3436
        %v3438 = vcombine.low %v3416, %v3423
        %v3439 = vcombine.low %v3430, %v3437
        %v3441 = vunpack.c.l.s4 1966171168
        %v3442 = vunpack.c.0.s8 %v3441
        %v3443 = vlaneseq
        %v3444 = vshrl.u32 %v3443, 7
        %v3445 = vsub.s32 %v3442, %v3444
        %v3446 = vrot.slane %v3438, %v3445
        %v3448 = vunpack.c.l.s4 1966171168
        %v3449 = vunpack.c.0.s8 %v3448
        %v3450 = vlaneseq
        %v3451 = vshrl.u32 %v3450, 7
        %v3452 = vsub.s32 %v3449, %v3451
        %v3453 = vrot.slane %v3439, %v3452
        %v3454 = vcombine.low %v3446, %v3453
        %v3455 = vcombine.low %v2213, %v2217
        %v3456 = vcombine.low %v2221, %v2225
        %v3457 = vcombine.low %v2229, %v2233
        %v3458 = vcombine.low %v2237, %v2241
        %v3460 = vunpack.c.l.s4 1966171168
        %v3461 = vunpack.c.0.s8 %v3460
        %v3462 = vlaneseq
        %v3463 = vshrl.u32 %v3462, 7
        %v3464 = vsub.s32 %v3461, %v3463
        %v3465 = vrot.slane %v3455, %v3464
        %v3467 = vunpack.c.l.s4 1966171168
        %v3468 = vunpack.c.0.s8 %v3467
        %v3469 = vlaneseq
        %v3470 = vshrl.u32 %v3469, 7
        %v3471 = vsub.s32 %v3468, %v3470
        %v3472 = vrot.slane %v3456, %v3471
        %v3474 = vunpack.c.l.s4 1966171168
        %v3475 = vunpack.c.0.s8 %v3474
        %v3476 = vlaneseq
        %v3477 = vshrl.u32 %v3476, 7
        %v3478 = vsub.s32 %v3475, %v3477
        %v3479 = vrot.slane %v3457, %v3478
        %v3481 = vunpack.c.l.s4 1966171168
        %v3482 = vunpack.c.0.s8 %v3481
        %v3483 = vlaneseq
        %v3484 = vshrl.u32 %v3483, 7
        %v3485 = vsub.s32 %v3482, %v3484
        %v3486 = vrot.slane %v3458, %v3485
        %v3487 = vcombine.low %v3465, %v3472
        %v3488 = vcombine.low %v3479, %v3486
        %v3490 = vunpack.c.l.s4 1966171168
        %v3491 = vunpack.c.0.s8 %v3490
        %v3492 = vlaneseq
        %v3493 = vshrl.u32 %v3492, 7
        %v3494 = vsub.s32 %v3491, %v3493
        %v3495 = vrot.slane %v3487, %v3494
        %v3497 = vunpack.c.l.s4 1966171168
        %v3498 = vunpack.c.0.s8 %v3497
        %v3499 = vlaneseq
        %v3500 = vshrl.u32 %v3499, 7
        %v3501 = vsub.s32 %v3498, %v3500
        %v3502 = vrot.slane %v3488, %v3501
        %v3503 = vcombine.low %v3495, %v3502
        %v3504 = vcombine.low %v2245, %v2249
        %v3505 = vcombine.low %v2253, %v2257
        %v3506 = vcombine.low %v2261, %v2265
        %v3507 = vcombine.low %v2269, %v2273
        %v3509 = vunpack.c.l.s4 1966171168
        %v3510 = vunpack.c.0.s8 %v3509
        %v3511 = vlaneseq
        %v3512 = vshrl.u32 %v3511, 7
        %v3513 = vsub.s32 %v3510, %v3512
        %v3514 = vrot.slane %v3504, %v3513
        %v3516 = vunpack.c.l.s4 1966171168
        %v3517 = vunpack.c.0.s8 %v3516
        %v3518 = vlaneseq
        %v3519 = vshrl.u32 %v3518, 7
        %v3520 = vsub.s32 %v3517, %v3519
        %v3521 = vrot.slane %v3505, %v3520
        %v3523 = vunpack.c.l.s4 1966171168
        %v3524 = vunpack.c.0.s8 %v3523
        %v3525 = vlaneseq
        %v3526 = vshrl.u32 %v3525, 7
        %v3527 = vsub.s32 %v3524, %v3526
        %v3528 = vrot.slane %v3506, %v3527
        %v3530 = vunpack.c.l.s4 1966171168
        %v3531 = vunpack.c.0.s8 %v3530
        %v3532 = vlaneseq
        %v3533 = vshrl.u32 %v3532, 7
        %v3534 = vsub.s32 %v3531, %v3533
        %v3535 = vrot.slane %v3507, %v3534
        %v3536 = vcombine.low %v3514, %v3521
        %v3537 = vcombine.low %v3528, %v3535
        %v3539 = vunpack.c.l.s4 1966171168
        %v3540 = vunpack.c.0.s8 %v3539
        %v3541 = vlaneseq
        %v3542 = vshrl.u32 %v3541, 7
        %v3543 = vsub.s32 %v3540, %v3542
        %v3544 = vrot.slane %v3536, %v3543
        %v3546 = vunpack.c.l.s4 1966171168
        %v3547 = vunpack.c.0.s8 %v3546
        %v3548 = vlaneseq
        %v3549 = vshrl.u32 %v3548, 7
        %v3550 = vsub.s32 %v3547, %v3549
        %v3551 = vrot.slane %v3537, %v3550
        %v3552 = vcombine.low %v3544, %v3551
        %v3553 = vcombine.low %v2277, %v2281
        %v3554 = vcombine.low %v2285, %v2289
        %v3555 = vcombine.low %v2293, %v2297
        %v3556 = vcombine.low %v2301, %v2305
        %v3558 = vunpack.c.l.s4 1966171168
        %v3559 = vunpack.c.0.s8 %v3558
        %v3560 = vlaneseq
        %v3561 = vshrl.u32 %v3560, 7
        %v3562 = vsub.s32 %v3559, %v3561
        %v3563 = vrot.slane %v3553, %v3562
        %v3565 = vunpack.c.l.s4 1966171168
        %v3566 = vunpack.c.0.s8 %v3565
        %v3567 = vlaneseq
        %v3568 = vshrl.u32 %v3567, 7
        %v3569 = vsub.s32 %v3566, %v3568
        %v3570 = vrot.slane %v3554, %v3569
        %v3572 = vunpack.c.l.s4 1966171168
        %v3573 = vunpack.c.0.s8 %v3572
        %v3574 = vlaneseq
        %v3575 = vshrl.u32 %v3574, 7
        %v3576 = vsub.s32 %v3573, %v3575
        %v3577 = vrot.slane %v3555, %v3576
        %v3579 = vunpack.c.l.s4 1966171168
        %v3580 = vunpack.c.0.s8 %v3579
        %v3581 = vlaneseq
        %v3582 = vshrl.u32 %v3581, 7
        %v3583 = vsub.s32 %v3580, %v3582
        %v3584 = vrot.slane %v3556, %v3583
        %v3585 = vcombine.low %v3563, %v3570
        %v3586 = vcombine.low %v3577, %v3584
        %v3588 = vunpack.c.l.s4 1966171168
        %v3589 = vunpack.c.0.s8 %v3588
        %v3590 = vlaneseq
        %v3591 = vshrl.u32 %v3590, 7
        %v3592 = vsub.s32 %v3589, %v3591
        %v3593 = vrot.slane %v3585, %v3592
        %v3595 = vunpack.c.l.s4 1966171168
        %v3596 = vunpack.c.0.s8 %v3595
        %v3597 = vlaneseq
        %v3598 = vshrl.u32 %v3597, 7
        %v3599 = vsub.s32 %v3596, %v3598
        %v3600 = vrot.slane %v3586, %v3599
        %v3601 = vcombine.low %v3593, %v3600
        %v3602 = vcombine.low %v2309, %v2313
        %v3603 = vcombine.low %v2317, %v2321
        %v3604 = vcombine.low %v2325, %v2329
        %v3605 = vcombine.low %v2333, %v2337
        %v3607 = vunpack.c.l.s4 1966171168
        %v3608 = vunpack.c.0.s8 %v3607
        %v3609 = vlaneseq
        %v3610 = vshrl.u32 %v3609, 7
        %v3611 = vsub.s32 %v3608, %v3610
        %v3612 = vrot.slane %v3602, %v3611
        %v3614 = vunpack.c.l.s4 1966171168
        %v3615 = vunpack.c.0.s8 %v3614
        %v3616 = vlaneseq
        %v3617 = vshrl.u32 %v3616, 7
        %v3618 = vsub.s32 %v3615, %v3617
        %v3619 = vrot.slane %v3603, %v3618
        %v3621 = vunpack.c.l.s4 1966171168
        %v3622 = vunpack.c.0.s8 %v3621
        %v3623 = vlaneseq
        %v3624 = vshrl.u32 %v3623, 7
        %v3625 = vsub.s32 %v3622, %v3624
        %v3626 = vrot.slane %v3604, %v3625
        %v3628 = vunpack.c.l.s4 1966171168
        %v3629 = vunpack.c.0.s8 %v3628
        %v3630 = vlaneseq
        %v3631 = vshrl.u32 %v3630, 7
        %v3632 = vsub.s32 %v3629, %v3631
        %v3633 = vrot.slane %v3605, %v3632
        %v3634 = vcombine.low %v3612, %v3619
        %v3635 = vcombine.low %v3626, %v3633
        %v3637 = vunpack.c.l.s4 1966171168
        %v3638 = vunpack.c.0.s8 %v3637
        %v3639 = vlaneseq
        %v3640 = vshrl.u32 %v3639, 7
        %v3641 = vsub.s32 %v3638, %v3640
        %v3642 = vrot.slane %v3634, %v3641
        %v3644 = vunpack.c.l.s4 1966171168
        %v3645 = vunpack.c.0.s8 %v3644
        %v3646 = vlaneseq
        %v3647 = vshrl.u32 %v3646, 7
        %v3648 = vsub.s32 %v3645, %v3647
        %v3649 = vrot.slane %v3635, %v3648
        %v3650 = vcombine.low %v3642, %v3649
        %v3651 = vcombine.low %v2341, %v2345
        %v3652 = vcombine.low %v2349, %v2353
        %v3653 = vcombine.low %v2357, %v2361
        %v3654 = vcombine.low %v2365, %v2369
        %v3656 = vunpack.c.l.s4 1966171168
        %v3657 = vunpack.c.0.s8 %v3656
        %v3658 = vlaneseq
        %v3659 = vshrl.u32 %v3658, 7
        %v3660 = vsub.s32 %v3657, %v3659
        %v3661 = vrot.slane %v3651, %v3660
        %v3663 = vunpack.c.l.s4 1966171168
        %v3664 = vunpack.c.0.s8 %v3663
        %v3665 = vlaneseq
        %v3666 = vshrl.u32 %v3665, 7
        %v3667 = vsub.s32 %v3664, %v3666
        %v3668 = vrot.slane %v3652, %v3667
        %v3670 = vunpack.c.l.s4 1966171168
        %v3671 = vunpack.c.0.s8 %v3670
        %v3672 = vlaneseq
        %v3673 = vshrl.u32 %v3672, 7
        %v3674 = vsub.s32 %v3671, %v3673
        %v3675 = vrot.slane %v3653, %v3674
        %v3677 = vunpack.c.l.s4 1966171168
        %v3678 = vunpack.c.0.s8 %v3677
        %v3679 = vlaneseq
        %v3680 = vshrl.u32 %v3679, 7
        %v3681 = vsub.s32 %v3678, %v3680
        %v3682 = vrot.slane %v3654, %v3681
        %v3683 = vcombine.low %v3661, %v3668
        %v3684 = vcombine.low %v3675, %v3682
        %v3686 = vunpack.c.l.s4 1966171168
        %v3687 = vunpack.c.0.s8 %v3686
        %v3688 = vlaneseq
        %v3689 = vshrl.u32 %v3688, 7
        %v3690 = vsub.s32 %v3687, %v3689
        %v3691 = vrot.slane %v3683, %v3690
        %v3693 = vunpack.c.l.s4 1966171168
        %v3694 = vunpack.c.0.s8 %v3693
        %v3695 = vlaneseq
        %v3696 = vshrl.u32 %v3695, 7
        %v3697 = vsub.s32 %v3694, %v3696
        %v3698 = vrot.slane %v3684, %v3697
        %v3699 = vcombine.low %v3691, %v3698
        %v3700 = vcombine.low %v2373, %v2377
        %v3701 = vcombine.low %v2381, %v2385
        %v3702 = vcombine.low %v2389, %v2393
        %v3703 = vcombine.low %v2397, %v2401
        %v3705 = vunpack.c.l.s4 1966171168
        %v3706 = vunpack.c.0.s8 %v3705
        %v3707 = vlaneseq
        %v3708 = vshrl.u32 %v3707, 7
        %v3709 = vsub.s32 %v3706, %v3708
        %v3710 = vrot.slane %v3700, %v3709
        %v3712 = vunpack.c.l.s4 1966171168
        %v3713 = vunpack.c.0.s8 %v3712
        %v3714 = vlaneseq
        %v3715 = vshrl.u32 %v3714, 7
        %v3716 = vsub.s32 %v3713, %v3715
        %v3717 = vrot.slane %v3701, %v3716
        %v3719 = vunpack.c.l.s4 1966171168
        %v3720 = vunpack.c.0.s8 %v3719
        %v3721 = vlaneseq
        %v3722 = vshrl.u32 %v3721, 7
        %v3723 = vsub.s32 %v3720, %v3722
        %v3724 = vrot.slane %v3702, %v3723
        %v3726 = vunpack.c.l.s4 1966171168
        %v3727 = vunpack.c.0.s8 %v3726
        %v3728 = vlaneseq
        %v3729 = vshrl.u32 %v3728, 7
        %v3730 = vsub.s32 %v3727, %v3729
        %v3731 = vrot.slane %v3703, %v3730
        %v3732 = vcombine.low %v3710, %v3717
        %v3733 = vcombine.low %v3724, %v3731
        %v3735 = vunpack.c.l.s4 1966171168
        %v3736 = vunpack.c.0.s8 %v3735
        %v3737 = vlaneseq
        %v3738 = vshrl.u32 %v3737, 7
        %v3739 = vsub.s32 %v3736, %v3738
        %v3740 = vrot.slane %v3732, %v3739
        %v3742 = vunpack.c.l.s4 1966171168
        %v3743 = vunpack.c.0.s8 %v3742
        %v3744 = vlaneseq
        %v3745 = vshrl.u32 %v3744, 7
        %v3746 = vsub.s32 %v3743, %v3745
        %v3747 = vrot.slane %v3733, %v3746
        %v3748 = vcombine.low %v3740, %v3747
        %v3749 = vcombine.low %v2405, %v2409
        %v3750 = vcombine.low %v2413, %v2417
        %v3751 = vcombine.low %v2421, %v2425
        %v3752 = vcombine.low %v2429, %v2433
        %v3754 = vunpack.c.l.s4 1966171168
        %v3755 = vunpack.c.0.s8 %v3754
        %v3756 = vlaneseq
        %v3757 = vshrl.u32 %v3756, 7
        %v3758 = vsub.s32 %v3755, %v3757
        %v3759 = vrot.slane %v3749, %v3758
        %v3761 = vunpack.c.l.s4 1966171168
        %v3762 = vunpack.c.0.s8 %v3761
        %v3763 = vlaneseq
        %v3764 = vshrl.u32 %v3763, 7
        %v3765 = vsub.s32 %v3762, %v3764
        %v3766 = vrot.slane %v3750, %v3765
        %v3768 = vunpack.c.l.s4 1966171168
        %v3769 = vunpack.c.0.s8 %v3768
        %v3770 = vlaneseq
        %v3771 = vshrl.u32 %v3770, 7
        %v3772 = vsub.s32 %v3769, %v3771
        %v3773 = vrot.slane %v3751, %v3772
        %v3775 = vunpack.c.l.s4 1966171168
        %v3776 = vunpack.c.0.s8 %v3775
        %v3777 = vlaneseq
        %v3778 = vshrl.u32 %v3777, 7
        %v3779 = vsub.s32 %v3776, %v3778
        %v3780 = vrot.slane %v3752, %v3779
        %v3781 = vcombine.low %v3759, %v3766
        %v3782 = vcombine.low %v3773, %v3780
        %v3784 = vunpack.c.l.s4 1966171168
        %v3785 = vunpack.c.0.s8 %v3784
        %v3786 = vlaneseq
        %v3787 = vshrl.u32 %v3786, 7
        %v3788 = vsub.s32 %v3785, %v3787
        %v3789 = vrot.slane %v3781, %v3788
        %v3791 = vunpack.c.l.s4 1966171168
        %v3792 = vunpack.c.0.s8 %v3791
        %v3793 = vlaneseq
        %v3794 = vshrl.u32 %v3793, 7
        %v3795 = vsub.s32 %v3792, %v3794
        %v3796 = vrot.slane %v3782, %v3795
        %v3797 = vcombine.low %v3789, %v3796
        %v3798 = vcombine.low %v2437, %v2441
        %v3799 = vcombine.low %v2445, %v2449
        %v3800 = vcombine.low %v2453, %v2457
        %v3801 = vcombine.low %v2461, %v2465
        %v3803 = vunpack.c.l.s4 1966171168
        %v3804 = vunpack.c.0.s8 %v3803
        %v3805 = vlaneseq
        %v3806 = vshrl.u32 %v3805, 7
        %v3807 = vsub.s32 %v3804, %v3806
        %v3808 = vrot.slane %v3798, %v3807
        %v3810 = vunpack.c.l.s4 1966171168
        %v3811 = vunpack.c.0.s8 %v3810
        %v3812 = vlaneseq
        %v3813 = vshrl.u32 %v3812, 7
        %v3814 = vsub.s32 %v3811, %v3813
        %v3815 = vrot.slane %v3799, %v3814
        %v3817 = vunpack.c.l.s4 1966171168
        %v3818 = vunpack.c.0.s8 %v3817
        %v3819 = vlaneseq
        %v3820 = vshrl.u32 %v3819, 7
        %v3821 = vsub.s32 %v3818, %v3820
        %v3822 = vrot.slane %v3800, %v3821
        %v3824 = vunpack.c.l.s4 1966171168
        %v3825 = vunpack.c.0.s8 %v3824
        %v3826 = vlaneseq
        %v3827 = vshrl.u32 %v3826, 7
        %v3828 = vsub.s32 %v3825, %v3827
        %v3829 = vrot.slane %v3801, %v3828
        %v3830 = vcombine.low %v3808, %v3815
        %v3831 = vcombine.low %v3822, %v3829
        %v3833 = vunpack.c.l.s4 1966171168
        %v3834 = vunpack.c.0.s8 %v3833
        %v3835 = vlaneseq
        %v3836 = vshrl.u32 %v3835, 7
        %v3837 = vsub.s32 %v3834, %v3836
        %v3838 = vrot.slane %v3830, %v3837
        %v3840 = vunpack.c.l.s4 1966171168
        %v3841 = vunpack.c.0.s8 %v3840
        %v3842 = vlaneseq
        %v3843 = vshrl.u32 %v3842, 7
        %v3844 = vsub.s32 %v3841, %v3843
        %v3845 = vrot.slane %v3831, %v3844
        %v3846 = vcombine.low %v3838, %v3845
        %v3847 = vcombine.low %v2469, %v2473
        %v3848 = vcombine.low %v2477, %v2481
        %v3849 = vcombine.low %v2485, %v2489
        %v3850 = vcombine.low %v2493, %v2497
        %v3852 = vunpack.c.l.s4 1966171168
        %v3853 = vunpack.c.0.s8 %v3852
        %v3854 = vlaneseq
        %v3855 = vshrl.u32 %v3854, 7
        %v3856 = vsub.s32 %v3853, %v3855
        %v3857 = vrot.slane %v3847, %v3856
        %v3859 = vunpack.c.l.s4 1966171168
        %v3860 = vunpack.c.0.s8 %v3859
        %v3861 = vlaneseq
        %v3862 = vshrl.u32 %v3861, 7
        %v3863 = vsub.s32 %v3860, %v3862
        %v3864 = vrot.slane %v3848, %v3863
        %v3866 = vunpack.c.l.s4 1966171168
        %v3867 = vunpack.c.0.s8 %v3866
        %v3868 = vlaneseq
        %v3869 = vshrl.u32 %v3868, 7
        %v3870 = vsub.s32 %v3867, %v3869
        %v3871 = vrot.slane %v3849, %v3870
        %v3873 = vunpack.c.l.s4 1966171168
        %v3874 = vunpack.c.0.s8 %v3873
        %v3875 = vlaneseq
        %v3876 = vshrl.u32 %v3875, 7
        %v3877 = vsub.s32 %v3874, %v3876
        %v3878 = vrot.slane %v3850, %v3877
        %v3879 = vcombine.low %v3857, %v3864
        %v3880 = vcombine.low %v3871, %v3878
        %v3882 = vunpack.c.l.s4 1966171168
        %v3883 = vunpack.c.0.s8 %v3882
        %v3884 = vlaneseq
        %v3885 = vshrl.u32 %v3884, 7
        %v3886 = vsub.s32 %v3883, %v3885
        %v3887 = vrot.slane %v3879, %v3886
        %v3889 = vunpack.c.l.s4 1966171168
        %v3890 = vunpack.c.0.s8 %v3889
        %v3891 = vlaneseq
        %v3892 = vshrl.u32 %v3891, 7
        %v3893 = vsub.s32 %v3890, %v3892
        %v3894 = vrot.slane %v3880, %v3893
        %v3895 = vcombine.low %v3887, %v3894
        %v3896 = vcombine.low %v2501, %v2505
        %v3897 = vcombine.low %v2509, %v2513
        %v3898 = vcombine.low %v2517, %v2521
        %v3899 = vcombine.low %v2525, %v2529
        %v3901 = vunpack.c.l.s4 1966171168
        %v3902 = vunpack.c.0.s8 %v3901
        %v3903 = vlaneseq
        %v3904 = vshrl.u32 %v3903, 7
        %v3905 = vsub.s32 %v3902, %v3904
        %v3906 = vrot.slane %v3896, %v3905
        %v3908 = vunpack.c.l.s4 1966171168
        %v3909 = vunpack.c.0.s8 %v3908
        %v3910 = vlaneseq
        %v3911 = vshrl.u32 %v3910, 7
        %v3912 = vsub.s32 %v3909, %v3911
        %v3913 = vrot.slane %v3897, %v3912
        %v3915 = vunpack.c.l.s4 1966171168
        %v3916 = vunpack.c.0.s8 %v3915
        %v3917 = vlaneseq
        %v3918 = vshrl.u32 %v3917, 7
        %v3919 = vsub.s32 %v3916, %v3918
        %v3920 = vrot.slane %v3898, %v3919
        %v3922 = vunpack.c.l.s4 1966171168
        %v3923 = vunpack.c.0.s8 %v3922
        %v3924 = vlaneseq
        %v3925 = vshrl.u32 %v3924, 7
        %v3926 = vsub.s32 %v3923, %v3925
        %v3927 = vrot.slane %v3899, %v3926
        %v3928 = vcombine.low %v3906, %v3913
        %v3929 = vcombine.low %v3920, %v3927
        %v3931 = vunpack.c.l.s4 1966171168
        %v3932 = vunpack.c.0.s8 %v3931
        %v3933 = vlaneseq
        %v3934 = vshrl.u32 %v3933, 7
        %v3935 = vsub.s32 %v3932, %v3934
        %v3936 = vrot.slane %v3928, %v3935
        %v3938 = vunpack.c.l.s4 1966171168
        %v3939 = vunpack.c.0.s8 %v3938
        %v3940 = vlaneseq
        %v3941 = vshrl.u32 %v3940, 7
        %v3942 = vsub.s32 %v3939, %v3941
        %v3943 = vrot.slane %v3929, %v3942
        %v3944 = vcombine.low %v3936, %v3943
        %v3945 = vcombine.low %v2533, %v2537
        %v3946 = vcombine.low %v2541, %v2545
        %v3947 = vcombine.low %v2549, %v2553
        %v3948 = vcombine.low %v2557, %v2561
        %v3950 = vunpack.c.l.s4 1966171168
        %v3951 = vunpack.c.0.s8 %v3950
        %v3952 = vlaneseq
        %v3953 = vshrl.u32 %v3952, 7
        %v3954 = vsub.s32 %v3951, %v3953
        %v3955 = vrot.slane %v3945, %v3954
        %v3957 = vunpack.c.l.s4 1966171168
        %v3958 = vunpack.c.0.s8 %v3957
        %v3959 = vlaneseq
        %v3960 = vshrl.u32 %v3959, 7
        %v3961 = vsub.s32 %v3958, %v3960
        %v3962 = vrot.slane %v3946, %v3961
        %v3964 = vunpack.c.l.s4 1966171168
        %v3965 = vunpack.c.0.s8 %v3964
        %v3966 = vlaneseq
        %v3967 = vshrl.u32 %v3966, 7
        %v3968 = vsub.s32 %v3965, %v3967
        %v3969 = vrot.slane %v3947, %v3968
        %v3971 = vunpack.c.l.s4 1966171168
        %v3972 = vunpack.c.0.s8 %v3971
        %v3973 = vlaneseq
        %v3974 = vshrl.u32 %v3973, 7
        %v3975 = vsub.s32 %v3972, %v3974
        %v3976 = vrot.slane %v3948, %v3975
        %v3977 = vcombine.low %v3955, %v3962
        %v3978 = vcombine.low %v3969, %v3976
        %v3980 = vunpack.c.l.s4 1966171168
        %v3981 = vunpack.c.0.s8 %v3980
        %v3982 = vlaneseq
        %v3983 = vshrl.u32 %v3982, 7
        %v3984 = vsub.s32 %v3981, %v3983
        %v3985 = vrot.slane %v3977, %v3984
        %v3987 = vunpack.c.l.s4 1966171168
        %v3988 = vunpack.c.0.s8 %v3987
        %v3989 = vlaneseq
        %v3990 = vshrl.u32 %v3989, 7
        %v3991 = vsub.s32 %v3988, %v3990
        %v3992 = vrot.slane %v3978, %v3991
        %v3993 = vcombine.low %v3985, %v3992
        %v3994 = vcombine.low %v2565, %v2569
        %v3995 = vcombine.low %v2573, %v2577
        %v3996 = vcombine.low %v2581, %v2585
        %v3997 = vcombine.low %v2589, %v2593
        %v3999 = vunpack.c.l.s4 1966171168
        %v4000 = vunpack.c.0.s8 %v3999
        %v4001 = vlaneseq
        %v4002 = vshrl.u32 %v4001, 7
        %v4003 = vsub.s32 %v4000, %v4002
        %v4004 = vrot.slane %v3994, %v4003
        %v4006 = vunpack.c.l.s4 1966171168
        %v4007 = vunpack.c.0.s8 %v4006
        %v4008 = vlaneseq
        %v4009 = vshrl.u32 %v4008, 7
        %v4010 = vsub.s32 %v4007, %v4009
        %v4011 = vrot.slane %v3995, %v4010
        %v4013 = vunpack.c.l.s4 1966171168
        %v4014 = vunpack.c.0.s8 %v4013
        %v4015 = vlaneseq
        %v4016 = vshrl.u32 %v4015, 7
        %v4017 = vsub.s32 %v4014, %v4016
        %v4018 = vrot.slane %v3996, %v4017
        %v4020 = vunpack.c.l.s4 1966171168
        %v4021 = vunpack.c.0.s8 %v4020
        %v4022 = vlaneseq
        %v4023 = vshrl.u32 %v4022, 7
        %v4024 = vsub.s32 %v4021, %v4023
        %v4025 = vrot.slane %v3997, %v4024
        %v4026 = vcombine.low %v4004, %v4011
        %v4027 = vcombine.low %v4018, %v4025
        %v4029 = vunpack.c.l.s4 1966171168
        %v4030 = vunpack.c.0.s8 %v4029
        %v4031 = vlaneseq
        %v4032 = vshrl.u32 %v4031, 7
        %v4033 = vsub.s32 %v4030, %v4032
        %v4034 = vrot.slane %v4026, %v4033
        %v4036 = vunpack.c.l.s4 1966171168
        %v4037 = vunpack.c.0.s8 %v4036
        %v4038 = vlaneseq
        %v4039 = vshrl.u32 %v4038, 7
        %v4040 = vsub.s32 %v4037, %v4039
        %v4041 = vrot.slane %v4027, %v4040
        %v4042 = vcombine.low %v4034, %v4041
        %v4043 = vcombine.low %v2597, %v2601
        %v4044 = vcombine.low %v2605, %v2609
        %v4045 = vcombine.low %v2613, %v2617
        %v4046 = vcombine.low %v2621, %v2625
        %v4048 = vunpack.c.l.s4 1966171168
        %v4049 = vunpack.c.0.s8 %v4048
        %v4050 = vlaneseq
        %v4051 = vshrl.u32 %v4050, 7
        %v4052 = vsub.s32 %v4049, %v4051
        %v4053 = vrot.slane %v4043, %v4052
        %v4055 = vunpack.c.l.s4 1966171168
        %v4056 = vunpack.c.0.s8 %v4055
        %v4057 = vlaneseq
        %v4058 = vshrl.u32 %v4057, 7
        %v4059 = vsub.s32 %v4056, %v4058
        %v4060 = vrot.slane %v4044, %v4059
        %v4062 = vunpack.c.l.s4 1966171168
        %v4063 = vunpack.c.0.s8 %v4062
        %v4064 = vlaneseq
        %v4065 = vshrl.u32 %v4064, 7
        %v4066 = vsub.s32 %v4063, %v4065
        %v4067 = vrot.slane %v4045, %v4066
        %v4069 = vunpack.c.l.s4 1966171168
        %v4070 = vunpack.c.0.s8 %v4069
        %v4071 = vlaneseq
        %v4072 = vshrl.u32 %v4071, 7
        %v4073 = vsub.s32 %v4070, %v4072
        %v4074 = vrot.slane %v4046, %v4073
        %v4075 = vcombine.low %v4053, %v4060
        %v4076 = vcombine.low %v4067, %v4074
        %v4078 = vunpack.c.l.s4 1966171168
        %v4079 = vunpack.c.0.s8 %v4078
        %v4080 = vlaneseq
        %v4081 = vshrl.u32 %v4080, 7
        %v4082 = vsub.s32 %v4079, %v4081
        %v4083 = vrot.slane %v4075, %v4082
        %v4085 = vunpack.c.l.s4 1966171168
        %v4086 = vunpack.c.0.s8 %v4085
        %v4087 = vlaneseq
        %v4088 = vshrl.u32 %v4087, 7
        %v4089 = vsub.s32 %v4086, %v4088
        %v4090 = vrot.slane %v4076, %v4089
        %v4091 = vcombine.low %v4083, %v4090
        %v4092 = vcombine.low %v2629, %v2633
        %v4093 = vcombine.low %v2637, %v2641
        %v4094 = vcombine.low %v2645, %v2649
        %v4095 = vcombine.low %v2653, %v2657
        %v4097 = vunpack.c.l.s4 1966171168
        %v4098 = vunpack.c.0.s8 %v4097
        %v4099 = vlaneseq
        %v4100 = vshrl.u32 %v4099, 7
        %v4101 = vsub.s32 %v4098, %v4100
        %v4102 = vrot.slane %v4092, %v4101
        %v4104 = vunpack.c.l.s4 1966171168
        %v4105 = vunpack.c.0.s8 %v4104
        %v4106 = vlaneseq
        %v4107 = vshrl.u32 %v4106, 7
        %v4108 = vsub.s32 %v4105, %v4107
        %v4109 = vrot.slane %v4093, %v4108
        %v4111 = vunpack.c.l.s4 1966171168
        %v4112 = vunpack.c.0.s8 %v4111
        %v4113 = vlaneseq
        %v4114 = vshrl.u32 %v4113, 7
        %v4115 = vsub.s32 %v4112, %v4114
        %v4116 = vrot.slane %v4094, %v4115
        %v4118 = vunpack.c.l.s4 1966171168
        %v4119 = vunpack.c.0.s8 %v4118
        %v4120 = vlaneseq
        %v4121 = vshrl.u32 %v4120, 7
        %v4122 = vsub.s32 %v4119, %v4121
        %v4123 = vrot.slane %v4095, %v4122
        %v4124 = vcombine.low %v4102, %v4109
        %v4125 = vcombine.low %v4116, %v4123
        %v4127 = vunpack.c.l.s4 1966171168
        %v4128 = vunpack.c.0.s8 %v4127
        %v4129 = vlaneseq
        %v4130 = vshrl.u32 %v4129, 7
        %v4131 = vsub.s32 %v4128, %v4130
        %v4132 = vrot.slane %v4124, %v4131
        %v4134 = vunpack.c.l.s4 1966171168
        %v4135 = vunpack.c.0.s8 %v4134
        %v4136 = vlaneseq
        %v4137 = vshrl.u32 %v4136, 7
        %v4138 = vsub.s32 %v4135, %v4137
        %v4139 = vrot.slane %v4125, %v4138
        %v4140 = vcombine.low %v4132, %v4139
        %v4141 = vcombine.low %v2661, %v2665
        %v4142 = vcombine.low %v2669, %v2673
        %v4143 = vcombine.low %v2677, %v2681
        %v4144 = vcombine.low %v2685, %v2689
        %v4146 = vunpack.c.l.s4 1966171168
        %v4147 = vunpack.c.0.s8 %v4146
        %v4148 = vlaneseq
        %v4149 = vshrl.u32 %v4148, 7
        %v4150 = vsub.s32 %v4147, %v4149
        %v4151 = vrot.slane %v4141, %v4150
        %v4153 = vunpack.c.l.s4 1966171168
        %v4154 = vunpack.c.0.s8 %v4153
        %v4155 = vlaneseq
        %v4156 = vshrl.u32 %v4155, 7
        %v4157 = vsub.s32 %v4154, %v4156
        %v4158 = vrot.slane %v4142, %v4157
        %v4160 = vunpack.c.l.s4 1966171168
        %v4161 = vunpack.c.0.s8 %v4160
        %v4162 = vlaneseq
        %v4163 = vshrl.u32 %v4162, 7
        %v4164 = vsub.s32 %v4161, %v4163
        %v4165 = vrot.slane %v4143, %v4164
        %v4167 = vunpack.c.l.s4 1966171168
        %v4168 = vunpack.c.0.s8 %v4167
        %v4169 = vlaneseq
        %v4170 = vshrl.u32 %v4169, 7
        %v4171 = vsub.s32 %v4168, %v4170
        %v4172 = vrot.slane %v4144, %v4171
        %v4173 = vcombine.low %v4151, %v4158
        %v4174 = vcombine.low %v4165, %v4172
        %v4176 = vunpack.c.l.s4 1966171168
        %v4177 = vunpack.c.0.s8 %v4176
        %v4178 = vlaneseq
        %v4179 = vshrl.u32 %v4178, 7
        %v4180 = vsub.s32 %v4177, %v4179
        %v4181 = vrot.slane %v4173, %v4180
        %v4183 = vunpack.c.l.s4 1966171168
        %v4184 = vunpack.c.0.s8 %v4183
        %v4185 = vlaneseq
        %v4186 = vshrl.u32 %v4185, 7
        %v4187 = vsub.s32 %v4184, %v4186
        %v4188 = vrot.slane %v4174, %v4187
        %v4189 = vcombine.low %v4181, %v4188
        %v4190 = vcombine.low %v2693, %v2697
        %v4191 = vcombine.low %v2701, %v2705
        %v4192 = vcombine.low %v2709, %v2713
        %v4193 = vcombine.low %v2717, %v2721
        %v4195 = vunpack.c.l.s4 1966171168
        %v4196 = vunpack.c.0.s8 %v4195
        %v4197 = vlaneseq
        %v4198 = vshrl.u32 %v4197, 7
        %v4199 = vsub.s32 %v4196, %v4198
        %v4200 = vrot.slane %v4190, %v4199
        %v4202 = vunpack.c.l.s4 1966171168
        %v4203 = vunpack.c.0.s8 %v4202
        %v4204 = vlaneseq
        %v4205 = vshrl.u32 %v4204, 7
        %v4206 = vsub.s32 %v4203, %v4205
        %v4207 = vrot.slane %v4191, %v4206
        %v4209 = vunpack.c.l.s4 1966171168
        %v4210 = vunpack.c.0.s8 %v4209
        %v4211 = vlaneseq
        %v4212 = vshrl.u32 %v4211, 7
        %v4213 = vsub.s32 %v4210, %v4212
        %v4214 = vrot.slane %v4192, %v4213
        %v4216 = vunpack.c.l.s4 1966171168
        %v4217 = vunpack.c.0.s8 %v4216
        %v4218 = vlaneseq
        %v4219 = vshrl.u32 %v4218, 7
        %v4220 = vsub.s32 %v4217, %v4219
        %v4221 = vrot.slane %v4193, %v4220
        %v4222 = vcombine.low %v4200, %v4207
        %v4223 = vcombine.low %v4214, %v4221
        %v4225 = vunpack.c.l.s4 1966171168
        %v4226 = vunpack.c.0.s8 %v4225
        %v4227 = vlaneseq
        %v4228 = vshrl.u32 %v4227, 7
        %v4229 = vsub.s32 %v4226, %v4228
        %v4230 = vrot.slane %v4222, %v4229
        %v4232 = vunpack.c.l.s4 1966171168
        %v4233 = vunpack.c.0.s8 %v4232
        %v4234 = vlaneseq
        %v4235 = vshrl.u32 %v4234, 7
        %v4236 = vsub.s32 %v4233, %v4235
        %v4237 = vrot.slane %v4223, %v4236
        %v4238 = vcombine.low %v4230, %v4237
        %v4239 = vcombine.low %v2725, %v2729
        %v4240 = vcombine.low %v2733, %v2737
        %v4241 = vcombine.low %v2741, %v2745
        %v4242 = vcombine.low %v2749, %v2753
        %v4244 = vunpack.c.l.s4 1966171168
        %v4245 = vunpack.c.0.s8 %v4244
        %v4246 = vlaneseq
        %v4247 = vshrl.u32 %v4246, 7
        %v4248 = vsub.s32 %v4245, %v4247
        %v4249 = vrot.slane %v4239, %v4248
        %v4251 = vunpack.c.l.s4 1966171168
        %v4252 = vunpack.c.0.s8 %v4251
        %v4253 = vlaneseq
        %v4254 = vshrl.u32 %v4253, 7
        %v4255 = vsub.s32 %v4252, %v4254
        %v4256 = vrot.slane %v4240, %v4255
        %v4258 = vunpack.c.l.s4 1966171168
        %v4259 = vunpack.c.0.s8 %v4258
        %v4260 = vlaneseq
        %v4261 = vshrl.u32 %v4260, 7
        %v4262 = vsub.s32 %v4259, %v4261
        %v4263 = vrot.slane %v4241, %v4262
        %v4265 = vunpack.c.l.s4 1966171168
        %v4266 = vunpack.c.0.s8 %v4265
        %v4267 = vlaneseq
        %v4268 = vshrl.u32 %v4267, 7
        %v4269 = vsub.s32 %v4266, %v4268
        %v4270 = vrot.slane %v4242, %v4269
        %v4271 = vcombine.low %v4249, %v4256
        %v4272 = vcombine.low %v4263, %v4270
        %v4274 = vunpack.c.l.s4 1966171168
        %v4275 = vunpack.c.0.s8 %v4274
        %v4276 = vlaneseq
        %v4277 = vshrl.u32 %v4276, 7
        %v4278 = vsub.s32 %v4275, %v4277
        %v4279 = vrot.slane %v4271, %v4278
        %v4281 = vunpack.c.l.s4 1966171168
        %v4282 = vunpack.c.0.s8 %v4281
        %v4283 = vlaneseq
        %v4284 = vshrl.u32 %v4283, 7
        %v4285 = vsub.s32 %v4282, %v4284
        %v4286 = vrot.slane %v4272, %v4285
        %v4287 = vcombine.low %v4279, %v4286
        %v4288 = vcombine.low %v2757, %v2761
        %v4289 = vcombine.low %v2765, %v2769
        %v4290 = vcombine.low %v2773, %v2777
        %v4291 = vcombine.low %v2781, %v2785
        %v4293 = vunpack.c.l.s4 1966171168
        %v4294 = vunpack.c.0.s8 %v4293
        %v4295 = vlaneseq
        %v4296 = vshrl.u32 %v4295, 7
        %v4297 = vsub.s32 %v4294, %v4296
        %v4298 = vrot.slane %v4288, %v4297
        %v4300 = vunpack.c.l.s4 1966171168
        %v4301 = vunpack.c.0.s8 %v4300
        %v4302 = vlaneseq
        %v4303 = vshrl.u32 %v4302, 7
        %v4304 = vsub.s32 %v4301, %v4303
        %v4305 = vrot.slane %v4289, %v4304
        %v4307 = vunpack.c.l.s4 1966171168
        %v4308 = vunpack.c.0.s8 %v4307
        %v4309 = vlaneseq
        %v4310 = vshrl.u32 %v4309, 7
        %v4311 = vsub.s32 %v4308, %v4310
        %v4312 = vrot.slane %v4290, %v4311
        %v4314 = vunpack.c.l.s4 1966171168
        %v4315 = vunpack.c.0.s8 %v4314
        %v4316 = vlaneseq
        %v4317 = vshrl.u32 %v4316, 7
        %v4318 = vsub.s32 %v4315, %v4317
        %v4319 = vrot.slane %v4291, %v4318
        %v4320 = vcombine.low %v4298, %v4305
        %v4321 = vcombine.low %v4312, %v4319
        %v4323 = vunpack.c.l.s4 1966171168
        %v4324 = vunpack.c.0.s8 %v4323
        %v4325 = vlaneseq
        %v4326 = vshrl.u32 %v4325, 7
        %v4327 = vsub.s32 %v4324, %v4326
        %v4328 = vrot.slane %v4320, %v4327
        %v4330 = vunpack.c.l.s4 1966171168
        %v4331 = vunpack.c.0.s8 %v4330
        %v4332 = vlaneseq
        %v4333 = vshrl.u32 %v4332, 7
        %v4334 = vsub.s32 %v4331, %v4333
        %v4335 = vrot.slane %v4321, %v4334
        %v4336 = vcombine.low %v4328, %v4335
        %v4337 = vcombine.low %v2789, %v2793
        %v4338 = vcombine.low %v2797, %v2801
        %v4339 = vcombine.low %v2805, %v2809
        %v4340 = vcombine.low %v2813, %v2817
        %v4342 = vunpack.c.l.s4 1966171168
        %v4343 = vunpack.c.0.s8 %v4342
        %v4344 = vlaneseq
        %v4345 = vshrl.u32 %v4344, 7
        %v4346 = vsub.s32 %v4343, %v4345
        %v4347 = vrot.slane %v4337, %v4346
        %v4349 = vunpack.c.l.s4 1966171168
        %v4350 = vunpack.c.0.s8 %v4349
        %v4351 = vlaneseq
        %v4352 = vshrl.u32 %v4351, 7
        %v4353 = vsub.s32 %v4350, %v4352
        %v4354 = vrot.slane %v4338, %v4353
        %v4356 = vunpack.c.l.s4 1966171168
        %v4357 = vunpack.c.0.s8 %v4356
        %v4358 = vlaneseq
        %v4359 = vshrl.u32 %v4358, 7
        %v4360 = vsub.s32 %v4357, %v4359
        %v4361 = vrot.slane %v4339, %v4360
        %v4363 = vunpack.c.l.s4 1966171168
        %v4364 = vunpack.c.0.s8 %v4363
        %v4365 = vlaneseq
        %v4366 = vshrl.u32 %v4365, 7
        %v4367 = vsub.s32 %v4364, %v4366
        %v4368 = vrot.slane %v4340, %v4367
        %v4369 = vcombine.low %v4347, %v4354
        %v4370 = vcombine.low %v4361, %v4368
        %v4372 = vunpack.c.l.s4 1966171168
        %v4373 = vunpack.c.0.s8 %v4372
        %v4374 = vlaneseq
        %v4375 = vshrl.u32 %v4374, 7
        %v4376 = vsub.s32 %v4373, %v4375
        %v4377 = vrot.slane %v4369, %v4376
        %v4379 = vunpack.c.l.s4 1966171168
        %v4380 = vunpack.c.0.s8 %v4379
        %v4381 = vlaneseq
        %v4382 = vshrl.u32 %v4381, 7
        %v4383 = vsub.s32 %v4380, %v4382
        %v4384 = vrot.slane %v4370, %v4383
        %v4385 = vcombine.low %v4377, %v4384
        %4386 = vset.pattern.permute.xlu0 0
        %4387 = vperm.xlu0 %4386, %v2866
        %v4388 = vpop.permute.xlu0 %4387
        %4389 = vset.pattern.permute.xlu0 0
        %4390 = vperm.xlu0 %4389, %v2915
        %v4391 = vpop.permute.xlu0 %4390
        %4392 = vset.pattern.permute.xlu0 0
        %4393 = vperm.xlu0 %4392, %v2964
        %v4394 = vpop.permute.xlu0 %4393
        %4395 = vset.pattern.permute.xlu0 0
        %4396 = vperm.xlu0 %4395, %v3013
        %v4397 = vpop.permute.xlu0 %4396
        %4398 = vset.pattern.permute.xlu0 0
        %4399 = vperm.xlu0 %4398, %v3062
        %v4400 = vpop.permute.xlu0 %4399
        %4401 = vset.pattern.permute.xlu0 0
        %4402 = vperm.xlu0 %4401, %v3111
        %v4403 = vpop.permute.xlu0 %4402
        %4404 = vset.pattern.permute.xlu0 0
        %4405 = vperm.xlu0 %4404, %v3160
        %v4406 = vpop.permute.xlu0 %4405
        %4407 = vset.pattern.permute.xlu0 0
        %4408 = vperm.xlu0 %4407, %v3209
        %v4409 = vpop.permute.xlu0 %4408
        %4410 = vset.pattern.permute.xlu0 0
        %4411 = vperm.xlu0 %4410, %v3258
        %v4412 = vpop.permute.xlu0 %4411
        %4413 = vset.pattern.permute.xlu0 0
        %4414 = vperm.xlu0 %4413, %v3307
        %v4415 = vpop.permute.xlu0 %4414
        %4416 = vset.pattern.permute.xlu0 0
        %4417 = vperm.xlu0 %4416, %v3356
        %v4418 = vpop.permute.xlu0 %4417
        %4419 = vset.pattern.permute.xlu0 0
        %4420 = vperm.xlu0 %4419, %v3405
        %v4421 = vpop.permute.xlu0 %4420
        %4422 = vset.pattern.permute.xlu0 0
        %4423 = vperm.xlu0 %4422, %v3454
        %v4424 = vpop.permute.xlu0 %4423
        %4425 = vset.pattern.permute.xlu0 0
        %4426 = vperm.xlu0 %4425, %v3503
        %v4427 = vpop.permute.xlu0 %4426
        %4428 = vset.pattern.permute.xlu0 0
        %4429 = vperm.xlu0 %4428, %v3552
        %v4430 = vpop.permute.xlu0 %4429
        %4431 = vset.pattern.permute.xlu0 0
        %4432 = vperm.xlu0 %4431, %v3601
        %v4433 = vpop.permute.xlu0 %4432
        %4434 = vset.pattern.permute.xlu0 0
        %4435 = vperm.xlu0 %4434, %v3650
        %v4436 = vpop.permute.xlu0 %4435
        %4437 = vset.pattern.permute.xlu0 0
        %4438 = vperm.xlu0 %4437, %v3699
        %v4439 = vpop.permute.xlu0 %4438
        %4440 = vset.pattern.permute.xlu0 0
        %4441 = vperm.xlu0 %4440, %v3748
        %v4442 = vpop.permute.xlu0 %4441
        %4443 = vset.pattern.permute.xlu0 0
        %4444 = vperm.xlu0 %4443, %v3797
        %v4445 = vpop.permute.xlu0 %4444
        %4446 = vset.pattern.permute.xlu0 0
        %4447 = vperm.xlu0 %4446, %v3846
        %v4448 = vpop.permute.xlu0 %4447
        %4449 = vset.pattern.permute.xlu0 0
        %4450 = vperm.xlu0 %4449, %v3895
        %v4451 = vpop.permute.xlu0 %4450
        %4452 = vset.pattern.permute.xlu0 0
        %4453 = vperm.xlu0 %4452, %v3944
        %v4454 = vpop.permute.xlu0 %4453
        %4455 = vset.pattern.permute.xlu0 0
        %4456 = vperm.xlu0 %4455, %v3993
        %v4457 = vpop.permute.xlu0 %4456
        %4458 = vset.pattern.permute.xlu0 0
        %4459 = vperm.xlu0 %4458, %v4042
        %v4460 = vpop.permute.xlu0 %4459
        %4461 = vset.pattern.permute.xlu0 0
        %4462 = vperm.xlu0 %4461, %v4091
        %v4463 = vpop.permute.xlu0 %4462
        %4464 = vset.pattern.permute.xlu0 0
        %4465 = vperm.xlu0 %4464, %v4140
        %v4466 = vpop.permute.xlu0 %4465
        %4467 = vset.pattern.permute.xlu0 0
        %4468 = vperm.xlu0 %4467, %v4189
        %v4469 = vpop.permute.xlu0 %4468
        %4470 = vset.pattern.permute.xlu0 0
        %4471 = vperm.xlu0 %4470, %v4238
        %v4472 = vpop.permute.xlu0 %4471
        %4473 = vset.pattern.permute.xlu0 0
        %4474 = vperm.xlu0 %4473, %v4287
        %v4475 = vpop.permute.xlu0 %4474
        %4476 = vset.pattern.permute.xlu0 0
        %4477 = vperm.xlu0 %4476, %v4336
        %v4478 = vpop.permute.xlu0 %4477
        %4479 = vset.pattern.permute.xlu0 0
        %4480 = vperm.xlu0 %4479, %v4385
        %v4481 = vpop.permute.xlu0 %4480
        %v4482 = vlaneseq
        %v4483 = vand.u32 %v4482, 127
        %v4484 = vlaneseq
        %v4485 = vshrl.u32 %v4484, 7
        %v4486 = vsub.s32 %v4483, %v4485
        %v4487 = vrot.slane %v4388, %v4486
        %v4488 = vadd.s32 %v4483, 4294967288
        %v4489 = vlaneseq
        %v4490 = vshrl.u32 %v4489, 7
        %v4491 = vsub.s32 %v4488, %v4490
        %v4492 = vrot.slane %v4391, %v4491
        %vm4493 = vcmask 130112
        %v4494 = vsel %vm4493, %v4492, %v4487
        %v4495 = vadd.s32 %v4483, 4294967280
        %v4496 = vlaneseq
        %v4497 = vshrl.u32 %v4496, 7
        %v4498 = vsub.s32 %v4495, %v4497
        %v4499 = vrot.slane %v4394, %v4498
        %vm4500 = vcmask 195712
        %v4501 = vsel %vm4500, %v4499, %v4494
        %v4502 = vadd.s32 %v4483, 4294967272
        %v4503 = vlaneseq
        %v4504 = vshrl.u32 %v4503, 7
        %v4505 = vsub.s32 %v4502, %v4504
        %v4506 = vrot.slane %v4397, %v4505
        %vm4507 = vcmask 261312
        %v4508 = vsel %vm4507, %v4506, %v4501
        %v4509 = vadd.s32 %v4483, 4294967264
        %v4510 = vlaneseq
        %v4511 = vshrl.u32 %v4510, 7
        %v4512 = vsub.s32 %v4509, %v4511
        %v4513 = vrot.slane %v4400, %v4512
        %vm4514 = vcmask 326912
        %v4515 = vsel %vm4514, %v4513, %v4508
        %v4516 = vadd.s32 %v4483, 4294967256
        %v4517 = vlaneseq
        %v4518 = vshrl.u32 %v4517, 7
        %v4519 = vsub.s32 %v4516, %v4518
        %v4520 = vrot.slane %v4403, %v4519
        %vm4521 = vcmask 392512
        %v4522 = vsel %vm4521, %v4520, %v4515
        %v4523 = vadd.s32 %v4483, 4294967248
        %v4524 = vlaneseq
        %v4525 = vshrl.u32 %v4524, 7
        %v4526 = vsub.s32 %v4523, %v4525
        %v4527 = vrot.slane %v4406, %v4526
        %vm4528 = vcmask 458112
        %v4529 = vsel %vm4528, %v4527, %v4522
        %v4530 = vadd.s32 %v4483, 4294967240
        %v4531 = vlaneseq
        %v4532 = vshrl.u32 %v4531, 7
        %v4533 = vsub.s32 %v4530, %v4532
        %v4534 = vrot.slane %v4409, %v4533
        %vm4535 = vcmask 523712
        %v4536 = vsel %vm4535, %v4534, %v4529
        %v4537 = vadd.s32 %v4483, 4294967232
        %v4538 = vlaneseq
        %v4539 = vshrl.u32 %v4538, 7
        %v4540 = vsub.s32 %v4537, %v4539
        %v4541 = vrot.slane %v4412, %v4540
        %vm4542 = vcmask 589312
        %v4543 = vsel %vm4542, %v4541, %v4536
        %v4544 = vadd.s32 %v4483, 4294967224
        %v4545 = vlaneseq
        %v4546 = vshrl.u32 %v4545, 7
        %v4547 = vsub.s32 %v4544, %v4546
        %v4548 = vrot.slane %v4415, %v4547
        %vm4549 = vcmask 654912
        %v4550 = vsel %vm4549, %v4548, %v4543
        %v4551 = vadd.s32 %v4483, 4294967216
        %v4552 = vlaneseq
        %v4553 = vshrl.u32 %v4552, 7
        %v4554 = vsub.s32 %v4551, %v4553
        %v4555 = vrot.slane %v4418, %v4554
        %vm4556 = vcmask 720512
        %v4557 = vsel %vm4556, %v4555, %v4550
        %v4558 = vadd.s32 %v4483, 4294967208
        %v4559 = vlaneseq
        %v4560 = vshrl.u32 %v4559, 7
        %v4561 = vsub.s32 %v4558, %v4560
        %v4562 = vrot.slane %v4421, %v4561
        %vm4563 = vcmask 786112
        %v4564 = vsel %vm4563, %v4562, %v4557
        %v4565 = vadd.s32 %v4483, 4294967200
        %v4566 = vlaneseq
        %v4567 = vshrl.u32 %v4566, 7
        %v4568 = vsub.s32 %v4565, %v4567
        %v4569 = vrot.slane %v4424, %v4568
        %vm4570 = vcmask 851712
        %v4571 = vsel %vm4570, %v4569, %v4564
        %v4572 = vadd.s32 %v4483, 4294967192
        %v4573 = vlaneseq
        %v4574 = vshrl.u32 %v4573, 7
        %v4575 = vsub.s32 %v4572, %v4574
        %v4576 = vrot.slane %v4427, %v4575
        %vm4577 = vcmask 917312
        %v4578 = vsel %vm4577, %v4576, %v4571
        %v4579 = vadd.s32 %v4483, 4294967184
        %v4580 = vlaneseq
        %v4581 = vshrl.u32 %v4580, 7
        %v4582 = vsub.s32 %v4579, %v4581
        %v4583 = vrot.slane %v4430, %v4582
        %vm4584 = vcmask 982912
        %v4585 = vsel %vm4584, %v4583, %v4578
        %v4586 = vadd.s32 %v4483, 4294967176
        %v4587 = vlaneseq
        %v4588 = vshrl.u32 %v4587, 7
        %v4589 = vsub.s32 %v4586, %v4588
        %v4590 = vrot.slane %v4433, %v4589
        %vm4591 = vcmask 1048512
        %v4592 = vsel %vm4591, %v4590, %v4585
        %v4593 = vlaneseq
        %v4594 = vshrl.u32 %v4593, 7
        %v4595 = vsub.s32 %v4483, %v4594
        %v4596 = vrot.slane %v4436, %v4595
        %v4597 = vlaneseq
        %v4598 = vshrl.u32 %v4597, 7
        %v4599 = vsub.s32 %v4488, %v4598
        %v4600 = vrot.slane %v4439, %v4599
        %v4601 = vsel %vm4493, %v4600, %v4596
        %v4602 = vlaneseq
        %v4603 = vshrl.u32 %v4602, 7
        %v4604 = vsub.s32 %v4495, %v4603
        %v4605 = vrot.slane %v4442, %v4604
        %v4606 = vsel %vm4500, %v4605, %v4601
        %v4607 = vlaneseq
        %v4608 = vshrl.u32 %v4607, 7
        %v4609 = vsub.s32 %v4502, %v4608
        %v4610 = vrot.slane %v4445, %v4609
        %v4611 = vsel %vm4507, %v4610, %v4606
        %v4612 = vlaneseq
        %v4613 = vshrl.u32 %v4612, 7
        %v4614 = vsub.s32 %v4509, %v4613
        %v4615 = vrot.slane %v4448, %v4614
        %v4616 = vsel %vm4514, %v4615, %v4611
        %v4617 = vlaneseq
        %v4618 = vshrl.u32 %v4617, 7
        %v4619 = vsub.s32 %v4516, %v4618
        %v4620 = vrot.slane %v4451, %v4619
        %v4621 = vsel %vm4521, %v4620, %v4616
        %v4622 = vlaneseq
        %v4623 = vshrl.u32 %v4622, 7
        %v4624 = vsub.s32 %v4523, %v4623
        %v4625 = vrot.slane %v4454, %v4624
        %v4626 = vsel %vm4528, %v4625, %v4621
        %v4627 = vlaneseq
        %v4628 = vshrl.u32 %v4627, 7
        %v4629 = vsub.s32 %v4530, %v4628
        %v4630 = vrot.slane %v4457, %v4629
        %v4631 = vsel %vm4535, %v4630, %v4626
        %v4632 = vlaneseq
        %v4633 = vshrl.u32 %v4632, 7
        %v4634 = vsub.s32 %v4537, %v4633
        %v4635 = vrot.slane %v4460, %v4634
        %v4636 = vsel %vm4542, %v4635, %v4631
        %v4637 = vlaneseq
        %v4638 = vshrl.u32 %v4637, 7
        %v4639 = vsub.s32 %v4544, %v4638
        %v4640 = vrot.slane %v4463, %v4639
        %v4641 = vsel %vm4549, %v4640, %v4636
        %v4642 = vlaneseq
        %v4643 = vshrl.u32 %v4642, 7
        %v4644 = vsub.s32 %v4551, %v4643
        %v4645 = vrot.slane %v4466, %v4644
        %v4646 = vsel %vm4556, %v4645, %v4641
        %v4647 = vlaneseq
        %v4648 = vshrl.u32 %v4647, 7
        %v4649 = vsub.s32 %v4558, %v4648
        %v4650 = vrot.slane %v4469, %v4649
        %v4651 = vsel %vm4563, %v4650, %v4646
        %v4652 = vlaneseq
        %v4653 = vshrl.u32 %v4652, 7
        %v4654 = vsub.s32 %v4565, %v4653
        %v4655 = vrot.slane %v4472, %v4654
        %v4656 = vsel %vm4570, %v4655, %v4651
        %v4657 = vlaneseq
        %v4658 = vshrl.u32 %v4657, 7
        %v4659 = vsub.s32 %v4572, %v4658
        %v4660 = vrot.slane %v4475, %v4659
        %v4661 = vsel %vm4577, %v4660, %v4656
        %v4662 = vlaneseq
        %v4663 = vshrl.u32 %v4662, 7
        %v4664 = vsub.s32 %v4579, %v4663
        %v4665 = vrot.slane %v4478, %v4664
        %v4666 = vsel %vm4584, %v4665, %v4661
        %v4667 = vlaneseq
        %v4668 = vshrl.u32 %v4667, 7
        %v4669 = vsub.s32 %v4586, %v4668
        %v4670 = vrot.slane %v4481, %v4669
        %v4671 = vsel %vm4591, %v4670, %v4666
        %v4672 = vcombine.low %v4592, %v4671
        %v4674 = vunpack.c.l.s4 1966171168
        %v4675 = vunpack.c.0.s8 %v4674
        %v4676 = vlaneseq
        %v4677 = vshrl.u32 %v4676, 7
        %v4678 = vsub.s32 %v4675, %v4677
        %v4679 = vrot.slane %v4672, %v4678
        %v4681 = vunpack.c.l.s4 1966171168
        %v4682 = vunpack.c.0.s8 %v4681
        %v4683 = vlaneseq
        %v4684 = vshrl.u32 %v4683, 7
        %v4685 = vsub.s32 %v4682, %v4684
        %v4686 = vrot.slane %v4679, %v4685
        %v4688 = vsel %vm1761, 1.0, %v4686
        %v4689 = vlaneseq
        %vm4690 = vcmp.ge.s32.totalorder %v4689, 0
        %vm4691 = vcmp.lt.s32.totalorder %v4689, 256
        %vm4692 = vmand %vm4690, %vm4691
        %4693 = vst.msk [vmem:[%s433] sm:$0x3] %vm4692, %v4688
        %s4694 = sand.u32 %s296, 1
        %s4695 = scalar_lea.sflag [#allocation4], %s4694
        %s4696 = sand.u32 %s296, 1
        %s4697 = smul.addr %s4696, 2
        %s4698 = scalar_lea.vmem [#allocation3], %s4697
        // Predicated region
        $region65: #{tpu_custom_call.1} parent=63 // pred_check
          %p4699 = pneg %p306
        $region66: #{tpu_custom_call.1} parent=63 // pred_check_branch
          %4701 = sbr.rel (%p4699) target = $region68
        $region67: #{tpu_custom_call.1} parent=63 // pred_region
          %s4703 = ssub.s32 32, 32
          %4704 = vsyncadd %s4695, %s4703
          %s4705 = smul.addr %s31, 2
          %s4706 = smul.addr %s30, 2
          %s4707 = sadd.s32 %s4705, %s4706
          %s4708 = smul.addr %s4707, 16
          %s4709 = scalar_lea.hbm %s11, %s4708
          %s4711 = sshll.u32 %s4698, 4
          %s4712 = int_to_ptr.vmem [resolvable:$true] %s4711
          %4714 = dma.vmem_to_hbm [thread:$0]  %s4712, 32, %s4709, %s4695
        $region68: #{tpu_custom_call.1} parent=63 // pred_fallthru
          _
      $region64: #{tpu_custom_call.1} parent=5 // pred_fallthru
        _
      %p4715 = scmp.le.s32.totalorder 2, %s21
      // Predicated region
      $region69: #{tpu_custom_call.1} parent=5 // pred_check
        %p4716 = pneg %p4715
      $region70: #{tpu_custom_call.1} parent=5 // pred_check_branch
        %4718 = sbr.rel (%p4716) target = $region72
      $region71: #{tpu_custom_call.1} parent=5 // pred_region
        %s4719 = ssub.s32 %s21, 2
        // Predicated region
        $region73: #{tpu_custom_call.1} parent=71 // pred_check
          %p4720 = pneg %p312
        $region74: #{tpu_custom_call.1} parent=71 // pred_check_branch
          %4722 = sbr.rel (%p4720) target = $region76
        $region75: #{tpu_custom_call.1} parent=71 // pred_region
          %s4723 = sand.u32 %s297, 1
          %s4724 = scalar_lea.sflag [#allocation4], %s4723
          %s4725 = sand.u32 %s297, 1
          %s4726 = smul.addr %s4725, 2
          %s4727 = scalar_lea.vmem [#allocation3], %s4726
          %4728 = dma.done %s4724, 32
        $region76: #{tpu_custom_call.1} parent=71 // pred_fallthru
          _
      $region72: #{tpu_custom_call.1} parent=5 // pred_fallthru
        _
    $region6: #{tpu_custom_call.1} parent=1 // loop_footer
      %s25 = sadd.s32 1, %s21
    $region7: #{tpu_custom_call.1} parent=1 // loop_footer_branch
      %20 = sbr.rel target = $region3
    $region8: #{tpu_custom_call.1} parent=1 // loop_exit
      _
    %4729 = vsyncpa [#allocation4], 1
    %s4730 = scalar_lea.sflag [#allocation4], 1
    %4731 = vsyncpa %s4730, 1

</llo_original>
